<compile_context>
chip_gen: v7x
topology: tpu7x:2x2x1
jax: 0.10.0
libtpu: 0.0.40
codegen_flags: <defaults>
</compile_context>

<pallas_src>
import numpy as np
import jax
import jax.numpy as jnp
from jax import lax
from jax.experimental import pallas as pl
from jax.experimental.pallas import tpu as pltpu

EPS = 1e-5          # nn.InstanceNorm3d default (affine=False, biased variance)
NEG_SLOPE = 0.01    # nn.LeakyReLU default negative_slope


def _instance_norm(y):
    """Per-(sample, channel) normalization over the lane (flattened-spatial) axis.

    One-pass statistics: sum and sum-of-squares over the same operand."""
    inv_s = 1.0 / y.shape[-1]
    s1 = jnp.sum(y, axis=-1, keepdims=True)
    s2 = jnp.sum(y * y, axis=-1, keepdims=True)
    mean = s1 * inv_s
    var = s2 * inv_s - mean * mean
    return (y - mean) * lax.rsqrt(var + EPS)


def _leaky_relu(y):
    return jnp.maximum(y, NEG_SLOPE * y)


def _conv1x1_rows(w, rows):
    """Pointwise conv as Cin broadcast-FMAs on the VPU (Cb is tiny, MXU would be
    >96% padding).  w: (Cout, Cin) torch layout; rows: list of Cin (1, S) rows."""
    acc = w[:, 0:1] * rows[0]
    for ci in range(1, len(rows)):
        acc = acc + w[:, ci:ci + 1] * rows[ci]
    return acc


def _make_fused_kernel(C, D, H, W, pack, tap_dtype):
    Cb = C // 2
    HW = H * W
    S = D * HW
    # flattened-spatial offset of each (kd, kh, kw) tap of the 3x3x3 kernel
    offsets = [(kd - 1) * HW + (kh - 1) * W + (kw - 1)
               for kd in range(3) for kh in range(3) for kw in range(3)]

    def depthwise(y, wm_ref):
        # y: (pack*Cb, S) f32; wm_ref: (27, pack*Cb, S) in tap_dtype holding
        # dw[c,k] * zero-pad-validity[k,s] (pre-tiled across packed samples).
        # pltpu.roll wraps; the folded mask zeroes every out-of-range AND
        # wrapped tap, so this matches zero padding exactly.
        yy = y.astype(tap_dtype)
        acc = wm_ref[13] * yy                                  # center tap (offset 0)
        for k, off in enumerate(offsets):
            if off == 0:
                continue
            nb = pltpu.roll(yy, shift=(-off) % S, axis=1)      # nb[:, s] = yy[:, s+off]
            acc = acc + wm_ref[k] * nb                         # per-tap plain vld, no broadcasts
        return acc.astype(jnp.float32)

    def branch2(in_rows, w1, w2, wm_ref):
        # in_rows: list over packed samples p of list over ci of (1, S) rows.
        # 1x1x1 conv -> IN -> LeakyReLU -> depthwise 3x3x3 -> IN -> 1x1x1 conv -> IN -> LeakyReLU
        h = jnp.concatenate([_conv1x1_rows(w1, in_rows[p]) for p in range(pack)],
                            axis=0)                            # (pack*Cb, S)
        h = _leaky_relu(_instance_norm(h))
        h = _instance_norm(depthwise(h, wm_ref))
        o = jnp.concatenate(
            [_conv1x1_rows(w2, [h[p * Cb + ci:p * Cb + ci + 1, :] for ci in range(Cb)])
             for p in range(pack)], axis=0)                    # (pack*Cb, S)
        return _leaky_relu(_instance_norm(o))

    def kernel(x_ref, w1a_ref, w2a_ref, w1b_ref, w2b_ref, wma_ref, wmb_ref, out_ref):
        w1a = w1a_ref[...]; w2a = w2a_ref[...]
        w1b = w1b_ref[...]; w2b = w2b_ref[...]

        # ---- block 1: self.stride2_conv (stride=1 here), branch2 on upper half x2
        x2_rows = [[x_ref[p * C + Cb + ci: p * C + Cb + ci + 1, :] for ci in range(Cb)]
                   for p in range(pack)]
        y1 = branch2(x2_rows, w1a, w2a, wma_ref)               # (pack*Cb, S)

        # cat((x1, y1)) + channel_shuffle(groups=2)  =>  z[2i] = x1[i], z[2i+1] = y1[i].
        # z rows are picked straight from x_ref / y1 (no interleave materialization).
        def z_row(p, j):                                       # j in [0, 2*Cb)
            i = j // 2
            if j % 2 == 0:
                return x_ref[p * C + i: p * C + i + 1, :]      # x1[i]
            return y1[p * Cb + i: p * Cb + i + 1, :]           # y1[i]

        # ---- block 2: self.stride1_conv, branch2 on z2 = z[Cb:]
        z2_rows = [[z_row(p, Cb + j) for j in range(Cb)] for p in range(pack)]
        y2 = branch2(z2_rows, w1b, w2b, wmb_ref)               # (pack*Cb, S)

        # final cat((z1, y2)) + channel_shuffle(2): out[2j] = z[j], out[2j+1] = y2[j]
        # assembled in registers, ONE lane/sublane-dense full-block store.
        out_rows = []
        for p in range(pack):
            for j in range(Cb):
                out_rows.append(z_row(p, j))
                out_rows.append(y2[p * Cb + j: p * Cb + j + 1, :])
        out_ref[...] = jnp.concatenate(out_rows, axis=0)       # (pack*C, S)

    return kernel


def _make_valid_mask(D, H, W):
    """(27, S) float32 zero-padding validity mask for the 27 depthwise taps."""
    z, y, x = np.meshgrid(np.arange(D), np.arange(H), np.arange(W), indexing="ij")
    z, y, x = z.reshape(-1), y.reshape(-1), x.reshape(-1)
    rows = []
    for kd in range(3):
        for kh in range(3):
            for kw in range(3):
                dz, dy, dx = kd - 1, kh - 1, kw - 1
                m = ((z + dz >= 0) & (z + dz < D) &
                     (y + dy >= 0) & (y + dy < H) &
                     (x + dx >= 0) & (x + dx < W))
                rows.append(m.astype(np.float32))
    return jnp.asarray(np.stack(rows, axis=0))                 # (27, S)


def _make_tap_weights(dw, valid, pack, dtype):
    """(27, pack*Cb, S): depthwise tap weight * zero-pad validity, tiled over packed samples."""
    wm = jnp.tile(dw.T, (1, pack))[:, :, None] * valid[:, None, :]
    return wm.astype(dtype)


def _device_kind():
    try:
        return jax.devices()[0].device_kind.lower()
    except Exception:
        return ""


def shuffle_feature_block(x_ncdhw, p1, p2):
    """ShuffleFeatureBlock.forward: stride2_conv (stride=1 here) then stride1_conv,
    both fused (with their channel shuffles) into a single pallas_call."""
    N, C, D, H, W = x_ncdhw.shape
    S = D * H * W
    Cb = C // 2

    kind = _device_kind()
    # single-TensorCore chips: pack 2 samples per grid step to fill the 8 f32 sublanes
    single_tc = any(t in kind for t in ("v5e", "v5 lite", "v6e", "v6 lite"))
    # bf16 VALU exists on v6e / v7x; v5e (and unknown chips) keep f32 taps
    use_bf16_taps = ("v6" in kind) or ("v7" in kind)
    tap_dtype = jnp.bfloat16 if use_bf16_taps else jnp.float32

    pack = 2 if (N % 2 == 0 and Cb < 8 and (single_tc or N // 2 >= 2)) else 1

    valid = _make_valid_mask(D, H, W)                          # (27, S)
    wma = _make_tap_weights(p1["dw"], valid, pack, tap_dtype)  # block 1 taps
    wmb = _make_tap_weights(p2["dw"], valid, pack, tap_dtype)  # block 2 taps

    x2d = x_ncdhw.reshape(N * C, S)                            # NCDHW is channels-first already
    kernel = _make_fused_kernel(C, D, H, W, pack, tap_dtype)

    out = pl.pallas_call(
        kernel,
        out_shape=jax.ShapeDtypeStruct((N * C, S), jnp.float32),
        grid_spec=pltpu.PrefetchScalarGridSpec(
            num_scalar_prefetch=0,
            grid=(N // pack,),
            in_specs=[
                pl.BlockSpec((pack * C, S), lambda n: (n, 0)),          # x (pack samples)
                pl.BlockSpec((Cb, Cb), lambda n: (0, 0)),               # block1 1x1 #1 (out,in)
                pl.BlockSpec((Cb, Cb), lambda n: (0, 0)),               # block1 1x1 #2
                pl.BlockSpec((Cb, Cb), lambda n: (0, 0)),               # block2 1x1 #1
                pl.BlockSpec((Cb, Cb), lambda n: (0, 0)),               # block2 1x1 #2
                pl.BlockSpec((27, pack * Cb, S), lambda n: (0, 0, 0)),  # block1 tap*mask
                pl.BlockSpec((27, pack * Cb, S), lambda n: (0, 0, 0)),  # block2 tap*mask
            ],
            out_specs=pl.BlockSpec((pack * C, S), lambda n: (n, 0)),
        ),
        compiler_params=pltpu.CompilerParams(
            dimension_semantics=("parallel",)),                # batch across TCs when grid > 1
    )(x2d, p1["w1"], p1["w2"], p2["w1"], p2["w2"], wma, wmb)

    return out.reshape(N, C, D, H, W)


def init_params(key, out_channel):
    """Deterministic weights for one stride=1 ShuffleInvertedResidual branch2."""
    Cb = out_channel // 2
    k0, k1, k2 = jax.random.split(key, 3)
    # PyTorch shapes: (out, in, 1, 1, 1), (out, 1, 3, 3, 3), (out, in, 1, 1, 1); bias=False
    w1 = 0.1 * jax.random.normal(k0, (Cb, Cb, 1, 1, 1), jnp.float32)
    dw = 0.1 * jax.random.normal(k1, (Cb, 1, 3, 3, 3), jnp.float32)
    w2 = 0.1 * jax.random.normal(k2, (Cb, Cb, 1, 1, 1), jnp.float32)
    return {
        "w1": w1.reshape(Cb, Cb),     # (out, in) — used directly in channels-first conv
        "dw": dw.reshape(Cb, 27),     # dw[c, k] for tap k = kd*9 + kh*3 + kw
        "w2": w2.reshape(Cb, Cb),
    }


if __name__ == "__main__":
    # ShuffleFeatureBlock(in_channel=8, middle_channel=16, out_channel=8, stride=1)
    # (middle_channel is unused by the PyTorch module; stride=1 requires in == out)
    N, C, D, H, W = 2, 8, 8, 8, 8
    out_channel = C

    key = jax.random.PRNGKey(0)
    kx, kb1, kb2 = jax.random.split(key, 3)
    x = jax.random.normal(kx, (N, C, D, H, W), jnp.float32)   # NCDHW like PyTorch

    p1 = init_params(kb1, out_channel)   # self.stride2_conv (stride=1 here)
    p2 = init_params(kb2, out_channel)   # self.stride1_conv

    out = shuffle_feature_block(x, p1, p2)
    out = jax.block_until_ready(out)

    assert out.shape == (N, out_channel, D, H, W), out.shape
    assert bool(jnp.all(jnp.isfinite(out)))
    print("KERNEL_OK")
</pallas_src>

<mosaic_0001>
module attributes {stable_mosaic.version = 11 : i64} {
  func.func @kernel(%arg0: i32, %arg1: memref<8x512xf32, #tpu.memory_space<vmem>>, %arg2: memref<4x4xf32, #tpu.memory_space<vmem>>, %arg3: memref<4x4xf32, #tpu.memory_space<vmem>>, %arg4: memref<4x4xf32, #tpu.memory_space<vmem>>, %arg5: memref<4x4xf32, #tpu.memory_space<vmem>>, %arg6: memref<27x4x512xf32, #tpu.memory_space<vmem>>, %arg7: memref<27x4x512xf32, #tpu.memory_space<vmem>>, %arg8: memref<8x512xf32, #tpu.memory_space<vmem>>) attributes {dimension_semantics = [#tpu.dimension_semantics<parallel>], iteration_bounds = array<i64: 2>, scalar_prefetch = 0 : i64, scratch_operands = 0 : i64, tpu.core_type = #tpu.core_type<tc>, window_params = [{transform_indices = @transform_0, window_bounds = array<i64: 8, 512>}, {pipeline_mode = #tpu.pipeline_mode<synchronous>, transform_indices = @transform_1, window_bounds = array<i64: 4, 4>}, {pipeline_mode = #tpu.pipeline_mode<synchronous>, transform_indices = @transform_2, window_bounds = array<i64: 4, 4>}, {pipeline_mode = #tpu.pipeline_mode<synchronous>, transform_indices = @transform_3, window_bounds = array<i64: 4, 4>}, {pipeline_mode = #tpu.pipeline_mode<synchronous>, transform_indices = @transform_4, window_bounds = array<i64: 4, 4>}, {pipeline_mode = #tpu.pipeline_mode<synchronous>, transform_indices = @transform_5, window_bounds = array<i64: 27, 4, 512>}, {pipeline_mode = #tpu.pipeline_mode<synchronous>, transform_indices = @transform_6, window_bounds = array<i64: 27, 4, 512>}, {transform_indices = @transform_7, window_bounds = array<i64: 8, 512>}]} {
    %c0 = arith.constant 0 : index
    %c0_0 = arith.constant 0 : index
    %0 = vector.load %arg2[%c0, %c0_0] : memref<4x4xf32, #tpu.memory_space<vmem>>, vector<4x4xf32>
    %c0_1 = arith.constant 0 : index
    %c0_2 = arith.constant 0 : index
    %1 = vector.load %arg3[%c0_1, %c0_2] : memref<4x4xf32, #tpu.memory_space<vmem>>, vector<4x4xf32>
    %c0_3 = arith.constant 0 : index
    %c0_4 = arith.constant 0 : index
    %2 = vector.load %arg4[%c0_3, %c0_4] : memref<4x4xf32, #tpu.memory_space<vmem>>, vector<4x4xf32>
    %c0_5 = arith.constant 0 : index
    %c0_6 = arith.constant 0 : index
    %3 = vector.load %arg5[%c0_5, %c0_6] : memref<4x4xf32, #tpu.memory_space<vmem>>, vector<4x4xf32>
    %c4 = arith.constant 4 : index
    %c0_7 = arith.constant 0 : index
    %4 = vector.load %arg1[%c4, %c0_7] : memref<8x512xf32, #tpu.memory_space<vmem>>, vector<1x512xf32>
    %c5 = arith.constant 5 : index
    %c0_8 = arith.constant 0 : index
    %5 = vector.load %arg1[%c5, %c0_8] : memref<8x512xf32, #tpu.memory_space<vmem>>, vector<1x512xf32>
    %c6 = arith.constant 6 : index
    %c0_9 = arith.constant 0 : index
    %6 = vector.load %arg1[%c6, %c0_9] : memref<8x512xf32, #tpu.memory_space<vmem>>, vector<1x512xf32>
    %c7 = arith.constant 7 : index
    %c0_10 = arith.constant 0 : index
    %7 = vector.load %arg1[%c7, %c0_10] : memref<8x512xf32, #tpu.memory_space<vmem>>, vector<1x512xf32>
    %8 = vector.extract_strided_slice %0 {offsets = [0, 0], sizes = [4, 1], strides = [1, 1]} : vector<4x4xf32> to vector<4x1xf32>
    %9 = vector.broadcast %8 : vector<4x1xf32> to vector<4x512xf32>
    %10 = vector.broadcast %4 : vector<1x512xf32> to vector<4x512xf32>
    %11 = arith.mulf %9, %10 : vector<4x512xf32>
    %12 = vector.extract_strided_slice %0 {offsets = [0, 1], sizes = [4, 1], strides = [1, 1]} : vector<4x4xf32> to vector<4x1xf32>
    %13 = vector.broadcast %12 : vector<4x1xf32> to vector<4x512xf32>
    %14 = vector.broadcast %5 : vector<1x512xf32> to vector<4x512xf32>
    %15 = arith.mulf %13, %14 : vector<4x512xf32>
    %16 = arith.addf %11, %15 : vector<4x512xf32>
    %17 = vector.extract_strided_slice %0 {offsets = [0, 2], sizes = [4, 1], strides = [1, 1]} : vector<4x4xf32> to vector<4x1xf32>
    %18 = vector.broadcast %17 : vector<4x1xf32> to vector<4x512xf32>
    %19 = vector.broadcast %6 : vector<1x512xf32> to vector<4x512xf32>
    %20 = arith.mulf %18, %19 : vector<4x512xf32>
    %21 = arith.addf %16, %20 : vector<4x512xf32>
    %22 = vector.extract_strided_slice %0 {offsets = [0, 3], sizes = [4, 1], strides = [1, 1]} : vector<4x4xf32> to vector<4x1xf32>
    %23 = vector.broadcast %22 : vector<4x1xf32> to vector<4x512xf32>
    %24 = vector.broadcast %7 : vector<1x512xf32> to vector<4x512xf32>
    %25 = arith.mulf %23, %24 : vector<4x512xf32>
    %26 = arith.addf %21, %25 : vector<4x512xf32>
    %cst = arith.constant dense<0.000000e+00> : vector<4xf32>
    %27 = vector.multi_reduction <add>, %26, %cst [1] : vector<4x512xf32> to vector<4xf32>
    %28 = vector.shape_cast %27 : vector<4xf32> to vector<4x1xf32>
    %29 = arith.mulf %26, %26 : vector<4x512xf32>
    %cst_11 = arith.constant dense<0.000000e+00> : vector<4xf32>
    %30 = vector.multi_reduction <add>, %29, %cst_11 [1] : vector<4x512xf32> to vector<4xf32>
    %31 = vector.shape_cast %30 : vector<4xf32> to vector<4x1xf32>
    %cst_12 = arith.constant 0.001953125 : f32
    %32 = vector.broadcast %cst_12 : f32 to vector<4x1xf32>
    %33 = arith.mulf %28, %32 : vector<4x1xf32>
    %cst_13 = arith.constant 0.001953125 : f32
    %34 = vector.broadcast %cst_13 : f32 to vector<4x1xf32>
    %35 = arith.mulf %31, %34 : vector<4x1xf32>
    %36 = arith.mulf %33, %33 : vector<4x1xf32>
    %37 = arith.subf %35, %36 : vector<4x1xf32>
    %38 = vector.broadcast %33 : vector<4x1xf32> to vector<4x512xf32>
    %39 = arith.subf %26, %38 : vector<4x512xf32>
    %cst_14 = arith.constant 9.99999974E-6 : f32
    %40 = vector.broadcast %cst_14 : f32 to vector<4x1xf32>
    %41 = arith.addf %37, %40 : vector<4x1xf32>
    %42 = math.rsqrt %41 : vector<4x1xf32>
    %43 = vector.broadcast %42 : vector<4x1xf32> to vector<4x512xf32>
    %44 = arith.mulf %39, %43 : vector<4x512xf32>
    %cst_15 = arith.constant 0.00999999977 : f32
    %45 = vector.broadcast %cst_15 : f32 to vector<4x512xf32>
    %46 = arith.mulf %45, %44 : vector<4x512xf32>
    %47 = arith.maximumf %44, %46 : vector<4x512xf32>
    %c13 = arith.constant 13 : index
    %c0_16 = arith.constant 0 : index
    %c0_17 = arith.constant 0 : index
    %48 = vector.load %arg6[%c13, %c0_16, %c0_17] : memref<27x4x512xf32, #tpu.memory_space<vmem>>, vector<1x4x512xf32>
    %49 = vector.shape_cast %48 : vector<1x4x512xf32> to vector<4x512xf32>
    %50 = arith.mulf %49, %47 : vector<4x512xf32>
    %c73_i32 = arith.constant 73 : i32
    %51 = tpu.dynamic_rotate %47 by %c73_i32 dim 1 : vector<4x512xf32>, i32 -> vector<4x512xf32>
    %c0_18 = arith.constant 0 : index
    %c0_19 = arith.constant 0 : index
    %c0_20 = arith.constant 0 : index
    %52 = vector.load %arg6[%c0_18, %c0_19, %c0_20] : memref<27x4x512xf32, #tpu.memory_space<vmem>>, vector<1x4x512xf32>
    %53 = vector.shape_cast %52 : vector<1x4x512xf32> to vector<4x512xf32>
    %54 = arith.mulf %53, %51 : vector<4x512xf32>
    %55 = arith.addf %50, %54 : vector<4x512xf32>
    %c72_i32 = arith.constant 72 : i32
    %56 = tpu.dynamic_rotate %47 by %c72_i32 dim 1 : vector<4x512xf32>, i32 -> vector<4x512xf32>
    %c1 = arith.constant 1 : index
    %c0_21 = arith.constant 0 : index
    %c0_22 = arith.constant 0 : index
    %57 = vector.load %arg6[%c1, %c0_21, %c0_22] : memref<27x4x512xf32, #tpu.memory_space<vmem>>, vector<1x4x512xf32>
    %58 = vector.shape_cast %57 : vector<1x4x512xf32> to vector<4x512xf32>
    %59 = arith.mulf %58, %56 : vector<4x512xf32>
    %60 = arith.addf %55, %59 : vector<4x512xf32>
    %c71_i32 = arith.constant 71 : i32
    %61 = tpu.dynamic_rotate %47 by %c71_i32 dim 1 : vector<4x512xf32>, i32 -> vector<4x512xf32>
    %c2 = arith.constant 2 : index
    %c0_23 = arith.constant 0 : index
    %c0_24 = arith.constant 0 : index
    %62 = vector.load %arg6[%c2, %c0_23, %c0_24] : memref<27x4x512xf32, #tpu.memory_space<vmem>>, vector<1x4x512xf32>
    %63 = vector.shape_cast %62 : vector<1x4x512xf32> to vector<4x512xf32>
    %64 = arith.mulf %63, %61 : vector<4x512xf32>
    %65 = arith.addf %60, %64 : vector<4x512xf32>
    %c65_i32 = arith.constant 65 : i32
    %66 = tpu.dynamic_rotate %47 by %c65_i32 dim 1 : vector<4x512xf32>, i32 -> vector<4x512xf32>
    %c3 = arith.constant 3 : index
    %c0_25 = arith.constant 0 : index
    %c0_26 = arith.constant 0 : index
    %67 = vector.load %arg6[%c3, %c0_25, %c0_26] : memref<27x4x512xf32, #tpu.memory_space<vmem>>, vector<1x4x512xf32>
    %68 = vector.shape_cast %67 : vector<1x4x512xf32> to vector<4x512xf32>
    %69 = arith.mulf %68, %66 : vector<4x512xf32>
    %70 = arith.addf %65, %69 : vector<4x512xf32>
    %c64_i32 = arith.constant 64 : i32
    %71 = tpu.dynamic_rotate %47 by %c64_i32 dim 1 : vector<4x512xf32>, i32 -> vector<4x512xf32>
    %c4_27 = arith.constant 4 : index
    %c0_28 = arith.constant 0 : index
    %c0_29 = arith.constant 0 : index
    %72 = vector.load %arg6[%c4_27, %c0_28, %c0_29] : memref<27x4x512xf32, #tpu.memory_space<vmem>>, vector<1x4x512xf32>
    %73 = vector.shape_cast %72 : vector<1x4x512xf32> to vector<4x512xf32>
    %74 = arith.mulf %73, %71 : vector<4x512xf32>
    %75 = arith.addf %70, %74 : vector<4x512xf32>
    %c63_i32 = arith.constant 63 : i32
    %76 = tpu.dynamic_rotate %47 by %c63_i32 dim 1 : vector<4x512xf32>, i32 -> vector<4x512xf32>
    %c5_30 = arith.constant 5 : index
    %c0_31 = arith.constant 0 : index
    %c0_32 = arith.constant 0 : index
    %77 = vector.load %arg6[%c5_30, %c0_31, %c0_32] : memref<27x4x512xf32, #tpu.memory_space<vmem>>, vector<1x4x512xf32>
    %78 = vector.shape_cast %77 : vector<1x4x512xf32> to vector<4x512xf32>
    %79 = arith.mulf %78, %76 : vector<4x512xf32>
    %80 = arith.addf %75, %79 : vector<4x512xf32>
    %c57_i32 = arith.constant 57 : i32
    %81 = tpu.dynamic_rotate %47 by %c57_i32 dim 1 : vector<4x512xf32>, i32 -> vector<4x512xf32>
    %c6_33 = arith.constant 6 : index
    %c0_34 = arith.constant 0 : index
    %c0_35 = arith.constant 0 : index
    %82 = vector.load %arg6[%c6_33, %c0_34, %c0_35] : memref<27x4x512xf32, #tpu.memory_space<vmem>>, vector<1x4x512xf32>
    %83 = vector.shape_cast %82 : vector<1x4x512xf32> to vector<4x512xf32>
    %84 = arith.mulf %83, %81 : vector<4x512xf32>
    %85 = arith.addf %80, %84 : vector<4x512xf32>
    %c56_i32 = arith.constant 56 : i32
    %86 = tpu.dynamic_rotate %47 by %c56_i32 dim 1 : vector<4x512xf32>, i32 -> vector<4x512xf32>
    %c7_36 = arith.constant 7 : index
    %c0_37 = arith.constant 0 : index
    %c0_38 = arith.constant 0 : index
    %87 = vector.load %arg6[%c7_36, %c0_37, %c0_38] : memref<27x4x512xf32, #tpu.memory_space<vmem>>, vector<1x4x512xf32>
    %88 = vector.shape_cast %87 : vector<1x4x512xf32> to vector<4x512xf32>
    %89 = arith.mulf %88, %86 : vector<4x512xf32>
    %90 = arith.addf %85, %89 : vector<4x512xf32>
    %c55_i32 = arith.constant 55 : i32
    %91 = tpu.dynamic_rotate %47 by %c55_i32 dim 1 : vector<4x512xf32>, i32 -> vector<4x512xf32>
    %c8 = arith.constant 8 : index
    %c0_39 = arith.constant 0 : index
    %c0_40 = arith.constant 0 : index
    %92 = vector.load %arg6[%c8, %c0_39, %c0_40] : memref<27x4x512xf32, #tpu.memory_space<vmem>>, vector<1x4x512xf32>
    %93 = vector.shape_cast %92 : vector<1x4x512xf32> to vector<4x512xf32>
    %94 = arith.mulf %93, %91 : vector<4x512xf32>
    %95 = arith.addf %90, %94 : vector<4x512xf32>
    %c9_i32 = arith.constant 9 : i32
    %96 = tpu.dynamic_rotate %47 by %c9_i32 dim 1 : vector<4x512xf32>, i32 -> vector<4x512xf32>
    %c9 = arith.constant 9 : index
    %c0_41 = arith.constant 0 : index
    %c0_42 = arith.constant 0 : index
    %97 = vector.load %arg6[%c9, %c0_41, %c0_42] : memref<27x4x512xf32, #tpu.memory_space<vmem>>, vector<1x4x512xf32>
    %98 = vector.shape_cast %97 : vector<1x4x512xf32> to vector<4x512xf32>
    %99 = arith.mulf %98, %96 : vector<4x512xf32>
    %100 = arith.addf %95, %99 : vector<4x512xf32>
    %c8_i32 = arith.constant 8 : i32
    %101 = tpu.dynamic_rotate %47 by %c8_i32 dim 1 : vector<4x512xf32>, i32 -> vector<4x512xf32>
    %c10 = arith.constant 10 : index
    %c0_43 = arith.constant 0 : index
    %c0_44 = arith.constant 0 : index
    %102 = vector.load %arg6[%c10, %c0_43, %c0_44] : memref<27x4x512xf32, #tpu.memory_space<vmem>>, vector<1x4x512xf32>
    %103 = vector.shape_cast %102 : vector<1x4x512xf32> to vector<4x512xf32>
    %104 = arith.mulf %103, %101 : vector<4x512xf32>
    %105 = arith.addf %100, %104 : vector<4x512xf32>
    %c7_i32 = arith.constant 7 : i32
    %106 = tpu.dynamic_rotate %47 by %c7_i32 dim 1 : vector<4x512xf32>, i32 -> vector<4x512xf32>
    %c11 = arith.constant 11 : index
    %c0_45 = arith.constant 0 : index
    %c0_46 = arith.constant 0 : index
    %107 = vector.load %arg6[%c11, %c0_45, %c0_46] : memref<27x4x512xf32, #tpu.memory_space<vmem>>, vector<1x4x512xf32>
    %108 = vector.shape_cast %107 : vector<1x4x512xf32> to vector<4x512xf32>
    %109 = arith.mulf %108, %106 : vector<4x512xf32>
    %110 = arith.addf %105, %109 : vector<4x512xf32>
    %c1_i32 = arith.constant 1 : i32
    %111 = tpu.dynamic_rotate %47 by %c1_i32 dim 1 : vector<4x512xf32>, i32 -> vector<4x512xf32>
    %c12 = arith.constant 12 : index
    %c0_47 = arith.constant 0 : index
    %c0_48 = arith.constant 0 : index
    %112 = vector.load %arg6[%c12, %c0_47, %c0_48] : memref<27x4x512xf32, #tpu.memory_space<vmem>>, vector<1x4x512xf32>
    %113 = vector.shape_cast %112 : vector<1x4x512xf32> to vector<4x512xf32>
    %114 = arith.mulf %113, %111 : vector<4x512xf32>
    %115 = arith.addf %110, %114 : vector<4x512xf32>
    %c511_i32 = arith.constant 511 : i32
    %116 = tpu.dynamic_rotate %47 by %c511_i32 dim 1 : vector<4x512xf32>, i32 -> vector<4x512xf32>
    %c14 = arith.constant 14 : index
    %c0_49 = arith.constant 0 : index
    %c0_50 = arith.constant 0 : index
    %117 = vector.load %arg6[%c14, %c0_49, %c0_50] : memref<27x4x512xf32, #tpu.memory_space<vmem>>, vector<1x4x512xf32>
    %118 = vector.shape_cast %117 : vector<1x4x512xf32> to vector<4x512xf32>
    %119 = arith.mulf %118, %116 : vector<4x512xf32>
    %120 = arith.addf %115, %119 : vector<4x512xf32>
    %c505_i32 = arith.constant 505 : i32
    %121 = tpu.dynamic_rotate %47 by %c505_i32 dim 1 : vector<4x512xf32>, i32 -> vector<4x512xf32>
    %c15 = arith.constant 15 : index
    %c0_51 = arith.constant 0 : index
    %c0_52 = arith.constant 0 : index
    %122 = vector.load %arg6[%c15, %c0_51, %c0_52] : memref<27x4x512xf32, #tpu.memory_space<vmem>>, vector<1x4x512xf32>
    %123 = vector.shape_cast %122 : vector<1x4x512xf32> to vector<4x512xf32>
    %124 = arith.mulf %123, %121 : vector<4x512xf32>
    %125 = arith.addf %120, %124 : vector<4x512xf32>
    %c504_i32 = arith.constant 504 : i32
    %126 = tpu.dynamic_rotate %47 by %c504_i32 dim 1 : vector<4x512xf32>, i32 -> vector<4x512xf32>
    %c16 = arith.constant 16 : index
    %c0_53 = arith.constant 0 : index
    %c0_54 = arith.constant 0 : index
    %127 = vector.load %arg6[%c16, %c0_53, %c0_54] : memref<27x4x512xf32, #tpu.memory_space<vmem>>, vector<1x4x512xf32>
    %128 = vector.shape_cast %127 : vector<1x4x512xf32> to vector<4x512xf32>
    %129 = arith.mulf %128, %126 : vector<4x512xf32>
    %130 = arith.addf %125, %129 : vector<4x512xf32>
    %c503_i32 = arith.constant 503 : i32
    %131 = tpu.dynamic_rotate %47 by %c503_i32 dim 1 : vector<4x512xf32>, i32 -> vector<4x512xf32>
    %c17 = arith.constant 17 : index
    %c0_55 = arith.constant 0 : index
    %c0_56 = arith.constant 0 : index
    %132 = vector.load %arg6[%c17, %c0_55, %c0_56] : memref<27x4x512xf32, #tpu.memory_space<vmem>>, vector<1x4x512xf32>
    %133 = vector.shape_cast %132 : vector<1x4x512xf32> to vector<4x512xf32>
    %134 = arith.mulf %133, %131 : vector<4x512xf32>
    %135 = arith.addf %130, %134 : vector<4x512xf32>
    %c457_i32 = arith.constant 457 : i32
    %136 = tpu.dynamic_rotate %47 by %c457_i32 dim 1 : vector<4x512xf32>, i32 -> vector<4x512xf32>
    %c18 = arith.constant 18 : index
    %c0_57 = arith.constant 0 : index
    %c0_58 = arith.constant 0 : index
    %137 = vector.load %arg6[%c18, %c0_57, %c0_58] : memref<27x4x512xf32, #tpu.memory_space<vmem>>, vector<1x4x512xf32>
    %138 = vector.shape_cast %137 : vector<1x4x512xf32> to vector<4x512xf32>
    %139 = arith.mulf %138, %136 : vector<4x512xf32>
    %140 = arith.addf %135, %139 : vector<4x512xf32>
    %c456_i32 = arith.constant 456 : i32
    %141 = tpu.dynamic_rotate %47 by %c456_i32 dim 1 : vector<4x512xf32>, i32 -> vector<4x512xf32>
    %c19 = arith.constant 19 : index
    %c0_59 = arith.constant 0 : index
    %c0_60 = arith.constant 0 : index
    %142 = vector.load %arg6[%c19, %c0_59, %c0_60] : memref<27x4x512xf32, #tpu.memory_space<vmem>>, vector<1x4x512xf32>
    %143 = vector.shape_cast %142 : vector<1x4x512xf32> to vector<4x512xf32>
    %144 = arith.mulf %143, %141 : vector<4x512xf32>
    %145 = arith.addf %140, %144 : vector<4x512xf32>
    %c455_i32 = arith.constant 455 : i32
    %146 = tpu.dynamic_rotate %47 by %c455_i32 dim 1 : vector<4x512xf32>, i32 -> vector<4x512xf32>
    %c20 = arith.constant 20 : index
    %c0_61 = arith.constant 0 : index
    %c0_62 = arith.constant 0 : index
    %147 = vector.load %arg6[%c20, %c0_61, %c0_62] : memref<27x4x512xf32, #tpu.memory_space<vmem>>, vector<1x4x512xf32>
    %148 = vector.shape_cast %147 : vector<1x4x512xf32> to vector<4x512xf32>
    %149 = arith.mulf %148, %146 : vector<4x512xf32>
    %150 = arith.addf %145, %149 : vector<4x512xf32>
    %c449_i32 = arith.constant 449 : i32
    %151 = tpu.dynamic_rotate %47 by %c449_i32 dim 1 : vector<4x512xf32>, i32 -> vector<4x512xf32>
    %c21 = arith.constant 21 : index
    %c0_63 = arith.constant 0 : index
    %c0_64 = arith.constant 0 : index
    %152 = vector.load %arg6[%c21, %c0_63, %c0_64] : memref<27x4x512xf32, #tpu.memory_space<vmem>>, vector<1x4x512xf32>
    %153 = vector.shape_cast %152 : vector<1x4x512xf32> to vector<4x512xf32>
    %154 = arith.mulf %153, %151 : vector<4x512xf32>
    %155 = arith.addf %150, %154 : vector<4x512xf32>
    %c448_i32 = arith.constant 448 : i32
    %156 = tpu.dynamic_rotate %47 by %c448_i32 dim 1 : vector<4x512xf32>, i32 -> vector<4x512xf32>
    %c22 = arith.constant 22 : index
    %c0_65 = arith.constant 0 : index
    %c0_66 = arith.constant 0 : index
    %157 = vector.load %arg6[%c22, %c0_65, %c0_66] : memref<27x4x512xf32, #tpu.memory_space<vmem>>, vector<1x4x512xf32>
    %158 = vector.shape_cast %157 : vector<1x4x512xf32> to vector<4x512xf32>
    %159 = arith.mulf %158, %156 : vector<4x512xf32>
    %160 = arith.addf %155, %159 : vector<4x512xf32>
    %c447_i32 = arith.constant 447 : i32
    %161 = tpu.dynamic_rotate %47 by %c447_i32 dim 1 : vector<4x512xf32>, i32 -> vector<4x512xf32>
    %c23 = arith.constant 23 : index
    %c0_67 = arith.constant 0 : index
    %c0_68 = arith.constant 0 : index
    %162 = vector.load %arg6[%c23, %c0_67, %c0_68] : memref<27x4x512xf32, #tpu.memory_space<vmem>>, vector<1x4x512xf32>
    %163 = vector.shape_cast %162 : vector<1x4x512xf32> to vector<4x512xf32>
    %164 = arith.mulf %163, %161 : vector<4x512xf32>
    %165 = arith.addf %160, %164 : vector<4x512xf32>
    %c441_i32 = arith.constant 441 : i32
    %166 = tpu.dynamic_rotate %47 by %c441_i32 dim 1 : vector<4x512xf32>, i32 -> vector<4x512xf32>
    %c24 = arith.constant 24 : index
    %c0_69 = arith.constant 0 : index
    %c0_70 = arith.constant 0 : index
    %167 = vector.load %arg6[%c24, %c0_69, %c0_70] : memref<27x4x512xf32, #tpu.memory_space<vmem>>, vector<1x4x512xf32>
    %168 = vector.shape_cast %167 : vector<1x4x512xf32> to vector<4x512xf32>
    %169 = arith.mulf %168, %166 : vector<4x512xf32>
    %170 = arith.addf %165, %169 : vector<4x512xf32>
    %c440_i32 = arith.constant 440 : i32
    %171 = tpu.dynamic_rotate %47 by %c440_i32 dim 1 : vector<4x512xf32>, i32 -> vector<4x512xf32>
    %c25 = arith.constant 25 : index
    %c0_71 = arith.constant 0 : index
    %c0_72 = arith.constant 0 : index
    %172 = vector.load %arg6[%c25, %c0_71, %c0_72] : memref<27x4x512xf32, #tpu.memory_space<vmem>>, vector<1x4x512xf32>
    %173 = vector.shape_cast %172 : vector<1x4x512xf32> to vector<4x512xf32>
    %174 = arith.mulf %173, %171 : vector<4x512xf32>
    %175 = arith.addf %170, %174 : vector<4x512xf32>
    %c439_i32 = arith.constant 439 : i32
    %176 = tpu.dynamic_rotate %47 by %c439_i32 dim 1 : vector<4x512xf32>, i32 -> vector<4x512xf32>
    %c26 = arith.constant 26 : index
    %c0_73 = arith.constant 0 : index
    %c0_74 = arith.constant 0 : index
    %177 = vector.load %arg6[%c26, %c0_73, %c0_74] : memref<27x4x512xf32, #tpu.memory_space<vmem>>, vector<1x4x512xf32>
    %178 = vector.shape_cast %177 : vector<1x4x512xf32> to vector<4x512xf32>
    %179 = arith.mulf %178, %176 : vector<4x512xf32>
    %180 = arith.addf %175, %179 : vector<4x512xf32>
    %cst_75 = arith.constant dense<0.000000e+00> : vector<4xf32>
    %181 = vector.multi_reduction <add>, %180, %cst_75 [1] : vector<4x512xf32> to vector<4xf32>
    %182 = vector.shape_cast %181 : vector<4xf32> to vector<4x1xf32>
    %183 = arith.mulf %180, %180 : vector<4x512xf32>
    %cst_76 = arith.constant dense<0.000000e+00> : vector<4xf32>
    %184 = vector.multi_reduction <add>, %183, %cst_76 [1] : vector<4x512xf32> to vector<4xf32>
    %185 = vector.shape_cast %184 : vector<4xf32> to vector<4x1xf32>
    %cst_77 = arith.constant 0.001953125 : f32
    %186 = vector.broadcast %cst_77 : f32 to vector<4x1xf32>
    %187 = arith.mulf %182, %186 : vector<4x1xf32>
    %cst_78 = arith.constant 0.001953125 : f32
    %188 = vector.broadcast %cst_78 : f32 to vector<4x1xf32>
    %189 = arith.mulf %185, %188 : vector<4x1xf32>
    %190 = arith.mulf %187, %187 : vector<4x1xf32>
    %191 = arith.subf %189, %190 : vector<4x1xf32>
    %192 = vector.broadcast %187 : vector<4x1xf32> to vector<4x512xf32>
    %193 = arith.subf %180, %192 : vector<4x512xf32>
    %cst_79 = arith.constant 9.99999974E-6 : f32
    %194 = vector.broadcast %cst_79 : f32 to vector<4x1xf32>
    %195 = arith.addf %191, %194 : vector<4x1xf32>
    %196 = math.rsqrt %195 : vector<4x1xf32>
    %197 = vector.broadcast %196 : vector<4x1xf32> to vector<4x512xf32>
    %198 = arith.mulf %193, %197 : vector<4x512xf32>
    %199 = vector.extract_strided_slice %198 {offsets = [0, 0], sizes = [1, 512], strides = [1, 1]} : vector<4x512xf32> to vector<1x512xf32>
    %200 = vector.extract_strided_slice %198 {offsets = [1, 0], sizes = [1, 512], strides = [1, 1]} : vector<4x512xf32> to vector<1x512xf32>
    %201 = vector.extract_strided_slice %198 {offsets = [2, 0], sizes = [1, 512], strides = [1, 1]} : vector<4x512xf32> to vector<1x512xf32>
    %202 = vector.extract_strided_slice %198 {offsets = [3, 0], sizes = [1, 512], strides = [1, 1]} : vector<4x512xf32> to vector<1x512xf32>
    %203 = vector.extract_strided_slice %1 {offsets = [0, 0], sizes = [4, 1], strides = [1, 1]} : vector<4x4xf32> to vector<4x1xf32>
    %204 = vector.broadcast %203 : vector<4x1xf32> to vector<4x512xf32>
    %205 = vector.broadcast %199 : vector<1x512xf32> to vector<4x512xf32>
    %206 = arith.mulf %204, %205 : vector<4x512xf32>
    %207 = vector.extract_strided_slice %1 {offsets = [0, 1], sizes = [4, 1], strides = [1, 1]} : vector<4x4xf32> to vector<4x1xf32>
    %208 = vector.broadcast %207 : vector<4x1xf32> to vector<4x512xf32>
    %209 = vector.broadcast %200 : vector<1x512xf32> to vector<4x512xf32>
    %210 = arith.mulf %208, %209 : vector<4x512xf32>
    %211 = arith.addf %206, %210 : vector<4x512xf32>
    %212 = vector.extract_strided_slice %1 {offsets = [0, 2], sizes = [4, 1], strides = [1, 1]} : vector<4x4xf32> to vector<4x1xf32>
    %213 = vector.broadcast %212 : vector<4x1xf32> to vector<4x512xf32>
    %214 = vector.broadcast %201 : vector<1x512xf32> to vector<4x512xf32>
    %215 = arith.mulf %213, %214 : vector<4x512xf32>
    %216 = arith.addf %211, %215 : vector<4x512xf32>
    %217 = vector.extract_strided_slice %1 {offsets = [0, 3], sizes = [4, 1], strides = [1, 1]} : vector<4x4xf32> to vector<4x1xf32>
    %218 = vector.broadcast %217 : vector<4x1xf32> to vector<4x512xf32>
    %219 = vector.broadcast %202 : vector<1x512xf32> to vector<4x512xf32>
    %220 = arith.mulf %218, %219 : vector<4x512xf32>
    %221 = arith.addf %216, %220 : vector<4x512xf32>
    %cst_80 = arith.constant dense<0.000000e+00> : vector<4xf32>
    %222 = vector.multi_reduction <add>, %221, %cst_80 [1] : vector<4x512xf32> to vector<4xf32>
    %223 = vector.shape_cast %222 : vector<4xf32> to vector<4x1xf32>
    %224 = arith.mulf %221, %221 : vector<4x512xf32>
    %cst_81 = arith.constant dense<0.000000e+00> : vector<4xf32>
    %225 = vector.multi_reduction <add>, %224, %cst_81 [1] : vector<4x512xf32> to vector<4xf32>
    %226 = vector.shape_cast %225 : vector<4xf32> to vector<4x1xf32>
    %cst_82 = arith.constant 0.001953125 : f32
    %227 = vector.broadcast %cst_82 : f32 to vector<4x1xf32>
    %228 = arith.mulf %223, %227 : vector<4x1xf32>
    %cst_83 = arith.constant 0.001953125 : f32
    %229 = vector.broadcast %cst_83 : f32 to vector<4x1xf32>
    %230 = arith.mulf %226, %229 : vector<4x1xf32>
    %231 = arith.mulf %228, %228 : vector<4x1xf32>
    %232 = arith.subf %230, %231 : vector<4x1xf32>
    %233 = vector.broadcast %228 : vector<4x1xf32> to vector<4x512xf32>
    %234 = arith.subf %221, %233 : vector<4x512xf32>
    %cst_84 = arith.constant 9.99999974E-6 : f32
    %235 = vector.broadcast %cst_84 : f32 to vector<4x1xf32>
    %236 = arith.addf %232, %235 : vector<4x1xf32>
    %237 = math.rsqrt %236 : vector<4x1xf32>
    %238 = vector.broadcast %237 : vector<4x1xf32> to vector<4x512xf32>
    %239 = arith.mulf %234, %238 : vector<4x512xf32>
    %cst_85 = arith.constant 0.00999999977 : f32
    %240 = vector.broadcast %cst_85 : f32 to vector<4x512xf32>
    %241 = arith.mulf %240, %239 : vector<4x512xf32>
    %242 = arith.maximumf %239, %241 : vector<4x512xf32>
    %c2_86 = arith.constant 2 : index
    %c0_87 = arith.constant 0 : index
    %243 = vector.load %arg1[%c2_86, %c0_87] : memref<8x512xf32, #tpu.memory_space<vmem>>, vector<1x512xf32>
    %244 = vector.extract_strided_slice %242 {offsets = [2, 0], sizes = [1, 512], strides = [1, 1]} : vector<4x512xf32> to vector<1x512xf32>
    %c3_88 = arith.constant 3 : index
    %c0_89 = arith.constant 0 : index
    %245 = vector.load %arg1[%c3_88, %c0_89] : memref<8x512xf32, #tpu.memory_space<vmem>>, vector<1x512xf32>
    %246 = vector.extract_strided_slice %242 {offsets = [3, 0], sizes = [1, 512], strides = [1, 1]} : vector<4x512xf32> to vector<1x512xf32>
    %247 = vector.extract_strided_slice %2 {offsets = [0, 0], sizes = [4, 1], strides = [1, 1]} : vector<4x4xf32> to vector<4x1xf32>
    %248 = vector.broadcast %247 : vector<4x1xf32> to vector<4x512xf32>
    %249 = vector.broadcast %243 : vector<1x512xf32> to vector<4x512xf32>
    %250 = arith.mulf %248, %249 : vector<4x512xf32>
    %251 = vector.extract_strided_slice %2 {offsets = [0, 1], sizes = [4, 1], strides = [1, 1]} : vector<4x4xf32> to vector<4x1xf32>
    %252 = vector.broadcast %251 : vector<4x1xf32> to vector<4x512xf32>
    %253 = vector.broadcast %244 : vector<1x512xf32> to vector<4x512xf32>
    %254 = arith.mulf %252, %253 : vector<4x512xf32>
    %255 = arith.addf %250, %254 : vector<4x512xf32>
    %256 = vector.extract_strided_slice %2 {offsets = [0, 2], sizes = [4, 1], strides = [1, 1]} : vector<4x4xf32> to vector<4x1xf32>
    %257 = vector.broadcast %256 : vector<4x1xf32> to vector<4x512xf32>
    %258 = vector.broadcast %245 : vector<1x512xf32> to vector<4x512xf32>
    %259 = arith.mulf %257, %258 : vector<4x512xf32>
    %260 = arith.addf %255, %259 : vector<4x512xf32>
    %261 = vector.extract_strided_slice %2 {offsets = [0, 3], sizes = [4, 1], strides = [1, 1]} : vector<4x4xf32> to vector<4x1xf32>
    %262 = vector.broadcast %261 : vector<4x1xf32> to vector<4x512xf32>
    %263 = vector.broadcast %246 : vector<1x512xf32> to vector<4x512xf32>
    %264 = arith.mulf %262, %263 : vector<4x512xf32>
    %265 = arith.addf %260, %264 : vector<4x512xf32>
    %cst_90 = arith.constant dense<0.000000e+00> : vector<4xf32>
    %266 = vector.multi_reduction <add>, %265, %cst_90 [1] : vector<4x512xf32> to vector<4xf32>
    %267 = vector.shape_cast %266 : vector<4xf32> to vector<4x1xf32>
    %268 = arith.mulf %265, %265 : vector<4x512xf32>
    %cst_91 = arith.constant dense<0.000000e+00> : vector<4xf32>
    %269 = vector.multi_reduction <add>, %268, %cst_91 [1] : vector<4x512xf32> to vector<4xf32>
    %270 = vector.shape_cast %269 : vector<4xf32> to vector<4x1xf32>
    %cst_92 = arith.constant 0.001953125 : f32
    %271 = vector.broadcast %cst_92 : f32 to vector<4x1xf32>
    %272 = arith.mulf %267, %271 : vector<4x1xf32>
    %cst_93 = arith.constant 0.001953125 : f32
    %273 = vector.broadcast %cst_93 : f32 to vector<4x1xf32>
    %274 = arith.mulf %270, %273 : vector<4x1xf32>
    %275 = arith.mulf %272, %272 : vector<4x1xf32>
    %276 = arith.subf %274, %275 : vector<4x1xf32>
    %277 = vector.broadcast %272 : vector<4x1xf32> to vector<4x512xf32>
    %278 = arith.subf %265, %277 : vector<4x512xf32>
    %cst_94 = arith.constant 9.99999974E-6 : f32
    %279 = vector.broadcast %cst_94 : f32 to vector<4x1xf32>
    %280 = arith.addf %276, %279 : vector<4x1xf32>
    %281 = math.rsqrt %280 : vector<4x1xf32>
    %282 = vector.broadcast %281 : vector<4x1xf32> to vector<4x512xf32>
    %283 = arith.mulf %278, %282 : vector<4x512xf32>
    %cst_95 = arith.constant 0.00999999977 : f32
    %284 = vector.broadcast %cst_95 : f32 to vector<4x512xf32>
    %285 = arith.mulf %284, %283 : vector<4x512xf32>
    %286 = arith.maximumf %283, %285 : vector<4x512xf32>
    %c13_96 = arith.constant 13 : index
    %c0_97 = arith.constant 0 : index
    %c0_98 = arith.constant 0 : index
    %287 = vector.load %arg7[%c13_96, %c0_97, %c0_98] : memref<27x4x512xf32, #tpu.memory_space<vmem>>, vector<1x4x512xf32>
    %288 = vector.shape_cast %287 : vector<1x4x512xf32> to vector<4x512xf32>
    %289 = arith.mulf %288, %286 : vector<4x512xf32>
    %c73_i32_99 = arith.constant 73 : i32
    %290 = tpu.dynamic_rotate %286 by %c73_i32_99 dim 1 : vector<4x512xf32>, i32 -> vector<4x512xf32>
    %c0_100 = arith.constant 0 : index
    %c0_101 = arith.constant 0 : index
    %c0_102 = arith.constant 0 : index
    %291 = vector.load %arg7[%c0_100, %c0_101, %c0_102] : memref<27x4x512xf32, #tpu.memory_space<vmem>>, vector<1x4x512xf32>
    %292 = vector.shape_cast %291 : vector<1x4x512xf32> to vector<4x512xf32>
    %293 = arith.mulf %292, %290 : vector<4x512xf32>
    %294 = arith.addf %289, %293 : vector<4x512xf32>
    %c72_i32_103 = arith.constant 72 : i32
    %295 = tpu.dynamic_rotate %286 by %c72_i32_103 dim 1 : vector<4x512xf32>, i32 -> vector<4x512xf32>
    %c1_104 = arith.constant 1 : index
    %c0_105 = arith.constant 0 : index
    %c0_106 = arith.constant 0 : index
    %296 = vector.load %arg7[%c1_104, %c0_105, %c0_106] : memref<27x4x512xf32, #tpu.memory_space<vmem>>, vector<1x4x512xf32>
    %297 = vector.shape_cast %296 : vector<1x4x512xf32> to vector<4x512xf32>
    %298 = arith.mulf %297, %295 : vector<4x512xf32>
    %299 = arith.addf %294, %298 : vector<4x512xf32>
    %c71_i32_107 = arith.constant 71 : i32
    %300 = tpu.dynamic_rotate %286 by %c71_i32_107 dim 1 : vector<4x512xf32>, i32 -> vector<4x512xf32>
    %c2_108 = arith.constant 2 : index
    %c0_109 = arith.constant 0 : index
    %c0_110 = arith.constant 0 : index
    %301 = vector.load %arg7[%c2_108, %c0_109, %c0_110] : memref<27x4x512xf32, #tpu.memory_space<vmem>>, vector<1x4x512xf32>
    %302 = vector.shape_cast %301 : vector<1x4x512xf32> to vector<4x512xf32>
    %303 = arith.mulf %302, %300 : vector<4x512xf32>
    %304 = arith.addf %299, %303 : vector<4x512xf32>
    %c65_i32_111 = arith.constant 65 : i32
    %305 = tpu.dynamic_rotate %286 by %c65_i32_111 dim 1 : vector<4x512xf32>, i32 -> vector<4x512xf32>
    %c3_112 = arith.constant 3 : index
    %c0_113 = arith.constant 0 : index
    %c0_114 = arith.constant 0 : index
    %306 = vector.load %arg7[%c3_112, %c0_113, %c0_114] : memref<27x4x512xf32, #tpu.memory_space<vmem>>, vector<1x4x512xf32>
    %307 = vector.shape_cast %306 : vector<1x4x512xf32> to vector<4x512xf32>
    %308 = arith.mulf %307, %305 : vector<4x512xf32>
    %309 = arith.addf %304, %308 : vector<4x512xf32>
    %c64_i32_115 = arith.constant 64 : i32
    %310 = tpu.dynamic_rotate %286 by %c64_i32_115 dim 1 : vector<4x512xf32>, i32 -> vector<4x512xf32>
    %c4_116 = arith.constant 4 : index
    %c0_117 = arith.constant 0 : index
    %c0_118 = arith.constant 0 : index
    %311 = vector.load %arg7[%c4_116, %c0_117, %c0_118] : memref<27x4x512xf32, #tpu.memory_space<vmem>>, vector<1x4x512xf32>
    %312 = vector.shape_cast %311 : vector<1x4x512xf32> to vector<4x512xf32>
    %313 = arith.mulf %312, %310 : vector<4x512xf32>
    %314 = arith.addf %309, %313 : vector<4x512xf32>
    %c63_i32_119 = arith.constant 63 : i32
    %315 = tpu.dynamic_rotate %286 by %c63_i32_119 dim 1 : vector<4x512xf32>, i32 -> vector<4x512xf32>
    %c5_120 = arith.constant 5 : index
    %c0_121 = arith.constant 0 : index
    %c0_122 = arith.constant 0 : index
    %316 = vector.load %arg7[%c5_120, %c0_121, %c0_122] : memref<27x4x512xf32, #tpu.memory_space<vmem>>, vector<1x4x512xf32>
    %317 = vector.shape_cast %316 : vector<1x4x512xf32> to vector<4x512xf32>
    %318 = arith.mulf %317, %315 : vector<4x512xf32>
    %319 = arith.addf %314, %318 : vector<4x512xf32>
    %c57_i32_123 = arith.constant 57 : i32
    %320 = tpu.dynamic_rotate %286 by %c57_i32_123 dim 1 : vector<4x512xf32>, i32 -> vector<4x512xf32>
    %c6_124 = arith.constant 6 : index
    %c0_125 = arith.constant 0 : index
    %c0_126 = arith.constant 0 : index
    %321 = vector.load %arg7[%c6_124, %c0_125, %c0_126] : memref<27x4x512xf32, #tpu.memory_space<vmem>>, vector<1x4x512xf32>
    %322 = vector.shape_cast %321 : vector<1x4x512xf32> to vector<4x512xf32>
    %323 = arith.mulf %322, %320 : vector<4x512xf32>
    %324 = arith.addf %319, %323 : vector<4x512xf32>
    %c56_i32_127 = arith.constant 56 : i32
    %325 = tpu.dynamic_rotate %286 by %c56_i32_127 dim 1 : vector<4x512xf32>, i32 -> vector<4x512xf32>
    %c7_128 = arith.constant 7 : index
    %c0_129 = arith.constant 0 : index
    %c0_130 = arith.constant 0 : index
    %326 = vector.load %arg7[%c7_128, %c0_129, %c0_130] : memref<27x4x512xf32, #tpu.memory_space<vmem>>, vector<1x4x512xf32>
    %327 = vector.shape_cast %326 : vector<1x4x512xf32> to vector<4x512xf32>
    %328 = arith.mulf %327, %325 : vector<4x512xf32>
    %329 = arith.addf %324, %328 : vector<4x512xf32>
    %c55_i32_131 = arith.constant 55 : i32
    %330 = tpu.dynamic_rotate %286 by %c55_i32_131 dim 1 : vector<4x512xf32>, i32 -> vector<4x512xf32>
    %c8_132 = arith.constant 8 : index
    %c0_133 = arith.constant 0 : index
    %c0_134 = arith.constant 0 : index
    %331 = vector.load %arg7[%c8_132, %c0_133, %c0_134] : memref<27x4x512xf32, #tpu.memory_space<vmem>>, vector<1x4x512xf32>
    %332 = vector.shape_cast %331 : vector<1x4x512xf32> to vector<4x512xf32>
    %333 = arith.mulf %332, %330 : vector<4x512xf32>
    %334 = arith.addf %329, %333 : vector<4x512xf32>
    %c9_i32_135 = arith.constant 9 : i32
    %335 = tpu.dynamic_rotate %286 by %c9_i32_135 dim 1 : vector<4x512xf32>, i32 -> vector<4x512xf32>
    %c9_136 = arith.constant 9 : index
    %c0_137 = arith.constant 0 : index
    %c0_138 = arith.constant 0 : index
    %336 = vector.load %arg7[%c9_136, %c0_137, %c0_138] : memref<27x4x512xf32, #tpu.memory_space<vmem>>, vector<1x4x512xf32>
    %337 = vector.shape_cast %336 : vector<1x4x512xf32> to vector<4x512xf32>
    %338 = arith.mulf %337, %335 : vector<4x512xf32>
    %339 = arith.addf %334, %338 : vector<4x512xf32>
    %c8_i32_139 = arith.constant 8 : i32
    %340 = tpu.dynamic_rotate %286 by %c8_i32_139 dim 1 : vector<4x512xf32>, i32 -> vector<4x512xf32>
    %c10_140 = arith.constant 10 : index
    %c0_141 = arith.constant 0 : index
    %c0_142 = arith.constant 0 : index
    %341 = vector.load %arg7[%c10_140, %c0_141, %c0_142] : memref<27x4x512xf32, #tpu.memory_space<vmem>>, vector<1x4x512xf32>
    %342 = vector.shape_cast %341 : vector<1x4x512xf32> to vector<4x512xf32>
    %343 = arith.mulf %342, %340 : vector<4x512xf32>
    %344 = arith.addf %339, %343 : vector<4x512xf32>
    %c7_i32_143 = arith.constant 7 : i32
    %345 = tpu.dynamic_rotate %286 by %c7_i32_143 dim 1 : vector<4x512xf32>, i32 -> vector<4x512xf32>
    %c11_144 = arith.constant 11 : index
    %c0_145 = arith.constant 0 : index
    %c0_146 = arith.constant 0 : index
    %346 = vector.load %arg7[%c11_144, %c0_145, %c0_146] : memref<27x4x512xf32, #tpu.memory_space<vmem>>, vector<1x4x512xf32>
    %347 = vector.shape_cast %346 : vector<1x4x512xf32> to vector<4x512xf32>
    %348 = arith.mulf %347, %345 : vector<4x512xf32>
    %349 = arith.addf %344, %348 : vector<4x512xf32>
    %c1_i32_147 = arith.constant 1 : i32
    %350 = tpu.dynamic_rotate %286 by %c1_i32_147 dim 1 : vector<4x512xf32>, i32 -> vector<4x512xf32>
    %c12_148 = arith.constant 12 : index
    %c0_149 = arith.constant 0 : index
    %c0_150 = arith.constant 0 : index
    %351 = vector.load %arg7[%c12_148, %c0_149, %c0_150] : memref<27x4x512xf32, #tpu.memory_space<vmem>>, vector<1x4x512xf32>
    %352 = vector.shape_cast %351 : vector<1x4x512xf32> to vector<4x512xf32>
    %353 = arith.mulf %352, %350 : vector<4x512xf32>
    %354 = arith.addf %349, %353 : vector<4x512xf32>
    %c511_i32_151 = arith.constant 511 : i32
    %355 = tpu.dynamic_rotate %286 by %c511_i32_151 dim 1 : vector<4x512xf32>, i32 -> vector<4x512xf32>
    %c14_152 = arith.constant 14 : index
    %c0_153 = arith.constant 0 : index
    %c0_154 = arith.constant 0 : index
    %356 = vector.load %arg7[%c14_152, %c0_153, %c0_154] : memref<27x4x512xf32, #tpu.memory_space<vmem>>, vector<1x4x512xf32>
    %357 = vector.shape_cast %356 : vector<1x4x512xf32> to vector<4x512xf32>
    %358 = arith.mulf %357, %355 : vector<4x512xf32>
    %359 = arith.addf %354, %358 : vector<4x512xf32>
    %c505_i32_155 = arith.constant 505 : i32
    %360 = tpu.dynamic_rotate %286 by %c505_i32_155 dim 1 : vector<4x512xf32>, i32 -> vector<4x512xf32>
    %c15_156 = arith.constant 15 : index
    %c0_157 = arith.constant 0 : index
    %c0_158 = arith.constant 0 : index
    %361 = vector.load %arg7[%c15_156, %c0_157, %c0_158] : memref<27x4x512xf32, #tpu.memory_space<vmem>>, vector<1x4x512xf32>
    %362 = vector.shape_cast %361 : vector<1x4x512xf32> to vector<4x512xf32>
    %363 = arith.mulf %362, %360 : vector<4x512xf32>
    %364 = arith.addf %359, %363 : vector<4x512xf32>
    %c504_i32_159 = arith.constant 504 : i32
    %365 = tpu.dynamic_rotate %286 by %c504_i32_159 dim 1 : vector<4x512xf32>, i32 -> vector<4x512xf32>
    %c16_160 = arith.constant 16 : index
    %c0_161 = arith.constant 0 : index
    %c0_162 = arith.constant 0 : index
    %366 = vector.load %arg7[%c16_160, %c0_161, %c0_162] : memref<27x4x512xf32, #tpu.memory_space<vmem>>, vector<1x4x512xf32>
    %367 = vector.shape_cast %366 : vector<1x4x512xf32> to vector<4x512xf32>
    %368 = arith.mulf %367, %365 : vector<4x512xf32>
    %369 = arith.addf %364, %368 : vector<4x512xf32>
    %c503_i32_163 = arith.constant 503 : i32
    %370 = tpu.dynamic_rotate %286 by %c503_i32_163 dim 1 : vector<4x512xf32>, i32 -> vector<4x512xf32>
    %c17_164 = arith.constant 17 : index
    %c0_165 = arith.constant 0 : index
    %c0_166 = arith.constant 0 : index
    %371 = vector.load %arg7[%c17_164, %c0_165, %c0_166] : memref<27x4x512xf32, #tpu.memory_space<vmem>>, vector<1x4x512xf32>
    %372 = vector.shape_cast %371 : vector<1x4x512xf32> to vector<4x512xf32>
    %373 = arith.mulf %372, %370 : vector<4x512xf32>
    %374 = arith.addf %369, %373 : vector<4x512xf32>
    %c457_i32_167 = arith.constant 457 : i32
    %375 = tpu.dynamic_rotate %286 by %c457_i32_167 dim 1 : vector<4x512xf32>, i32 -> vector<4x512xf32>
    %c18_168 = arith.constant 18 : index
    %c0_169 = arith.constant 0 : index
    %c0_170 = arith.constant 0 : index
    %376 = vector.load %arg7[%c18_168, %c0_169, %c0_170] : memref<27x4x512xf32, #tpu.memory_space<vmem>>, vector<1x4x512xf32>
    %377 = vector.shape_cast %376 : vector<1x4x512xf32> to vector<4x512xf32>
    %378 = arith.mulf %377, %375 : vector<4x512xf32>
    %379 = arith.addf %374, %378 : vector<4x512xf32>
    %c456_i32_171 = arith.constant 456 : i32
    %380 = tpu.dynamic_rotate %286 by %c456_i32_171 dim 1 : vector<4x512xf32>, i32 -> vector<4x512xf32>
    %c19_172 = arith.constant 19 : index
    %c0_173 = arith.constant 0 : index
    %c0_174 = arith.constant 0 : index
    %381 = vector.load %arg7[%c19_172, %c0_173, %c0_174] : memref<27x4x512xf32, #tpu.memory_space<vmem>>, vector<1x4x512xf32>
    %382 = vector.shape_cast %381 : vector<1x4x512xf32> to vector<4x512xf32>
    %383 = arith.mulf %382, %380 : vector<4x512xf32>
    %384 = arith.addf %379, %383 : vector<4x512xf32>
    %c455_i32_175 = arith.constant 455 : i32
    %385 = tpu.dynamic_rotate %286 by %c455_i32_175 dim 1 : vector<4x512xf32>, i32 -> vector<4x512xf32>
    %c20_176 = arith.constant 20 : index
    %c0_177 = arith.constant 0 : index
    %c0_178 = arith.constant 0 : index
    %386 = vector.load %arg7[%c20_176, %c0_177, %c0_178] : memref<27x4x512xf32, #tpu.memory_space<vmem>>, vector<1x4x512xf32>
    %387 = vector.shape_cast %386 : vector<1x4x512xf32> to vector<4x512xf32>
    %388 = arith.mulf %387, %385 : vector<4x512xf32>
    %389 = arith.addf %384, %388 : vector<4x512xf32>
    %c449_i32_179 = arith.constant 449 : i32
    %390 = tpu.dynamic_rotate %286 by %c449_i32_179 dim 1 : vector<4x512xf32>, i32 -> vector<4x512xf32>
    %c21_180 = arith.constant 21 : index
    %c0_181 = arith.constant 0 : index
    %c0_182 = arith.constant 0 : index
    %391 = vector.load %arg7[%c21_180, %c0_181, %c0_182] : memref<27x4x512xf32, #tpu.memory_space<vmem>>, vector<1x4x512xf32>
    %392 = vector.shape_cast %391 : vector<1x4x512xf32> to vector<4x512xf32>
    %393 = arith.mulf %392, %390 : vector<4x512xf32>
    %394 = arith.addf %389, %393 : vector<4x512xf32>
    %c448_i32_183 = arith.constant 448 : i32
    %395 = tpu.dynamic_rotate %286 by %c448_i32_183 dim 1 : vector<4x512xf32>, i32 -> vector<4x512xf32>
    %c22_184 = arith.constant 22 : index
    %c0_185 = arith.constant 0 : index
    %c0_186 = arith.constant 0 : index
    %396 = vector.load %arg7[%c22_184, %c0_185, %c0_186] : memref<27x4x512xf32, #tpu.memory_space<vmem>>, vector<1x4x512xf32>
    %397 = vector.shape_cast %396 : vector<1x4x512xf32> to vector<4x512xf32>
    %398 = arith.mulf %397, %395 : vector<4x512xf32>
    %399 = arith.addf %394, %398 : vector<4x512xf32>
    %c447_i32_187 = arith.constant 447 : i32
    %400 = tpu.dynamic_rotate %286 by %c447_i32_187 dim 1 : vector<4x512xf32>, i32 -> vector<4x512xf32>
    %c23_188 = arith.constant 23 : index
    %c0_189 = arith.constant 0 : index
    %c0_190 = arith.constant 0 : index
    %401 = vector.load %arg7[%c23_188, %c0_189, %c0_190] : memref<27x4x512xf32, #tpu.memory_space<vmem>>, vector<1x4x512xf32>
    %402 = vector.shape_cast %401 : vector<1x4x512xf32> to vector<4x512xf32>
    %403 = arith.mulf %402, %400 : vector<4x512xf32>
    %404 = arith.addf %399, %403 : vector<4x512xf32>
    %c441_i32_191 = arith.constant 441 : i32
    %405 = tpu.dynamic_rotate %286 by %c441_i32_191 dim 1 : vector<4x512xf32>, i32 -> vector<4x512xf32>
    %c24_192 = arith.constant 24 : index
    %c0_193 = arith.constant 0 : index
    %c0_194 = arith.constant 0 : index
    %406 = vector.load %arg7[%c24_192, %c0_193, %c0_194] : memref<27x4x512xf32, #tpu.memory_space<vmem>>, vector<1x4x512xf32>
    %407 = vector.shape_cast %406 : vector<1x4x512xf32> to vector<4x512xf32>
    %408 = arith.mulf %407, %405 : vector<4x512xf32>
    %409 = arith.addf %404, %408 : vector<4x512xf32>
    %c440_i32_195 = arith.constant 440 : i32
    %410 = tpu.dynamic_rotate %286 by %c440_i32_195 dim 1 : vector<4x512xf32>, i32 -> vector<4x512xf32>
    %c25_196 = arith.constant 25 : index
    %c0_197 = arith.constant 0 : index
    %c0_198 = arith.constant 0 : index
    %411 = vector.load %arg7[%c25_196, %c0_197, %c0_198] : memref<27x4x512xf32, #tpu.memory_space<vmem>>, vector<1x4x512xf32>
    %412 = vector.shape_cast %411 : vector<1x4x512xf32> to vector<4x512xf32>
    %413 = arith.mulf %412, %410 : vector<4x512xf32>
    %414 = arith.addf %409, %413 : vector<4x512xf32>
    %c439_i32_199 = arith.constant 439 : i32
    %415 = tpu.dynamic_rotate %286 by %c439_i32_199 dim 1 : vector<4x512xf32>, i32 -> vector<4x512xf32>
    %c26_200 = arith.constant 26 : index
    %c0_201 = arith.constant 0 : index
    %c0_202 = arith.constant 0 : index
    %416 = vector.load %arg7[%c26_200, %c0_201, %c0_202] : memref<27x4x512xf32, #tpu.memory_space<vmem>>, vector<1x4x512xf32>
    %417 = vector.shape_cast %416 : vector<1x4x512xf32> to vector<4x512xf32>
    %418 = arith.mulf %417, %415 : vector<4x512xf32>
    %419 = arith.addf %414, %418 : vector<4x512xf32>
    %cst_203 = arith.constant dense<0.000000e+00> : vector<4xf32>
    %420 = vector.multi_reduction <add>, %419, %cst_203 [1] : vector<4x512xf32> to vector<4xf32>
    %421 = vector.shape_cast %420 : vector<4xf32> to vector<4x1xf32>
    %422 = arith.mulf %419, %419 : vector<4x512xf32>
    %cst_204 = arith.constant dense<0.000000e+00> : vector<4xf32>
    %423 = vector.multi_reduction <add>, %422, %cst_204 [1] : vector<4x512xf32> to vector<4xf32>
    %424 = vector.shape_cast %423 : vector<4xf32> to vector<4x1xf32>
    %cst_205 = arith.constant 0.001953125 : f32
    %425 = vector.broadcast %cst_205 : f32 to vector<4x1xf32>
    %426 = arith.mulf %421, %425 : vector<4x1xf32>
    %cst_206 = arith.constant 0.001953125 : f32
    %427 = vector.broadcast %cst_206 : f32 to vector<4x1xf32>
    %428 = arith.mulf %424, %427 : vector<4x1xf32>
    %429 = arith.mulf %426, %426 : vector<4x1xf32>
    %430 = arith.subf %428, %429 : vector<4x1xf32>
    %431 = vector.broadcast %426 : vector<4x1xf32> to vector<4x512xf32>
    %432 = arith.subf %419, %431 : vector<4x512xf32>
    %cst_207 = arith.constant 9.99999974E-6 : f32
    %433 = vector.broadcast %cst_207 : f32 to vector<4x1xf32>
    %434 = arith.addf %430, %433 : vector<4x1xf32>
    %435 = math.rsqrt %434 : vector<4x1xf32>
    %436 = vector.broadcast %435 : vector<4x1xf32> to vector<4x512xf32>
    %437 = arith.mulf %432, %436 : vector<4x512xf32>
    %438 = vector.extract_strided_slice %437 {offsets = [0, 0], sizes = [1, 512], strides = [1, 1]} : vector<4x512xf32> to vector<1x512xf32>
    %439 = vector.extract_strided_slice %437 {offsets = [1, 0], sizes = [1, 512], strides = [1, 1]} : vector<4x512xf32> to vector<1x512xf32>
    %440 = vector.extract_strided_slice %437 {offsets = [2, 0], sizes = [1, 512], strides = [1, 1]} : vector<4x512xf32> to vector<1x512xf32>
    %441 = vector.extract_strided_slice %437 {offsets = [3, 0], sizes = [1, 512], strides = [1, 1]} : vector<4x512xf32> to vector<1x512xf32>
    %442 = vector.extract_strided_slice %3 {offsets = [0, 0], sizes = [4, 1], strides = [1, 1]} : vector<4x4xf32> to vector<4x1xf32>
    %443 = vector.broadcast %442 : vector<4x1xf32> to vector<4x512xf32>
    %444 = vector.broadcast %438 : vector<1x512xf32> to vector<4x512xf32>
    %445 = arith.mulf %443, %444 : vector<4x512xf32>
    %446 = vector.extract_strided_slice %3 {offsets = [0, 1], sizes = [4, 1], strides = [1, 1]} : vector<4x4xf32> to vector<4x1xf32>
    %447 = vector.broadcast %446 : vector<4x1xf32> to vector<4x512xf32>
    %448 = vector.broadcast %439 : vector<1x512xf32> to vector<4x512xf32>
    %449 = arith.mulf %447, %448 : vector<4x512xf32>
    %450 = arith.addf %445, %449 : vector<4x512xf32>
    %451 = vector.extract_strided_slice %3 {offsets = [0, 2], sizes = [4, 1], strides = [1, 1]} : vector<4x4xf32> to vector<4x1xf32>
    %452 = vector.broadcast %451 : vector<4x1xf32> to vector<4x512xf32>
    %453 = vector.broadcast %440 : vector<1x512xf32> to vector<4x512xf32>
    %454 = arith.mulf %452, %453 : vector<4x512xf32>
    %455 = arith.addf %450, %454 : vector<4x512xf32>
    %456 = vector.extract_strided_slice %3 {offsets = [0, 3], sizes = [4, 1], strides = [1, 1]} : vector<4x4xf32> to vector<4x1xf32>
    %457 = vector.broadcast %456 : vector<4x1xf32> to vector<4x512xf32>
    %458 = vector.broadcast %441 : vector<1x512xf32> to vector<4x512xf32>
    %459 = arith.mulf %457, %458 : vector<4x512xf32>
    %460 = arith.addf %455, %459 : vector<4x512xf32>
    %cst_208 = arith.constant dense<0.000000e+00> : vector<4xf32>
    %461 = vector.multi_reduction <add>, %460, %cst_208 [1] : vector<4x512xf32> to vector<4xf32>
    %462 = vector.shape_cast %461 : vector<4xf32> to vector<4x1xf32>
    %463 = arith.mulf %460, %460 : vector<4x512xf32>
    %cst_209 = arith.constant dense<0.000000e+00> : vector<4xf32>
    %464 = vector.multi_reduction <add>, %463, %cst_209 [1] : vector<4x512xf32> to vector<4xf32>
    %465 = vector.shape_cast %464 : vector<4xf32> to vector<4x1xf32>
    %cst_210 = arith.constant 0.001953125 : f32
    %466 = vector.broadcast %cst_210 : f32 to vector<4x1xf32>
    %467 = arith.mulf %462, %466 : vector<4x1xf32>
    %cst_211 = arith.constant 0.001953125 : f32
    %468 = vector.broadcast %cst_211 : f32 to vector<4x1xf32>
    %469 = arith.mulf %465, %468 : vector<4x1xf32>
    %470 = arith.mulf %467, %467 : vector<4x1xf32>
    %471 = arith.subf %469, %470 : vector<4x1xf32>
    %472 = vector.broadcast %467 : vector<4x1xf32> to vector<4x512xf32>
    %473 = arith.subf %460, %472 : vector<4x512xf32>
    %cst_212 = arith.constant 9.99999974E-6 : f32
    %474 = vector.broadcast %cst_212 : f32 to vector<4x1xf32>
    %475 = arith.addf %471, %474 : vector<4x1xf32>
    %476 = math.rsqrt %475 : vector<4x1xf32>
    %477 = vector.broadcast %476 : vector<4x1xf32> to vector<4x512xf32>
    %478 = arith.mulf %473, %477 : vector<4x512xf32>
    %cst_213 = arith.constant 0.00999999977 : f32
    %479 = vector.broadcast %cst_213 : f32 to vector<4x512xf32>
    %480 = arith.mulf %479, %478 : vector<4x512xf32>
    %481 = arith.maximumf %478, %480 : vector<4x512xf32>
    %c0_214 = arith.constant 0 : index
    %c0_215 = arith.constant 0 : index
    %482 = vector.load %arg1[%c0_214, %c0_215] : memref<8x512xf32, #tpu.memory_space<vmem>>, vector<1x512xf32>
    %483 = vector.extract_strided_slice %481 {offsets = [0, 0], sizes = [1, 512], strides = [1, 1]} : vector<4x512xf32> to vector<1x512xf32>
    %484 = vector.extract_strided_slice %242 {offsets = [0, 0], sizes = [1, 512], strides = [1, 1]} : vector<4x512xf32> to vector<1x512xf32>
    %485 = vector.extract_strided_slice %481 {offsets = [1, 0], sizes = [1, 512], strides = [1, 1]} : vector<4x512xf32> to vector<1x512xf32>
    %c1_216 = arith.constant 1 : index
    %c0_217 = arith.constant 0 : index
    %486 = vector.load %arg1[%c1_216, %c0_217] : memref<8x512xf32, #tpu.memory_space<vmem>>, vector<1x512xf32>
    %487 = vector.extract_strided_slice %481 {offsets = [2, 0], sizes = [1, 512], strides = [1, 1]} : vector<4x512xf32> to vector<1x512xf32>
    %488 = vector.extract_strided_slice %242 {offsets = [1, 0], sizes = [1, 512], strides = [1, 1]} : vector<4x512xf32> to vector<1x512xf32>
    %489 = vector.extract_strided_slice %481 {offsets = [3, 0], sizes = [1, 512], strides = [1, 1]} : vector<4x512xf32> to vector<1x512xf32>
    %490 = tpu.concatenate %482, %483, %484, %485, %486, %487, %488, %489 in 0 : vector<1x512xf32>, vector<1x512xf32>, vector<1x512xf32>, vector<1x512xf32>, vector<1x512xf32>, vector<1x512xf32>, vector<1x512xf32>, vector<1x512xf32> -> vector<8x512xf32>
    %c0_218 = arith.constant 0 : index
    %c0_219 = arith.constant 0 : index
    %491 = vector.load %arg8[%c0_218, %c0_219] : memref<8x512xf32, #tpu.memory_space<vmem>>, vector<8x512xf32>
    tpu.vector_store %arg8[%c0_218, %c0_219], %490 {strides = array<i32>} : memref<8x512xf32, #tpu.memory_space<vmem>>, vector<8x512xf32>,
    return
  }
  func.func @transform_0(%arg0: i32) -> (i32, i32) {
    %c0_i32 = arith.constant 0 : i32
    %c0_i32_0 = arith.constant 0 : i32
    return %arg0, %c0_i32 : i32, i32
  }
  func.func @transform_1(%arg0: i32) -> (i32, i32) {
    %c0_i32 = arith.constant 0 : i32
    %c0_i32_0 = arith.constant 0 : i32
    %c0_i32_1 = arith.constant 0 : i32
    return %c0_i32, %c0_i32_0 : i32, i32
  }
  func.func @transform_2(%arg0: i32) -> (i32, i32) {
    %c0_i32 = arith.constant 0 : i32
    %c0_i32_0 = arith.constant 0 : i32
    %c0_i32_1 = arith.constant 0 : i32
    return %c0_i32, %c0_i32_0 : i32, i32
  }
  func.func @transform_3(%arg0: i32) -> (i32, i32) {
    %c0_i32 = arith.constant 0 : i32
    %c0_i32_0 = arith.constant 0 : i32
    %c0_i32_1 = arith.constant 0 : i32
    return %c0_i32, %c0_i32_0 : i32, i32
  }
  func.func @transform_4(%arg0: i32) -> (i32, i32) {
    %c0_i32 = arith.constant 0 : i32
    %c0_i32_0 = arith.constant 0 : i32
    %c0_i32_1 = arith.constant 0 : i32
    return %c0_i32, %c0_i32_0 : i32, i32
  }
  func.func @transform_5(%arg0: i32) -> (i32, i32, i32) {
    %c0_i32 = arith.constant 0 : i32
    %c0_i32_0 = arith.constant 0 : i32
    %c0_i32_1 = arith.constant 0 : i32
    %c0_i32_2 = arith.constant 0 : i32
    return %c0_i32, %c0_i32_0, %c0_i32_1 : i32, i32, i32
  }
  func.func @transform_6(%arg0: i32) -> (i32, i32, i32) {
    %c0_i32 = arith.constant 0 : i32
    %c0_i32_0 = arith.constant 0 : i32
    %c0_i32_1 = arith.constant 0 : i32
    %c0_i32_2 = arith.constant 0 : i32
    return %c0_i32, %c0_i32_0, %c0_i32_1 : i32, i32, i32
  }
  func.func @transform_7(%arg0: i32) -> (i32, i32) {
    %c0_i32 = arith.constant 0 : i32
    %c0_i32_0 = arith.constant 0 : i32
    return %arg0, %c0_i32 : i32, i32
  }
}

</mosaic_0001>

<llo_original>
// kernel: tpu_custom_call.1
$region0: #{tpu_custom_call.1}
  #allocation0 [shape = 'u32[]', space=smem, size = 0x4, offset = 0x4, fixed_abs, tag = 'smem constant byte address 0x4 - core index']
  #allocation1 [shape = 'u32[144,128]{1,0:T(1,128)}', space=vmem, size = 0x12000, scoped, tag = 'internal scratch']
  %s0 = inlined_call_operand.hbm [shape: f32[16,512], index: 0, kind: input, shape index: {}]
  %s1 = inlined_call_operand.hbm [shape: f32[4,4], index: 1, kind: input, shape index: {}]
  %s2 = inlined_call_operand.vmem [shape: f32[4,4], index: 2, kind: input, shape index: {}]
  %s3 = inlined_call_operand.vmem [shape: f32[4,4], index: 3, kind: input, shape index: {}]
  %s4 = inlined_call_operand.vmem [shape: f32[4,4], index: 4, kind: input, shape index: {}]
  %s5 = inlined_call_operand.hbm [shape: f32[27,4,512], index: 5, kind: input, shape index: {}]
  %s6 = inlined_call_operand.hbm [shape: f32[27,4,512], index: 6, kind: input, shape index: {}]
  %s7 = inlined_call_operand.hbm [shape: f32[16,512], index: 7, kind: output, shape index: {}]
  %s8 = sld [smem:[#allocation0]]
  $region77: #{tpu_custom_call.1} parent=0
    _
  %s10 = ssub.s32 1, %s8
  %s11 = scalar_select 0, %s10, %s8
  $region1: #{tpu_custom_call.1} parent=0
    #allocation2 [shape = 'u8[32768]{0}', space=vmem, size = 0x8000, scoped, tag = 'input window, operand 0']
    #allocation3 [shape = 's32[2]{0}', space=sflag, size = 0x8, scoped, tag = 'scoped memory for tpu_custom_call.1']
    #allocation4 [shape = 's32[2]{0}', space=sflag, size = 0x8, scoped, tag = 'scoped memory for tpu_custom_call.1']
    #allocation5 [shape = 'u8[2048]{0}', space=vmem, size = 0x800, scoped, tag = 'input window, operand 1, single buffered']
    #allocation6 [shape = 's32[1]{0}', space=sflag, size = 0x4, scoped, tag = 'scoped memory for tpu_custom_call.1']
    #allocation7 [shape = 'u8[221184]{0}', space=vmem, size = 0x36000, scoped, tag = 'input window, operand 5, single buffered']
    #allocation8 [shape = 'u8[221184]{0}', space=vmem, size = 0x36000, scoped, tag = 'input window, operand 6, single buffered']
    #allocation9 [shape = 's32[1]{0}', space=sflag, size = 0x4, scoped, tag = 'scoped memory for tpu_custom_call.1']
    #allocation10 [shape = 'u8[32768]{0}', space=vmem, size = 0x8000, scoped, tag = 'output window, operand 0']
    %12 = vsyncpa [#allocation3], 0
    %s13 = scalar_lea.sflag [#allocation3], 1
    %14 = vsyncpa %s13, 0
    %15 = vsyncpa [#allocation6], 0
    %16 = vsyncpa [#allocation9], 0
    %17 = vsyncpa [#allocation4], 0
    %s18 = scalar_lea.sflag [#allocation4], 1
    %19 = vsyncpa %s18, 0
    loop: start=0, step=1, limit=4
    $region2: #{tpu_custom_call.1} parent=1 // loop_pre_header
      _
    $region3: #{tpu_custom_call.1} parent=1 // loop_header
      %s21 = sphi 0, %s25
      %p22 = scmp.ge.s32.totalorder %s21, 4
      %s31 = sphi 0, %s33
      %s34 = sphi 0, %s31
      %s35 = sphi 0, %s34
      %s51 = sphi 0, %s35
      %s55 = sphi 0, %s55
      %s57 = sphi 0, %s55
      %s58 = sphi 0, %s57
      %s72 = sphi 0, %s58
      %s76 = sphi 0, %s76
      %s78 = sphi 0, %s76
      %s79 = sphi 0, %s78
      %s93 = sphi 0, %s79
      %s97 = sphi 0, %s97
      %s99 = sphi 0, %s97
      %s100 = sphi 0, %s99
      %s114 = sphi 0, %s100
      %s118 = sphi 0, %s118
      %s120 = sphi 0, %s118
      %s121 = sphi 0, %s120
      %s135 = sphi 0, %s121
      %s139 = sphi 0, %s139
      %s141 = sphi 0, %s139
      %s142 = sphi 0, %s141
      %s156 = sphi 0, %s142
      %s160 = sphi 0, %s160
      %s162 = sphi 0, %s160
      %s163 = sphi 0, %s162
      %s177 = sphi 0, %s163
      %s183 = sphi 0, %s185
      %s186 = sphi 0, %s183
      %s187 = sphi 0, %s186
      %s203 = sphi 0, %s187
    $region4: #{tpu_custom_call.1} parent=1 // loop_header_branch
      %24 = sbr.rel (%p22) target = $region8
    $region5: #{tpu_custom_call.1} parent=1 // loop_body
      %s26 = ssub.s32 %s21, 1
      %s27 = ssub.s32 %s21, 2
      %s28 = sadd.s32 %s21, 1
      %s29 = ssub.s32 %s21, %s28
      %p30 = scmp.eq.s32.totalorder %s29, 0
      %s32 = sadd.s32 %s31, 1
      %s33 = scalar_select %p30, %s31, %s32
      %p36 = pneg %p30
      %p37 = scmp.eq.s32.totalorder %s21, 1
      %p38 = por %p36, %p37
      %p39 = scmp.ne.s32.totalorder %s31, %s34
      %p40 = scmp.eq.s32.totalorder %s21, 0
      %p41 = por %p39, %p40
      %p42 = scmp.ne.s32.totalorder %s31, %s34
      %p43 = scmp.eq.s32.totalorder %s26, 1
      %p44 = por %p42, %p43
      %p45 = scmp.ne.s32.totalorder %s34, %s35
      %p46 = scmp.eq.s32.totalorder %s26, 0
      %p47 = por %p45, %p46
      %p48 = scmp.ne.s32.totalorder %s34, %s35
      %p49 = scmp.eq.s32.totalorder %s27, 1
      %p50 = por %p48, %p49
      %p52 = scmp.ne.s32.totalorder %s35, %s51
      %p53 = scmp.eq.s32.totalorder %s27, 0
      %p54 = por %p52, %p53
      %s56 = sadd.s32 %s55, 1
      %p59 = scmp.eq.s32.totalorder %s21, 1
      %p60 = scmp.ne.s32.totalorder %s55, %s57
      %p61 = scmp.eq.s32.totalorder %s21, 0
      %p62 = por %p60, %p61
      %p63 = scmp.ne.s32.totalorder %s55, %s57
      %p64 = scmp.eq.s32.totalorder %s26, 1
      %p65 = por %p63, %p64
      %p66 = scmp.ne.s32.totalorder %s57, %s58
      %p67 = scmp.eq.s32.totalorder %s26, 0
      %p68 = por %p66, %p67
      %p69 = scmp.ne.s32.totalorder %s57, %s58
      %p70 = scmp.eq.s32.totalorder %s27, 1
      %p71 = por %p69, %p70
      %p73 = scmp.ne.s32.totalorder %s58, %s72
      %p74 = scmp.eq.s32.totalorder %s27, 0
      %p75 = por %p73, %p74
      %s77 = sadd.s32 %s76, 1
      %p80 = scmp.eq.s32.totalorder %s21, 1
      %p81 = scmp.ne.s32.totalorder %s76, %s78
      %p82 = scmp.eq.s32.totalorder %s21, 0
      %p83 = por %p81, %p82
      %p84 = scmp.ne.s32.totalorder %s76, %s78
      %p85 = scmp.eq.s32.totalorder %s26, 1
      %p86 = por %p84, %p85
      %p87 = scmp.ne.s32.totalorder %s78, %s79
      %p88 = scmp.eq.s32.totalorder %s26, 0
      %p89 = por %p87, %p88
      %p90 = scmp.ne.s32.totalorder %s78, %s79
      %p91 = scmp.eq.s32.totalorder %s27, 1
      %p92 = por %p90, %p91
      %p94 = scmp.ne.s32.totalorder %s79, %s93
      %p95 = scmp.eq.s32.totalorder %s27, 0
      %p96 = por %p94, %p95
      %s98 = sadd.s32 %s97, 1
      %p101 = scmp.eq.s32.totalorder %s21, 1
      %p102 = scmp.ne.s32.totalorder %s97, %s99
      %p103 = scmp.eq.s32.totalorder %s21, 0
      %p104 = por %p102, %p103
      %p105 = scmp.ne.s32.totalorder %s97, %s99
      %p106 = scmp.eq.s32.totalorder %s26, 1
      %p107 = por %p105, %p106
      %p108 = scmp.ne.s32.totalorder %s99, %s100
      %p109 = scmp.eq.s32.totalorder %s26, 0
      %p110 = por %p108, %p109
      %p111 = scmp.ne.s32.totalorder %s99, %s100
      %p112 = scmp.eq.s32.totalorder %s27, 1
      %p113 = por %p111, %p112
      %p115 = scmp.ne.s32.totalorder %s100, %s114
      %p116 = scmp.eq.s32.totalorder %s27, 0
      %p117 = por %p115, %p116
      %s119 = sadd.s32 %s118, 1
      %p122 = scmp.eq.s32.totalorder %s21, 1
      %p123 = scmp.ne.s32.totalorder %s118, %s120
      %p124 = scmp.eq.s32.totalorder %s21, 0
      %p125 = por %p123, %p124
      %p126 = scmp.ne.s32.totalorder %s118, %s120
      %p127 = scmp.eq.s32.totalorder %s26, 1
      %p128 = por %p126, %p127
      %p129 = scmp.ne.s32.totalorder %s120, %s121
      %p130 = scmp.eq.s32.totalorder %s26, 0
      %p131 = por %p129, %p130
      %p132 = scmp.ne.s32.totalorder %s120, %s121
      %p133 = scmp.eq.s32.totalorder %s27, 1
      %p134 = por %p132, %p133
      %p136 = scmp.ne.s32.totalorder %s121, %s135
      %p137 = scmp.eq.s32.totalorder %s27, 0
      %p138 = por %p136, %p137
      %s140 = sadd.s32 %s139, 1
      %p143 = scmp.eq.s32.totalorder %s21, 1
      %p144 = scmp.ne.s32.totalorder %s139, %s141
      %p145 = scmp.eq.s32.totalorder %s21, 0
      %p146 = por %p144, %p145
      %p147 = scmp.ne.s32.totalorder %s139, %s141
      %p148 = scmp.eq.s32.totalorder %s26, 1
      %p149 = por %p147, %p148
      %p150 = scmp.ne.s32.totalorder %s141, %s142
      %p151 = scmp.eq.s32.totalorder %s26, 0
      %p152 = por %p150, %p151
      %p153 = scmp.ne.s32.totalorder %s141, %s142
      %p154 = scmp.eq.s32.totalorder %s27, 1
      %p155 = por %p153, %p154
      %p157 = scmp.ne.s32.totalorder %s142, %s156
      %p158 = scmp.eq.s32.totalorder %s27, 0
      %p159 = por %p157, %p158
      %s161 = sadd.s32 %s160, 1
      %p164 = scmp.eq.s32.totalorder %s21, 1
      %p165 = scmp.ne.s32.totalorder %s160, %s162
      %p166 = scmp.eq.s32.totalorder %s21, 0
      %p167 = por %p165, %p166
      %p168 = scmp.ne.s32.totalorder %s160, %s162
      %p169 = scmp.eq.s32.totalorder %s26, 1
      %p170 = por %p168, %p169
      %p171 = scmp.ne.s32.totalorder %s162, %s163
      %p172 = scmp.eq.s32.totalorder %s26, 0
      %p173 = por %p171, %p172
      %p174 = scmp.ne.s32.totalorder %s162, %s163
      %p175 = scmp.eq.s32.totalorder %s27, 1
      %p176 = por %p174, %p175
      %p178 = scmp.ne.s32.totalorder %s163, %s177
      %p179 = scmp.eq.s32.totalorder %s27, 0
      %p180 = por %p178, %p179
      %s181 = ssub.s32 %s21, %s28
      %p182 = scmp.eq.s32.totalorder %s181, 0
      %s184 = sadd.s32 %s183, 1
      %s185 = scalar_select %p182, %s183, %s184
      %p188 = pneg %p182
      %p189 = scmp.eq.s32.totalorder %s21, 1
      %p190 = por %p188, %p189
      %p191 = scmp.ne.s32.totalorder %s183, %s186
      %p192 = scmp.eq.s32.totalorder %s21, 0
      %p193 = por %p191, %p192
      %p194 = scmp.ne.s32.totalorder %s183, %s186
      %p195 = scmp.eq.s32.totalorder %s26, 1
      %p196 = por %p194, %p195
      %p197 = scmp.ne.s32.totalorder %s186, %s187
      %p198 = scmp.eq.s32.totalorder %s26, 0
      %p199 = por %p197, %p198
      %p200 = scmp.ne.s32.totalorder %s186, %s187
      %p201 = scmp.eq.s32.totalorder %s27, 1
      %p202 = por %p200, %p201
      %p204 = scmp.ne.s32.totalorder %s187, %s203
      %p205 = scmp.eq.s32.totalorder %s27, 0
      %p206 = por %p204, %p205
      %p207 = scmp.le.s32.totalorder 1, %s21
      %p208 = scmp.lt.s32.totalorder %s21, 3
      %p209 = pnand %p207, %p208
      %p210 = pneg %p209
      // Predicated region
      $region9: #{tpu_custom_call.1} parent=5 // pred_check
        _
      $region10: #{tpu_custom_call.1} parent=5 // pred_check_branch
        %212 = sbr.rel (%p209) target = $region12
      $region11: #{tpu_custom_call.1} parent=5 // pred_region
        %s213 = ssub.s32 %s21, 1
        // Predicated region
        $region13: #{tpu_custom_call.1} parent=11 // pred_check
          %p214 = pneg %p68
        $region14: #{tpu_custom_call.1} parent=11 // pred_check_branch
          %216 = sbr.rel (%p214) target = $region16
        $region15: #{tpu_custom_call.1} parent=11 // pred_region
          %s218 = ssub.s32 64, 64
          %219 = vsyncadd [#allocation6], %s218
          %s221 = sshll.u32 [#allocation5], 4
          %s222 = int_to_ptr.vmem [resolvable:$true] %s221
          %224 = dma.hbm_to_vmem [thread:$0]  %s1, 64, %s222, [#allocation6]
        $region16: #{tpu_custom_call.1} parent=11 // pred_fallthru
          _
        // Predicated region
        $region17: #{tpu_custom_call.1} parent=11 // pred_check
          %p225 = pneg %p89
        $region18: #{tpu_custom_call.1} parent=11 // pred_check_branch
          %227 = sbr.rel (%p225) target = $region20
        $region19: #{tpu_custom_call.1} parent=11 // pred_region
          _
        $region20: #{tpu_custom_call.1} parent=11 // pred_fallthru
          _
        // Predicated region
        $region21: #{tpu_custom_call.1} parent=11 // pred_check
          %p228 = pneg %p110
        $region22: #{tpu_custom_call.1} parent=11 // pred_check_branch
          %230 = sbr.rel (%p228) target = $region24
        $region23: #{tpu_custom_call.1} parent=11 // pred_region
          _
        $region24: #{tpu_custom_call.1} parent=11 // pred_fallthru
          _
        // Predicated region
        $region25: #{tpu_custom_call.1} parent=11 // pred_check
          %p231 = pneg %p131
        $region26: #{tpu_custom_call.1} parent=11 // pred_check_branch
          %233 = sbr.rel (%p231) target = $region28
        $region27: #{tpu_custom_call.1} parent=11 // pred_region
          _
        $region28: #{tpu_custom_call.1} parent=11 // pred_fallthru
          _
        // Predicated region
        $region29: #{tpu_custom_call.1} parent=11 // pred_check
          %p234 = pneg %p152
        $region30: #{tpu_custom_call.1} parent=11 // pred_check_branch
          %236 = sbr.rel (%p234) target = $region32
        $region31: #{tpu_custom_call.1} parent=11 // pred_region
          %s238 = ssub.s32 6912, 6912
          %239 = vsyncadd [#allocation6], %s238
          %s240 = sshll.u32 [#allocation7], 4
          %s241 = int_to_ptr.vmem [resolvable:$true] %s240
          %246 = dma.hbm_to_vmem [thread:$0]  %s5, 6912, %s241, [#allocation6], 256, 256, 16
        $region32: #{tpu_custom_call.1} parent=11 // pred_fallthru
          _
        // Predicated region
        $region33: #{tpu_custom_call.1} parent=11 // pred_check
          %p247 = pneg %p173
        $region34: #{tpu_custom_call.1} parent=11 // pred_check_branch
          %249 = sbr.rel (%p247) target = $region36
        $region35: #{tpu_custom_call.1} parent=11 // pred_region
          %s251 = ssub.s32 6912, 6912
          %252 = vsyncadd [#allocation9], %s251
          %s253 = sshll.u32 [#allocation8], 4
          %s254 = int_to_ptr.vmem [resolvable:$true] %s253
          %259 = dma.hbm_to_vmem [thread:$0]  %s6, 6912, %s254, [#allocation9], 256, 256, 16
        $region36: #{tpu_custom_call.1} parent=11 // pred_fallthru
          _
      $region12: #{tpu_custom_call.1} parent=5 // pred_fallthru
        _
      %p260 = scmp.lt.s32.totalorder %s21, 2
      // Predicated region
      $region37: #{tpu_custom_call.1} parent=5 // pred_check
        %p261 = pneg %p260
      $region38: #{tpu_custom_call.1} parent=5 // pred_check_branch
        %263 = sbr.rel (%p261) target = $region40
      $region39: #{tpu_custom_call.1} parent=5 // pred_region
        // Predicated region
        $region41: #{tpu_custom_call.1} parent=39 // pred_check
          %p264 = pneg %p41
        $region42: #{tpu_custom_call.1} parent=39 // pred_check_branch
          %266 = sbr.rel (%p264) target = $region44
        $region43: #{tpu_custom_call.1} parent=39 // pred_region
          %s267 = sand.u32 %s31, 1
          %s268 = scalar_lea.sflag [#allocation3], %s267
          %s269 = sand.u32 %s31, 1
          %s270 = smul.addr %s269, 32
          %s271 = scalar_lea.vmem [#allocation2], %s270
          %s273 = ssub.s32 512, 512
          %274 = vsyncadd %s268, %s273
          %s275 = smul.addr %s21, 4
          %s276 = smul.addr %s275, 128
          %s277 = scalar_lea.hbm %s0, %s276
          %s279 = sshll.u32 %s271, 4
          %s280 = int_to_ptr.vmem [resolvable:$true] %s279
          %282 = dma.hbm_to_vmem [thread:$0]  %s277, 512, %s280, %s268
        $region44: #{tpu_custom_call.1} parent=39 // pred_fallthru
          _
      $region40: #{tpu_custom_call.1} parent=5 // pred_fallthru
        _
      %p283 = scmp.le.s32.totalorder 1, %s21
      %p284 = scmp.lt.s32.totalorder %s21, 3
      %p285 = pnand %p283, %p284
      %p286 = pneg %p285
      // Predicated region
      $region45: #{tpu_custom_call.1} parent=5 // pred_check
        _
      $region46: #{tpu_custom_call.1} parent=5 // pred_check_branch
        %288 = sbr.rel (%p285) target = $region48
      $region47: #{tpu_custom_call.1} parent=5 // pred_region
        %s289 = ssub.s32 %s21, 1
        %s290 = sand.u32 %s34, 1
        %s291 = scalar_lea.sflag [#allocation3], %s290
        %s292 = sand.u32 %s34, 1
        %s293 = smul.addr %s292, 32
        %s294 = scalar_lea.vmem [#allocation2], %s293
        // Predicated region
        $region49: #{tpu_custom_call.1} parent=47 // pred_check
          %p295 = pneg %p47
        $region50: #{tpu_custom_call.1} parent=47 // pred_check_branch
          %297 = sbr.rel (%p295) target = $region52
        $region51: #{tpu_custom_call.1} parent=47 // pred_region
          %298 = dma.done %s291, 512
        $region52: #{tpu_custom_call.1} parent=47 // pred_fallthru
          _
        // Predicated region
        $region53: #{tpu_custom_call.1} parent=47 // pred_check
          %p299 = pneg %p68
        $region54: #{tpu_custom_call.1} parent=47 // pred_check_branch
          %301 = sbr.rel (%p299) target = $region56
        $region55: #{tpu_custom_call.1} parent=47 // pred_region
          %302 = dma.done [#allocation6], 64
        $region56: #{tpu_custom_call.1} parent=47 // pred_fallthru
          _
        // Predicated region
        $region57: #{tpu_custom_call.1} parent=47 // pred_check
          %p303 = pneg %p152
        $region58: #{tpu_custom_call.1} parent=47 // pred_check_branch
          %305 = sbr.rel (%p303) target = $region60
        $region59: #{tpu_custom_call.1} parent=47 // pred_region
          %306 = dma.done [#allocation6], 6912
        $region60: #{tpu_custom_call.1} parent=47 // pred_fallthru
          _
        // Predicated region
        $region61: #{tpu_custom_call.1} parent=47 // pred_check
          %p307 = pneg %p173
        $region62: #{tpu_custom_call.1} parent=47 // pred_check_branch
          %309 = sbr.rel (%p307) target = $region64
        $region63: #{tpu_custom_call.1} parent=47 // pred_region
          %310 = dma.done [#allocation9], 6912
        $region64: #{tpu_custom_call.1} parent=47 // pred_fallthru
          _
        %s311 = sand.u32 %s34, 1
        %s312 = scalar_lea.sflag [#allocation3], %s311
        %s313 = sand.u32 %s34, 1
        %s314 = smul.addr %s313, 32
        %s315 = scalar_lea.vmem [#allocation2], %s314
        %p316 = pneg %p47
        %p317 = pneg %p44
        %p318 = pneg %p68
        %p319 = pneg %p65
        %p320 = pneg %p89
        %p321 = pneg %p86
        %p322 = pneg %p110
        %p323 = pneg %p107
        %p324 = pneg %p131
        %p325 = pneg %p128
        %p326 = pneg %p152
        %p327 = pneg %p149
        %p328 = pneg %p173
        %p329 = pneg %p170
        %p330 = pneg %p199
        %p331 = pneg %p196
        %s332 = sand.u32 %s186, 1
        %s333 = scalar_lea.sflag [#allocation4], %s332
        %s334 = sand.u32 %s186, 1
        %s335 = smul.addr %s334, 32
        %s336 = scalar_lea.vmem [#allocation10], %s335
        %v337 = vld [vmem:[#allocation5] sm:$0xf]
        %v338 = vld [vmem:[%s2] sm:$0xf]
        %v339 = vld [vmem:[%s3] sm:$0xf]
        %v340 = vld [vmem:[%s4] sm:$0xf]
        %s341 = scalar_lea.vmem %s294, 4 [#allocation2]
        %v342 = vld [vmem:[%s341] ss:$8 sm:$0xf]
        %s343 = scalar_lea.vmem %s294, 5 [#allocation2]
        %v344 = vld [vmem:[%s343] ss:$8 sm:$0xf]
        %s345 = scalar_lea.vmem %s294, 6 [#allocation2]
        %v346 = vld [vmem:[%s345] ss:$8 sm:$0xf]
        %s347 = scalar_lea.vmem %s294, 7 [#allocation2]
        %v348 = vld [vmem:[%s347] ss:$8 sm:$0xf]
        %350 = vset.pattern.permute.xlu0 0
        %351 = vperm.xlu0 %350, %v337
        %v352 = vpop.permute.xlu0 %351
        %v355 = vlaneseq
        %v356 = vshrl.u32 %v355, 7
        %v357 = vsub.s32 0, %v356
        %v358 = vrot.slane %v342, %v357
        %v359 = vlaneseq
        %v360 = vshrl.u32 %v359, 7
        %v361 = vsub.s32 1, %v360
        %v362 = vrot.slane %v342, %v361
        %v363 = vlaneseq
        %v364 = vshrl.u32 %v363, 7
        %v365 = vsub.s32 2, %v364
        %v366 = vrot.slane %v342, %v365
        %v367 = vlaneseq
        %v368 = vshrl.u32 %v367, 7
        %v369 = vsub.s32 3, %v368
        %v370 = vrot.slane %v342, %v369
        %v375 = vmul.f32 %v352, %v358
        %v376 = vmul.f32 %v352, %v362
        %v377 = vmul.f32 %v352, %v366
        %v378 = vmul.f32 %v352, %v370
        %379 = vset.pattern.permute.xlu0 1
        %380 = vperm.xlu0 %379, %v337
        %v381 = vpop.permute.xlu0 %380
        %v384 = vlaneseq
        %v385 = vshrl.u32 %v384, 7
        %v386 = vsub.s32 0, %v385
        %v387 = vrot.slane %v344, %v386
        %v388 = vlaneseq
        %v389 = vshrl.u32 %v388, 7
        %v390 = vsub.s32 1, %v389
        %v391 = vrot.slane %v344, %v390
        %v392 = vlaneseq
        %v393 = vshrl.u32 %v392, 7
        %v394 = vsub.s32 2, %v393
        %v395 = vrot.slane %v344, %v394
        %v396 = vlaneseq
        %v397 = vshrl.u32 %v396, 7
        %v398 = vsub.s32 3, %v397
        %v399 = vrot.slane %v344, %v398
        %v404 = vmul.f32 %v381, %v387
        %v405 = vmul.f32 %v381, %v391
        %v406 = vmul.f32 %v381, %v395
        %v407 = vmul.f32 %v381, %v399
        %v408 = vadd.f32 %v375, %v404
        %v409 = vadd.f32 %v376, %v405
        %v410 = vadd.f32 %v377, %v406
        %v411 = vadd.f32 %v378, %v407
        %412 = vset.pattern.permute.xlu0 2
        %413 = vperm.xlu0 %412, %v337
        %v414 = vpop.permute.xlu0 %413
        %v417 = vlaneseq
        %v418 = vshrl.u32 %v417, 7
        %v419 = vsub.s32 0, %v418
        %v420 = vrot.slane %v346, %v419
        %v421 = vlaneseq
        %v422 = vshrl.u32 %v421, 7
        %v423 = vsub.s32 1, %v422
        %v424 = vrot.slane %v346, %v423
        %v425 = vlaneseq
        %v426 = vshrl.u32 %v425, 7
        %v427 = vsub.s32 2, %v426
        %v428 = vrot.slane %v346, %v427
        %v429 = vlaneseq
        %v430 = vshrl.u32 %v429, 7
        %v431 = vsub.s32 3, %v430
        %v432 = vrot.slane %v346, %v431
        %v437 = vmul.f32 %v414, %v420
        %v438 = vmul.f32 %v414, %v424
        %v439 = vmul.f32 %v414, %v428
        %v440 = vmul.f32 %v414, %v432
        %v441 = vadd.f32 %v408, %v437
        %v442 = vadd.f32 %v409, %v438
        %v443 = vadd.f32 %v410, %v439
        %v444 = vadd.f32 %v411, %v440
        %445 = vset.pattern.permute.xlu0 3
        %446 = vperm.xlu0 %445, %v337
        %v447 = vpop.permute.xlu0 %446
        %v450 = vlaneseq
        %v451 = vshrl.u32 %v450, 7
        %v452 = vsub.s32 0, %v451
        %v453 = vrot.slane %v348, %v452
        %v454 = vlaneseq
        %v455 = vshrl.u32 %v454, 7
        %v456 = vsub.s32 1, %v455
        %v457 = vrot.slane %v348, %v456
        %v458 = vlaneseq
        %v459 = vshrl.u32 %v458, 7
        %v460 = vsub.s32 2, %v459
        %v461 = vrot.slane %v348, %v460
        %v462 = vlaneseq
        %v463 = vshrl.u32 %v462, 7
        %v464 = vsub.s32 3, %v463
        %v465 = vrot.slane %v348, %v464
        %v470 = vmul.f32 %v447, %v453
        %v471 = vmul.f32 %v447, %v457
        %v472 = vmul.f32 %v447, %v461
        %v473 = vmul.f32 %v447, %v465
        %v474 = vadd.f32 %v441, %v470
        %v475 = vadd.f32 %v442, %v471
        %v476 = vadd.f32 %v443, %v472
        %v477 = vadd.f32 %v444, %v473
        %vm478 = vcmask 1043456
        %v479 = vsel %vm478, %v474, 0.0
        %v480 = vsel %vm478, %v475, 0.0
        %v481 = vadd.f32 %v479, %v480
        %v482 = vsel %vm478, %v476, 0.0
        %v483 = vadd.f32 %v481, %v482
        %v484 = vsel %vm478, %v477, 0.0
        %v485 = vadd.f32 %v483, %v484
        %486 = vadd.xlane.f32.xlu0 %v485
        %v487 = vpop.xlane.xlu0 %486
        %v488 = vmul.f32 %v474, %v474
        %v489 = vmul.f32 %v475, %v475
        %v490 = vmul.f32 %v476, %v476
        %v491 = vmul.f32 %v477, %v477
        %v492 = vsel %vm478, %v488, 0.0
        %v493 = vsel %vm478, %v489, 0.0
        %v494 = vadd.f32 %v492, %v493
        %v495 = vsel %vm478, %v490, 0.0
        %v496 = vadd.f32 %v494, %v495
        %v497 = vsel %vm478, %v491, 0.0
        %v498 = vadd.f32 %v496, %v497
        %499 = vadd.xlane.f32.xlu0 %v498
        %v500 = vpop.xlane.xlu0 %499
        %v501 = vmul.f32 %v487, 0.001953125
        %v502 = vmul.f32 %v500, 0.001953125
        %v503 = vmul.f32 %v501, %v501
        %v504 = vsub.f32 %v502, %v503
        %v505 = vsub.f32 %v474, %v501
        %v506 = vsub.f32 %v475, %v501
        %v507 = vsub.f32 %v476, %v501
        %v508 = vsub.f32 %v477, %v501
        %v509 = vadd.f32 %v504, 1e-05
        %v510 = vrsqrt.pop %v509
        %v511 = vmul.f32 %v505, %v510
        %v512 = vmul.f32 %v506, %v510
        %v513 = vmul.f32 %v507, %v510
        %v514 = vmul.f32 %v508, %v510
        %v515 = vmul.f32 %v511, 0.01
        %v516 = vmul.f32 %v512, 0.01
        %v517 = vmul.f32 %v513, 0.01
        %v518 = vmul.f32 %v514, 0.01
        %v519 = vmax.f32 %v511, %v515
        %v520 = vmax.f32 %v512, %v516
        %v521 = vmax.f32 %v513, %v517
        %v522 = vmax.f32 %v514, %v518
        %s523 = scalar_lea.vmem [#allocation7], 208
        %v524 = vld [vmem:[%s523] sm:$0xff]
        %v525 = vld [vmem:[%s523 + $0x8] sm:$0xff]
        %v530 = vcombine.low %v519, %v520
        %v531 = vcombine.low %v521, %v522
        %v534 = vmul.f32 %v524, %v530
        %v535 = vmul.f32 %v525, %v531
        %536 = vrot.lane.b32.xlu0 %v519, 73
        %v537 = vpop.permute.xlu0 %536
        %538 = vrot.lane.b32.xlu0 %v520, 73
        %v539 = vpop.permute.xlu0 %538
        %540 = vrot.lane.b32.xlu0 %v521, 73
        %v541 = vpop.permute.xlu0 %540
        %542 = vrot.lane.b32.xlu0 %v522, 73
        %v543 = vpop.permute.xlu0 %542
        %v544 = vlaneseq
        %v545 = vand.u32 %v544, 127
        %vm546 = vcmp.lt.s32.totalorder %v545, 73
        %v547 = vsel %vm546, %v541, %v543
        %v548 = vsel %vm546, %v539, %v541
        %v549 = vsel %vm546, %v537, %v539
        %v550 = vsel %vm546, %v543, %v537
        %v551 = vld [vmem:[#allocation7] sm:$0xff]
        %v552 = vld [vmem:[#allocation7 + $0x8] sm:$0xff]
        %v557 = vcombine.low %v550, %v549
        %v558 = vcombine.low %v548, %v547
        %v561 = vmul.f32 %v551, %v557
        %v562 = vmul.f32 %v552, %v558
        %v563 = vadd.f32 %v534, %v561
        %v564 = vadd.f32 %v535, %v562
        %565 = vrot.lane.b32.xlu0 %v519, 72
        %v566 = vpop.permute.xlu0 %565
        %567 = vrot.lane.b32.xlu0 %v520, 72
        %v568 = vpop.permute.xlu0 %567
        %569 = vrot.lane.b32.xlu0 %v521, 72
        %v570 = vpop.permute.xlu0 %569
        %571 = vrot.lane.b32.xlu0 %v522, 72
        %v572 = vpop.permute.xlu0 %571
        %vm573 = vcmp.lt.s32.totalorder %v545, 72
        %v574 = vsel %vm573, %v570, %v572
        %v575 = vsel %vm573, %v568, %v570
        %v576 = vsel %vm573, %v566, %v568
        %v577 = vsel %vm573, %v572, %v566
        %s578 = scalar_lea.vmem [#allocation7], 16
        %v579 = vld [vmem:[%s578] sm:$0xff]
        %v580 = vld [vmem:[%s578 + $0x8] sm:$0xff]
        %v585 = vcombine.low %v577, %v576
        %v586 = vcombine.low %v575, %v574
        %v589 = vmul.f32 %v579, %v585
        %v590 = vmul.f32 %v580, %v586
        %v591 = vadd.f32 %v563, %v589
        %v592 = vadd.f32 %v564, %v590
        %593 = vrot.lane.b32.xlu0 %v519, 71
        %v594 = vpop.permute.xlu0 %593
        %595 = vrot.lane.b32.xlu0 %v520, 71
        %v596 = vpop.permute.xlu0 %595
        %597 = vrot.lane.b32.xlu0 %v521, 71
        %v598 = vpop.permute.xlu0 %597
        %599 = vrot.lane.b32.xlu0 %v522, 71
        %v600 = vpop.permute.xlu0 %599
        %vm601 = vcmp.lt.s32.totalorder %v545, 71
        %v602 = vsel %vm601, %v598, %v600
        %v603 = vsel %vm601, %v596, %v598
        %v604 = vsel %vm601, %v594, %v596
        %v605 = vsel %vm601, %v600, %v594
        %s606 = scalar_lea.vmem [#allocation7], 32
        %v607 = vld [vmem:[%s606] sm:$0xff]
        %v608 = vld [vmem:[%s606 + $0x8] sm:$0xff]
        %v613 = vcombine.low %v605, %v604
        %v614 = vcombine.low %v603, %v602
        %v617 = vmul.f32 %v607, %v613
        %v618 = vmul.f32 %v608, %v614
        %v619 = vadd.f32 %v591, %v617
        %v620 = vadd.f32 %v592, %v618
        %621 = vrot.lane.b32.xlu0 %v519, 65
        %v622 = vpop.permute.xlu0 %621
        %623 = vrot.lane.b32.xlu0 %v520, 65
        %v624 = vpop.permute.xlu0 %623
        %625 = vrot.lane.b32.xlu0 %v521, 65
        %v626 = vpop.permute.xlu0 %625
        %627 = vrot.lane.b32.xlu0 %v522, 65
        %v628 = vpop.permute.xlu0 %627
        %vm629 = vcmp.lt.s32.totalorder %v545, 65
        %v630 = vsel %vm629, %v626, %v628
        %v631 = vsel %vm629, %v624, %v626
        %v632 = vsel %vm629, %v622, %v624
        %v633 = vsel %vm629, %v628, %v622
        %s634 = scalar_lea.vmem [#allocation7], 48
        %v635 = vld [vmem:[%s634] sm:$0xff]
        %v636 = vld [vmem:[%s634 + $0x8] sm:$0xff]
        %v641 = vcombine.low %v633, %v632
        %v642 = vcombine.low %v631, %v630
        %v645 = vmul.f32 %v635, %v641
        %v646 = vmul.f32 %v636, %v642
        %v647 = vadd.f32 %v619, %v645
        %v648 = vadd.f32 %v620, %v646
        %649 = vrot.lane.b32.xlu0 %v519, 64
        %v650 = vpop.permute.xlu0 %649
        %651 = vrot.lane.b32.xlu0 %v520, 64
        %v652 = vpop.permute.xlu0 %651
        %653 = vrot.lane.b32.xlu0 %v521, 64
        %v654 = vpop.permute.xlu0 %653
        %655 = vrot.lane.b32.xlu0 %v522, 64
        %v656 = vpop.permute.xlu0 %655
        %vm657 = vcmp.lt.s32.totalorder %v545, 64
        %v658 = vsel %vm657, %v654, %v656
        %v659 = vsel %vm657, %v652, %v654
        %v660 = vsel %vm657, %v650, %v652
        %v661 = vsel %vm657, %v656, %v650
        %s662 = scalar_lea.vmem [#allocation7], 64
        %v663 = vld [vmem:[%s662] sm:$0xff]
        %v664 = vld [vmem:[%s662 + $0x8] sm:$0xff]
        %v669 = vcombine.low %v661, %v660
        %v670 = vcombine.low %v659, %v658
        %v673 = vmul.f32 %v663, %v669
        %v674 = vmul.f32 %v664, %v670
        %v675 = vadd.f32 %v647, %v673
        %v676 = vadd.f32 %v648, %v674
        %677 = vrot.lane.b32.xlu0 %v519, 63
        %v678 = vpop.permute.xlu0 %677
        %679 = vrot.lane.b32.xlu0 %v520, 63
        %v680 = vpop.permute.xlu0 %679
        %681 = vrot.lane.b32.xlu0 %v521, 63
        %v682 = vpop.permute.xlu0 %681
        %683 = vrot.lane.b32.xlu0 %v522, 63
        %v684 = vpop.permute.xlu0 %683
        %vm685 = vcmp.lt.s32.totalorder %v545, 63
        %v686 = vsel %vm685, %v682, %v684
        %v687 = vsel %vm685, %v680, %v682
        %v688 = vsel %vm685, %v678, %v680
        %v689 = vsel %vm685, %v684, %v678
        %s690 = scalar_lea.vmem [#allocation7], 80
        %v691 = vld [vmem:[%s690] sm:$0xff]
        %v692 = vld [vmem:[%s690 + $0x8] sm:$0xff]
        %v697 = vcombine.low %v689, %v688
        %v698 = vcombine.low %v687, %v686
        %v701 = vmul.f32 %v691, %v697
        %v702 = vmul.f32 %v692, %v698
        %v703 = vadd.f32 %v675, %v701
        %v704 = vadd.f32 %v676, %v702
        %705 = vrot.lane.b32.xlu0 %v519, 57
        %v706 = vpop.permute.xlu0 %705
        %707 = vrot.lane.b32.xlu0 %v520, 57
        %v708 = vpop.permute.xlu0 %707
        %709 = vrot.lane.b32.xlu0 %v521, 57
        %v710 = vpop.permute.xlu0 %709
        %711 = vrot.lane.b32.xlu0 %v522, 57
        %v712 = vpop.permute.xlu0 %711
        %vm713 = vcmp.lt.s32.totalorder %v545, 57
        %v714 = vsel %vm713, %v710, %v712
        %v715 = vsel %vm713, %v708, %v710
        %v716 = vsel %vm713, %v706, %v708
        %v717 = vsel %vm713, %v712, %v706
        %s718 = scalar_lea.vmem [#allocation7], 96
        %v719 = vld [vmem:[%s718] sm:$0xff]
        %v720 = vld [vmem:[%s718 + $0x8] sm:$0xff]
        %v725 = vcombine.low %v717, %v716
        %v726 = vcombine.low %v715, %v714
        %v729 = vmul.f32 %v719, %v725
        %v730 = vmul.f32 %v720, %v726
        %v731 = vadd.f32 %v703, %v729
        %v732 = vadd.f32 %v704, %v730
        %733 = vrot.lane.b32.xlu0 %v519, 56
        %v734 = vpop.permute.xlu0 %733
        %735 = vrot.lane.b32.xlu0 %v520, 56
        %v736 = vpop.permute.xlu0 %735
        %737 = vrot.lane.b32.xlu0 %v521, 56
        %v738 = vpop.permute.xlu0 %737
        %739 = vrot.lane.b32.xlu0 %v522, 56
        %v740 = vpop.permute.xlu0 %739
        %vm741 = vcmp.lt.s32.totalorder %v545, 56
        %v742 = vsel %vm741, %v738, %v740
        %v743 = vsel %vm741, %v736, %v738
        %v744 = vsel %vm741, %v734, %v736
        %v745 = vsel %vm741, %v740, %v734
        %s746 = scalar_lea.vmem [#allocation7], 112
        %v747 = vld [vmem:[%s746] sm:$0xff]
        %v748 = vld [vmem:[%s746 + $0x8] sm:$0xff]
        %v753 = vcombine.low %v745, %v744
        %v754 = vcombine.low %v743, %v742
        %v757 = vmul.f32 %v747, %v753
        %v758 = vmul.f32 %v748, %v754
        %v759 = vadd.f32 %v731, %v757
        %v760 = vadd.f32 %v732, %v758
        %761 = vrot.lane.b32.xlu0 %v519, 55
        %v762 = vpop.permute.xlu0 %761
        %763 = vrot.lane.b32.xlu0 %v520, 55
        %v764 = vpop.permute.xlu0 %763
        %765 = vrot.lane.b32.xlu0 %v521, 55
        %v766 = vpop.permute.xlu0 %765
        %767 = vrot.lane.b32.xlu0 %v522, 55
        %v768 = vpop.permute.xlu0 %767
        %vm769 = vcmp.lt.s32.totalorder %v545, 55
        %v770 = vsel %vm769, %v766, %v768
        %v771 = vsel %vm769, %v764, %v766
        %v772 = vsel %vm769, %v762, %v764
        %v773 = vsel %vm769, %v768, %v762
        %s774 = scalar_lea.vmem [#allocation7], 128
        %v775 = vld [vmem:[%s774] sm:$0xff]
        %v776 = vld [vmem:[%s774 + $0x8] sm:$0xff]
        %v781 = vcombine.low %v773, %v772
        %v782 = vcombine.low %v771, %v770
        %v785 = vmul.f32 %v775, %v781
        %v786 = vmul.f32 %v776, %v782
        %v787 = vadd.f32 %v759, %v785
        %v788 = vadd.f32 %v760, %v786
        %789 = vrot.lane.b32.xlu0 %v519, 9
        %v790 = vpop.permute.xlu0 %789
        %791 = vrot.lane.b32.xlu0 %v520, 9
        %v792 = vpop.permute.xlu0 %791
        %793 = vrot.lane.b32.xlu0 %v521, 9
        %v794 = vpop.permute.xlu0 %793
        %795 = vrot.lane.b32.xlu0 %v522, 9
        %v796 = vpop.permute.xlu0 %795
        %vm797 = vcmp.lt.s32.totalorder %v545, 9
        %v798 = vsel %vm797, %v794, %v796
        %v799 = vsel %vm797, %v792, %v794
        %v800 = vsel %vm797, %v790, %v792
        %v801 = vsel %vm797, %v796, %v790
        %s802 = scalar_lea.vmem [#allocation7], 144
        %v803 = vld [vmem:[%s802] sm:$0xff]
        %v804 = vld [vmem:[%s802 + $0x8] sm:$0xff]
        %v809 = vcombine.low %v801, %v800
        %v810 = vcombine.low %v799, %v798
        %v813 = vmul.f32 %v803, %v809
        %v814 = vmul.f32 %v804, %v810
        %v815 = vadd.f32 %v787, %v813
        %v816 = vadd.f32 %v788, %v814
        %817 = vrot.lane.b32.xlu0 %v519, 8
        %v818 = vpop.permute.xlu0 %817
        %819 = vrot.lane.b32.xlu0 %v520, 8
        %v820 = vpop.permute.xlu0 %819
        %821 = vrot.lane.b32.xlu0 %v521, 8
        %v822 = vpop.permute.xlu0 %821
        %823 = vrot.lane.b32.xlu0 %v522, 8
        %v824 = vpop.permute.xlu0 %823
        %vm825 = vcmp.lt.s32.totalorder %v545, 8
        %v826 = vsel %vm825, %v822, %v824
        %v827 = vsel %vm825, %v820, %v822
        %v828 = vsel %vm825, %v818, %v820
        %v829 = vsel %vm825, %v824, %v818
        %s830 = scalar_lea.vmem [#allocation7], 160
        %v831 = vld [vmem:[%s830] sm:$0xff]
        %v832 = vld [vmem:[%s830 + $0x8] sm:$0xff]
        %v837 = vcombine.low %v829, %v828
        %v838 = vcombine.low %v827, %v826
        %v841 = vmul.f32 %v831, %v837
        %v842 = vmul.f32 %v832, %v838
        %v843 = vadd.f32 %v815, %v841
        %v844 = vadd.f32 %v816, %v842
        %845 = vrot.lane.b32.xlu0 %v519, 7
        %v846 = vpop.permute.xlu0 %845
        %847 = vrot.lane.b32.xlu0 %v520, 7
        %v848 = vpop.permute.xlu0 %847
        %849 = vrot.lane.b32.xlu0 %v521, 7
        %v850 = vpop.permute.xlu0 %849
        %851 = vrot.lane.b32.xlu0 %v522, 7
        %v852 = vpop.permute.xlu0 %851
        %vm853 = vcmp.lt.s32.totalorder %v545, 7
        %v854 = vsel %vm853, %v850, %v852
        %v855 = vsel %vm853, %v848, %v850
        %v856 = vsel %vm853, %v846, %v848
        %v857 = vsel %vm853, %v852, %v846
        %s858 = scalar_lea.vmem [#allocation7], 176
        %v859 = vld [vmem:[%s858] sm:$0xff]
        %v860 = vld [vmem:[%s858 + $0x8] sm:$0xff]
        %v865 = vcombine.low %v857, %v856
        %v866 = vcombine.low %v855, %v854
        %v869 = vmul.f32 %v859, %v865
        %v870 = vmul.f32 %v860, %v866
        %v871 = vadd.f32 %v843, %v869
        %v872 = vadd.f32 %v844, %v870
        %873 = vrot.lane.b32.xlu0 %v519, 1
        %v874 = vpop.permute.xlu0 %873
        %875 = vrot.lane.b32.xlu0 %v520, 1
        %v876 = vpop.permute.xlu0 %875
        %877 = vrot.lane.b32.xlu0 %v521, 1
        %v878 = vpop.permute.xlu0 %877
        %879 = vrot.lane.b32.xlu0 %v522, 1
        %v880 = vpop.permute.xlu0 %879
        %vm881 = vcmp.lt.s32.totalorder %v545, 1
        %v882 = vsel %vm881, %v878, %v880
        %v883 = vsel %vm881, %v876, %v878
        %v884 = vsel %vm881, %v874, %v876
        %v885 = vsel %vm881, %v880, %v874
        %s886 = scalar_lea.vmem [#allocation7], 192
        %v887 = vld [vmem:[%s886] sm:$0xff]
        %v888 = vld [vmem:[%s886 + $0x8] sm:$0xff]
        %v893 = vcombine.low %v885, %v884
        %v894 = vcombine.low %v883, %v882
        %v897 = vmul.f32 %v887, %v893
        %v898 = vmul.f32 %v888, %v894
        %v899 = vadd.f32 %v871, %v897
        %v900 = vadd.f32 %v872, %v898
        %901 = vrot.lane.b32.xlu0 %v519, 127
        %v902 = vpop.permute.xlu0 %901
        %903 = vrot.lane.b32.xlu0 %v520, 127
        %v904 = vpop.permute.xlu0 %903
        %905 = vrot.lane.b32.xlu0 %v521, 127
        %v906 = vpop.permute.xlu0 %905
        %907 = vrot.lane.b32.xlu0 %v522, 127
        %v908 = vpop.permute.xlu0 %907
        %vm909 = vcmp.lt.s32.totalorder %v545, 127
        %v910 = vsel %vm909, %v906, %v908
        %v911 = vsel %vm909, %v904, %v906
        %v912 = vsel %vm909, %v902, %v904
        %v913 = vsel %vm909, %v908, %v902
        %s914 = scalar_lea.vmem [#allocation7], 224
        %v915 = vld [vmem:[%s914] sm:$0xff]
        %v916 = vld [vmem:[%s914 + $0x8] sm:$0xff]
        %v921 = vcombine.low %v912, %v911
        %v922 = vcombine.low %v910, %v913
        %v925 = vmul.f32 %v915, %v921
        %v926 = vmul.f32 %v916, %v922
        %v927 = vadd.f32 %v899, %v925
        %v928 = vadd.f32 %v900, %v926
        %929 = vrot.lane.b32.xlu0 %v519, 121
        %v930 = vpop.permute.xlu0 %929
        %931 = vrot.lane.b32.xlu0 %v520, 121
        %v932 = vpop.permute.xlu0 %931
        %933 = vrot.lane.b32.xlu0 %v521, 121
        %v934 = vpop.permute.xlu0 %933
        %935 = vrot.lane.b32.xlu0 %v522, 121
        %v936 = vpop.permute.xlu0 %935
        %vm937 = vcmp.lt.s32.totalorder %v545, 121
        %v938 = vsel %vm937, %v934, %v936
        %v939 = vsel %vm937, %v932, %v934
        %v940 = vsel %vm937, %v930, %v932
        %v941 = vsel %vm937, %v936, %v930
        %s942 = scalar_lea.vmem [#allocation7], 240
        %v943 = vld [vmem:[%s942] sm:$0xff]
        %v944 = vld [vmem:[%s942 + $0x8] sm:$0xff]
        %v949 = vcombine.low %v940, %v939
        %v950 = vcombine.low %v938, %v941
        %v953 = vmul.f32 %v943, %v949
        %v954 = vmul.f32 %v944, %v950
        %v955 = vadd.f32 %v927, %v953
        %v956 = vadd.f32 %v928, %v954
        %957 = vrot.lane.b32.xlu0 %v519, 120
        %v958 = vpop.permute.xlu0 %957
        %959 = vrot.lane.b32.xlu0 %v520, 120
        %v960 = vpop.permute.xlu0 %959
        %961 = vrot.lane.b32.xlu0 %v521, 120
        %v962 = vpop.permute.xlu0 %961
        %963 = vrot.lane.b32.xlu0 %v522, 120
        %v964 = vpop.permute.xlu0 %963
        %vm965 = vcmp.lt.s32.totalorder %v545, 120
        %v966 = vsel %vm965, %v962, %v964
        %v967 = vsel %vm965, %v960, %v962
        %v968 = vsel %vm965, %v958, %v960
        %v969 = vsel %vm965, %v964, %v958
        %s970 = scalar_lea.vmem [#allocation7], 256
        %v971 = vld [vmem:[%s970] sm:$0xff]
        %v972 = vld [vmem:[%s970 + $0x8] sm:$0xff]
        %v977 = vcombine.low %v968, %v967
        %v978 = vcombine.low %v966, %v969
        %v981 = vmul.f32 %v971, %v977
        %v982 = vmul.f32 %v972, %v978
        %v983 = vadd.f32 %v955, %v981
        %v984 = vadd.f32 %v956, %v982
        %985 = vrot.lane.b32.xlu0 %v519, 119
        %v986 = vpop.permute.xlu0 %985
        %987 = vrot.lane.b32.xlu0 %v520, 119
        %v988 = vpop.permute.xlu0 %987
        %989 = vrot.lane.b32.xlu0 %v521, 119
        %v990 = vpop.permute.xlu0 %989
        %991 = vrot.lane.b32.xlu0 %v522, 119
        %v992 = vpop.permute.xlu0 %991
        %vm993 = vcmp.lt.s32.totalorder %v545, 119
        %v994 = vsel %vm993, %v990, %v992
        %v995 = vsel %vm993, %v988, %v990
        %v996 = vsel %vm993, %v986, %v988
        %v997 = vsel %vm993, %v992, %v986
        %s998 = scalar_lea.vmem [#allocation7], 272
        %v999 = vld [vmem:[%s998] sm:$0xff]
        %v1000 = vld [vmem:[%s998 + $0x8] sm:$0xff]
        %v1005 = vcombine.low %v996, %v995
        %v1006 = vcombine.low %v994, %v997
        %v1009 = vmul.f32 %v999, %v1005
        %v1010 = vmul.f32 %v1000, %v1006
        %v1011 = vadd.f32 %v983, %v1009
        %v1012 = vadd.f32 %v984, %v1010
        %s1013 = scalar_lea.vmem [#allocation7], 288
        %v1014 = vld [vmem:[%s1013] sm:$0xff]
        %v1015 = vld [vmem:[%s1013 + $0x8] sm:$0xff]
        %v1016 = vcombine.low %v549, %v548
        %v1017 = vcombine.low %v547, %v550
        %v1020 = vmul.f32 %v1014, %v1016
        %v1021 = vmul.f32 %v1015, %v1017
        %v1022 = vadd.f32 %v1011, %v1020
        %v1023 = vadd.f32 %v1012, %v1021
        %s1024 = scalar_lea.vmem [#allocation7], 304
        %v1025 = vld [vmem:[%s1024] sm:$0xff]
        %v1026 = vld [vmem:[%s1024 + $0x8] sm:$0xff]
        %v1027 = vcombine.low %v576, %v575
        %v1028 = vcombine.low %v574, %v577
        %v1031 = vmul.f32 %v1025, %v1027
        %v1032 = vmul.f32 %v1026, %v1028
        %v1033 = vadd.f32 %v1022, %v1031
        %v1034 = vadd.f32 %v1023, %v1032
        %s1035 = scalar_lea.vmem [#allocation7], 320
        %v1036 = vld [vmem:[%s1035] sm:$0xff]
        %v1037 = vld [vmem:[%s1035 + $0x8] sm:$0xff]
        %v1038 = vcombine.low %v604, %v603
        %v1039 = vcombine.low %v602, %v605
        %v1042 = vmul.f32 %v1036, %v1038
        %v1043 = vmul.f32 %v1037, %v1039
        %v1044 = vadd.f32 %v1033, %v1042
        %v1045 = vadd.f32 %v1034, %v1043
        %s1046 = scalar_lea.vmem [#allocation7], 336
        %v1047 = vld [vmem:[%s1046] sm:$0xff]
        %v1048 = vld [vmem:[%s1046 + $0x8] sm:$0xff]
        %v1049 = vcombine.low %v632, %v631
        %v1050 = vcombine.low %v630, %v633
        %v1053 = vmul.f32 %v1047, %v1049
        %v1054 = vmul.f32 %v1048, %v1050
        %v1055 = vadd.f32 %v1044, %v1053
        %v1056 = vadd.f32 %v1045, %v1054
        %s1057 = scalar_lea.vmem [#allocation7], 352
        %v1058 = vld [vmem:[%s1057] sm:$0xff]
        %v1059 = vld [vmem:[%s1057 + $0x8] sm:$0xff]
        %v1060 = vcombine.low %v660, %v659
        %v1061 = vcombine.low %v658, %v661
        %v1064 = vmul.f32 %v1058, %v1060
        %v1065 = vmul.f32 %v1059, %v1061
        %v1066 = vadd.f32 %v1055, %v1064
        %v1067 = vadd.f32 %v1056, %v1065
        %s1068 = scalar_lea.vmem [#allocation7], 368
        %v1069 = vld [vmem:[%s1068] sm:$0xff]
        %v1070 = vld [vmem:[%s1068 + $0x8] sm:$0xff]
        %v1071 = vcombine.low %v688, %v687
        %v1072 = vcombine.low %v686, %v689
        %v1075 = vmul.f32 %v1069, %v1071
        %v1076 = vmul.f32 %v1070, %v1072
        %v1077 = vadd.f32 %v1066, %v1075
        %v1078 = vadd.f32 %v1067, %v1076
        %s1079 = scalar_lea.vmem [#allocation7], 384
        %v1080 = vld [vmem:[%s1079] sm:$0xff]
        %v1081 = vld [vmem:[%s1079 + $0x8] sm:$0xff]
        %v1082 = vcombine.low %v716, %v715
        %v1083 = vcombine.low %v714, %v717
        %v1086 = vmul.f32 %v1080, %v1082
        %v1087 = vmul.f32 %v1081, %v1083
        %v1088 = vadd.f32 %v1077, %v1086
        %v1089 = vadd.f32 %v1078, %v1087
        %s1090 = scalar_lea.vmem [#allocation7], 400
        %v1091 = vld [vmem:[%s1090] sm:$0xff]
        %v1092 = vld [vmem:[%s1090 + $0x8] sm:$0xff]
        %v1093 = vcombine.low %v744, %v743
        %v1094 = vcombine.low %v742, %v745
        %v1097 = vmul.f32 %v1091, %v1093
        %v1098 = vmul.f32 %v1092, %v1094
        %v1099 = vadd.f32 %v1088, %v1097
        %v1100 = vadd.f32 %v1089, %v1098
        %s1101 = scalar_lea.vmem [#allocation7], 416
        %v1102 = vld [vmem:[%s1101] sm:$0xff]
        %v1103 = vld [vmem:[%s1101 + $0x8] sm:$0xff]
        %v1104 = vcombine.low %v772, %v771
        %v1105 = vcombine.low %v770, %v773
        %v1108 = vmul.f32 %v1102, %v1104
        %v1109 = vmul.f32 %v1103, %v1105
        %v1110 = vadd.f32 %v1099, %v1108
        %v1111 = vadd.f32 %v1100, %v1109
        %v1114 = vcombine.high %v1110, %v1110
        %v1115 = vcombine.high %v1111, %v1111
        %v1118 = vsel %vm478, %v1110, 0.0
        %v1119 = vsel %vm478, %v1114, 0.0
        %v1120 = vadd.f32 %v1118, %v1119
        %v1121 = vsel %vm478, %v1111, 0.0
        %v1122 = vadd.f32 %v1120, %v1121
        %v1123 = vsel %vm478, %v1115, 0.0
        %v1124 = vadd.f32 %v1122, %v1123
        %1125 = vadd.xlane.f32.xlu0 %v1124
        %v1126 = vpop.xlane.xlu0 %1125
        %v1127 = vmul.f32 %v1110, %v1110
        %v1128 = vmul.f32 %v1111, %v1111
        %v1131 = vcombine.high %v1127, %v1127
        %v1132 = vcombine.high %v1128, %v1128
        %v1135 = vsel %vm478, %v1127, 0.0
        %v1136 = vsel %vm478, %v1131, 0.0
        %v1137 = vadd.f32 %v1135, %v1136
        %v1138 = vsel %vm478, %v1128, 0.0
        %v1139 = vadd.f32 %v1137, %v1138
        %v1140 = vsel %vm478, %v1132, 0.0
        %v1141 = vadd.f32 %v1139, %v1140
        %1142 = vadd.xlane.f32.xlu0 %v1141
        %v1143 = vpop.xlane.xlu0 %1142
        %v1144 = vmul.f32 %v1126, 0.001953125
        %v1145 = vmul.f32 %v1143, 0.001953125
        %v1146 = vmul.f32 %v1144, %v1144
        %v1147 = vsub.f32 %v1145, %v1146
        %v1150 = vunpack.c.l.s4 839922192
        %v1151 = vunpack.c.0.s8 %v1150
        %v1152 = vlaneseq
        %v1153 = vshrl.u32 %v1152, 7
        %v1154 = vsub.s32 %v1151, %v1153
        %v1155 = vrot.slane %v1144, %v1154
        %v1157 = vsub.f32 %v1110, %v1155
        %v1158 = vsub.f32 %v1111, %v1155
        %v1159 = vadd.f32 %v1147, 1e-05
        %v1160 = vrsqrt.pop %v1159
        %v1163 = vunpack.c.l.s4 839922192
        %v1164 = vunpack.c.0.s8 %v1163
        %v1165 = vlaneseq
        %v1166 = vshrl.u32 %v1165, 7
        %v1167 = vsub.s32 %v1164, %v1166
        %v1168 = vrot.slane %v1160, %v1167
        %v1170 = vmul.f32 %v1157, %v1168
        %v1171 = vmul.f32 %v1158, %v1168
        %1173 = vset.pattern.permute.xlu0 0
        %1174 = vperm.xlu0 %1173, %v338
        %v1175 = vpop.permute.xlu0 %1174
        %v1179 = vlaneseq
        %v1180 = vshrl.u32 %v1179, 7
        %v1181 = vsub.s32 0, %v1180
        %v1182 = vrot.slane %v1170, %v1181
        %v1183 = vlaneseq
        %v1184 = vshrl.u32 %v1183, 7
        %v1185 = vsub.s32 4, %v1184
        %v1186 = vrot.slane %v1170, %v1185
        %v1187 = vlaneseq
        %v1188 = vshrl.u32 %v1187, 7
        %v1189 = vsub.s32 0, %v1188
        %v1190 = vrot.slane %v1171, %v1189
        %v1191 = vlaneseq
        %v1192 = vshrl.u32 %v1191, 7
        %v1193 = vsub.s32 4, %v1192
        %v1194 = vrot.slane %v1171, %v1193
        %v1199 = vlaneseq
        %v1200 = vshrl.u32 %v1199, 7
        %v1201 = vsub.s32 0, %v1200
        %v1202 = vrot.slane %v1182, %v1201
        %v1203 = vlaneseq
        %v1204 = vshrl.u32 %v1203, 7
        %v1205 = vsub.s32 0, %v1204
        %v1206 = vrot.slane %v1186, %v1205
        %v1207 = vlaneseq
        %v1208 = vshrl.u32 %v1207, 7
        %v1209 = vsub.s32 0, %v1208
        %v1210 = vrot.slane %v1190, %v1209
        %v1211 = vlaneseq
        %v1212 = vshrl.u32 %v1211, 7
        %v1213 = vsub.s32 0, %v1212
        %v1214 = vrot.slane %v1194, %v1213
        %v1215 = vmul.f32 %v1175, %v1202
        %v1216 = vmul.f32 %v1175, %v1206
        %v1217 = vmul.f32 %v1175, %v1210
        %v1218 = vmul.f32 %v1175, %v1214
        %1219 = vset.pattern.permute.xlu0 1
        %1220 = vperm.xlu0 %1219, %v338
        %v1221 = vpop.permute.xlu0 %1220
        %v1223 = vlaneseq
        %v1224 = vshrl.u32 %v1223, 7
        %v1225 = vsub.s32 1, %v1224
        %v1226 = vrot.slane %v1170, %v1225
        %v1227 = vlaneseq
        %v1228 = vshrl.u32 %v1227, 7
        %v1229 = vsub.s32 5, %v1228
        %v1230 = vrot.slane %v1170, %v1229
        %v1231 = vlaneseq
        %v1232 = vshrl.u32 %v1231, 7
        %v1233 = vsub.s32 1, %v1232
        %v1234 = vrot.slane %v1171, %v1233
        %v1235 = vlaneseq
        %v1236 = vshrl.u32 %v1235, 7
        %v1237 = vsub.s32 5, %v1236
        %v1238 = vrot.slane %v1171, %v1237
        %v1243 = vlaneseq
        %v1244 = vshrl.u32 %v1243, 7
        %v1245 = vsub.s32 1, %v1244
        %v1246 = vrot.slane %v1226, %v1245
        %v1247 = vlaneseq
        %v1248 = vshrl.u32 %v1247, 7
        %v1249 = vsub.s32 1, %v1248
        %v1250 = vrot.slane %v1230, %v1249
        %v1251 = vlaneseq
        %v1252 = vshrl.u32 %v1251, 7
        %v1253 = vsub.s32 1, %v1252
        %v1254 = vrot.slane %v1234, %v1253
        %v1255 = vlaneseq
        %v1256 = vshrl.u32 %v1255, 7
        %v1257 = vsub.s32 1, %v1256
        %v1258 = vrot.slane %v1238, %v1257
        %v1259 = vmul.f32 %v1221, %v1246
        %v1260 = vmul.f32 %v1221, %v1250
        %v1261 = vmul.f32 %v1221, %v1254
        %v1262 = vmul.f32 %v1221, %v1258
        %v1263 = vadd.f32 %v1215, %v1259
        %v1264 = vadd.f32 %v1216, %v1260
        %v1265 = vadd.f32 %v1217, %v1261
        %v1266 = vadd.f32 %v1218, %v1262
        %1267 = vset.pattern.permute.xlu0 2
        %1268 = vperm.xlu0 %1267, %v338
        %v1269 = vpop.permute.xlu0 %1268
        %v1271 = vlaneseq
        %v1272 = vshrl.u32 %v1271, 7
        %v1273 = vsub.s32 2, %v1272
        %v1274 = vrot.slane %v1170, %v1273
        %v1275 = vlaneseq
        %v1276 = vshrl.u32 %v1275, 7
        %v1277 = vsub.s32 6, %v1276
        %v1278 = vrot.slane %v1170, %v1277
        %v1279 = vlaneseq
        %v1280 = vshrl.u32 %v1279, 7
        %v1281 = vsub.s32 2, %v1280
        %v1282 = vrot.slane %v1171, %v1281
        %v1283 = vlaneseq
        %v1284 = vshrl.u32 %v1283, 7
        %v1285 = vsub.s32 6, %v1284
        %v1286 = vrot.slane %v1171, %v1285
        %v1291 = vlaneseq
        %v1292 = vshrl.u32 %v1291, 7
        %v1293 = vsub.s32 2, %v1292
        %v1294 = vrot.slane %v1274, %v1293
        %v1295 = vlaneseq
        %v1296 = vshrl.u32 %v1295, 7
        %v1297 = vsub.s32 2, %v1296
        %v1298 = vrot.slane %v1278, %v1297
        %v1299 = vlaneseq
        %v1300 = vshrl.u32 %v1299, 7
        %v1301 = vsub.s32 2, %v1300
        %v1302 = vrot.slane %v1282, %v1301
        %v1303 = vlaneseq
        %v1304 = vshrl.u32 %v1303, 7
        %v1305 = vsub.s32 2, %v1304
        %v1306 = vrot.slane %v1286, %v1305
        %v1307 = vmul.f32 %v1269, %v1294
        %v1308 = vmul.f32 %v1269, %v1298
        %v1309 = vmul.f32 %v1269, %v1302
        %v1310 = vmul.f32 %v1269, %v1306
        %v1311 = vadd.f32 %v1263, %v1307
        %v1312 = vadd.f32 %v1264, %v1308
        %v1313 = vadd.f32 %v1265, %v1309
        %v1314 = vadd.f32 %v1266, %v1310
        %1315 = vset.pattern.permute.xlu0 3
        %1316 = vperm.xlu0 %1315, %v338
        %v1317 = vpop.permute.xlu0 %1316
        %v1319 = vlaneseq
        %v1320 = vshrl.u32 %v1319, 7
        %v1321 = vsub.s32 3, %v1320
        %v1322 = vrot.slane %v1170, %v1321
        %v1323 = vlaneseq
        %v1324 = vshrl.u32 %v1323, 7
        %v1325 = vsub.s32 7, %v1324
        %v1326 = vrot.slane %v1170, %v1325
        %v1327 = vlaneseq
        %v1328 = vshrl.u32 %v1327, 7
        %v1329 = vsub.s32 3, %v1328
        %v1330 = vrot.slane %v1171, %v1329
        %v1331 = vlaneseq
        %v1332 = vshrl.u32 %v1331, 7
        %v1333 = vsub.s32 7, %v1332
        %v1334 = vrot.slane %v1171, %v1333
        %v1339 = vlaneseq
        %v1340 = vshrl.u32 %v1339, 7
        %v1341 = vsub.s32 3, %v1340
        %v1342 = vrot.slane %v1322, %v1341
        %v1343 = vlaneseq
        %v1344 = vshrl.u32 %v1343, 7
        %v1345 = vsub.s32 3, %v1344
        %v1346 = vrot.slane %v1326, %v1345
        %v1347 = vlaneseq
        %v1348 = vshrl.u32 %v1347, 7
        %v1349 = vsub.s32 3, %v1348
        %v1350 = vrot.slane %v1330, %v1349
        %v1351 = vlaneseq
        %v1352 = vshrl.u32 %v1351, 7
        %v1353 = vsub.s32 3, %v1352
        %v1354 = vrot.slane %v1334, %v1353
        %v1355 = vmul.f32 %v1317, %v1342
        %v1356 = vmul.f32 %v1317, %v1346
        %v1357 = vmul.f32 %v1317, %v1350
        %v1358 = vmul.f32 %v1317, %v1354
        %v1359 = vadd.f32 %v1311, %v1355
        %v1360 = vadd.f32 %v1312, %v1356
        %v1361 = vadd.f32 %v1313, %v1357
        %v1362 = vadd.f32 %v1314, %v1358
        %v1363 = vsel %vm478, %v1359, 0.0
        %v1364 = vsel %vm478, %v1360, 0.0
        %v1365 = vadd.f32 %v1363, %v1364
        %v1366 = vsel %vm478, %v1361, 0.0
        %v1367 = vadd.f32 %v1365, %v1366
        %v1368 = vsel %vm478, %v1362, 0.0
        %v1369 = vadd.f32 %v1367, %v1368
        %1370 = vadd.xlane.f32.xlu0 %v1369
        %v1371 = vpop.xlane.xlu0 %1370
        %v1372 = vmul.f32 %v1359, %v1359
        %v1373 = vmul.f32 %v1360, %v1360
        %v1374 = vmul.f32 %v1361, %v1361
        %v1375 = vmul.f32 %v1362, %v1362
        %v1376 = vsel %vm478, %v1372, 0.0
        %v1377 = vsel %vm478, %v1373, 0.0
        %v1378 = vadd.f32 %v1376, %v1377
        %v1379 = vsel %vm478, %v1374, 0.0
        %v1380 = vadd.f32 %v1378, %v1379
        %v1381 = vsel %vm478, %v1375, 0.0
        %v1382 = vadd.f32 %v1380, %v1381
        %1383 = vadd.xlane.f32.xlu0 %v1382
        %v1384 = vpop.xlane.xlu0 %1383
        %v1385 = vmul.f32 %v1371, 0.001953125
        %v1386 = vmul.f32 %v1384, 0.001953125
        %v1387 = vmul.f32 %v1385, %v1385
        %v1388 = vsub.f32 %v1386, %v1387
        %v1389 = vsub.f32 %v1359, %v1385
        %v1390 = vsub.f32 %v1360, %v1385
        %v1391 = vsub.f32 %v1361, %v1385
        %v1392 = vsub.f32 %v1362, %v1385
        %v1393 = vadd.f32 %v1388, 1e-05
        %v1394 = vrsqrt.pop %v1393
        %v1395 = vmul.f32 %v1389, %v1394
        %v1396 = vmul.f32 %v1390, %v1394
        %v1397 = vmul.f32 %v1391, %v1394
        %v1398 = vmul.f32 %v1392, %v1394
        %v1399 = vmul.f32 %v1395, 0.01
        %v1400 = vmul.f32 %v1396, 0.01
        %v1401 = vmul.f32 %v1397, 0.01
        %v1402 = vmul.f32 %v1398, 0.01
        %v1403 = vmax.f32 %v1395, %v1399
        %v1404 = vmax.f32 %v1396, %v1400
        %v1405 = vmax.f32 %v1397, %v1401
        %v1406 = vmax.f32 %v1398, %v1402
        %s1407 = scalar_lea.vmem %s294, 2 [#allocation2]
        %v1408 = vld [vmem:[%s1407] ss:$8 sm:$0xf]
        %s1409 = scalar_lea.vmem %s294, 3 [#allocation2]
        %v1410 = vld [vmem:[%s1409] ss:$8 sm:$0xf]
        %1412 = vset.pattern.permute.xlu0 0
        %1413 = vperm.xlu0 %1412, %v339
        %v1414 = vpop.permute.xlu0 %1413
        %v1417 = vlaneseq
        %v1418 = vshrl.u32 %v1417, 7
        %v1419 = vsub.s32 0, %v1418
        %v1420 = vrot.slane %v1408, %v1419
        %v1421 = vlaneseq
        %v1422 = vshrl.u32 %v1421, 7
        %v1423 = vsub.s32 1, %v1422
        %v1424 = vrot.slane %v1408, %v1423
        %v1425 = vlaneseq
        %v1426 = vshrl.u32 %v1425, 7
        %v1427 = vsub.s32 2, %v1426
        %v1428 = vrot.slane %v1408, %v1427
        %v1429 = vlaneseq
        %v1430 = vshrl.u32 %v1429, 7
        %v1431 = vsub.s32 3, %v1430
        %v1432 = vrot.slane %v1408, %v1431
        %v1437 = vmul.f32 %v1414, %v1420
        %v1438 = vmul.f32 %v1414, %v1424
        %v1439 = vmul.f32 %v1414, %v1428
        %v1440 = vmul.f32 %v1414, %v1432
        %1441 = vset.pattern.permute.xlu0 1
        %1442 = vperm.xlu0 %1441, %v339
        %v1443 = vpop.permute.xlu0 %1442
        %v1445 = vlaneseq
        %v1446 = vshrl.u32 %v1445, 7
        %v1447 = vsub.s32 2, %v1446
        %v1448 = vrot.slane %v1403, %v1447
        %v1449 = vlaneseq
        %v1450 = vshrl.u32 %v1449, 7
        %v1451 = vsub.s32 2, %v1450
        %v1452 = vrot.slane %v1404, %v1451
        %v1453 = vlaneseq
        %v1454 = vshrl.u32 %v1453, 7
        %v1455 = vsub.s32 2, %v1454
        %v1456 = vrot.slane %v1405, %v1455
        %v1457 = vlaneseq
        %v1458 = vshrl.u32 %v1457, 7
        %v1459 = vsub.s32 2, %v1458
        %v1460 = vrot.slane %v1406, %v1459
        %v1461 = vmul.f32 %v1443, %v1448
        %v1462 = vmul.f32 %v1443, %v1452
        %v1463 = vmul.f32 %v1443, %v1456
        %v1464 = vmul.f32 %v1443, %v1460
        %v1465 = vadd.f32 %v1437, %v1461
        %v1466 = vadd.f32 %v1438, %v1462
        %v1467 = vadd.f32 %v1439, %v1463
        %v1468 = vadd.f32 %v1440, %v1464
        %1469 = vset.pattern.permute.xlu0 2
        %1470 = vperm.xlu0 %1469, %v339
        %v1471 = vpop.permute.xlu0 %1470
        %v1474 = vlaneseq
        %v1475 = vshrl.u32 %v1474, 7
        %v1476 = vsub.s32 0, %v1475
        %v1477 = vrot.slane %v1410, %v1476
        %v1478 = vlaneseq
        %v1479 = vshrl.u32 %v1478, 7
        %v1480 = vsub.s32 1, %v1479
        %v1481 = vrot.slane %v1410, %v1480
        %v1482 = vlaneseq
        %v1483 = vshrl.u32 %v1482, 7
        %v1484 = vsub.s32 2, %v1483
        %v1485 = vrot.slane %v1410, %v1484
        %v1486 = vlaneseq
        %v1487 = vshrl.u32 %v1486, 7
        %v1488 = vsub.s32 3, %v1487
        %v1489 = vrot.slane %v1410, %v1488
        %v1494 = vmul.f32 %v1471, %v1477
        %v1495 = vmul.f32 %v1471, %v1481
        %v1496 = vmul.f32 %v1471, %v1485
        %v1497 = vmul.f32 %v1471, %v1489
        %v1498 = vadd.f32 %v1465, %v1494
        %v1499 = vadd.f32 %v1466, %v1495
        %v1500 = vadd.f32 %v1467, %v1496
        %v1501 = vadd.f32 %v1468, %v1497
        %1502 = vset.pattern.permute.xlu0 3
        %1503 = vperm.xlu0 %1502, %v339
        %v1504 = vpop.permute.xlu0 %1503
        %v1506 = vlaneseq
        %v1507 = vshrl.u32 %v1506, 7
        %v1508 = vsub.s32 3, %v1507
        %v1509 = vrot.slane %v1403, %v1508
        %v1510 = vlaneseq
        %v1511 = vshrl.u32 %v1510, 7
        %v1512 = vsub.s32 3, %v1511
        %v1513 = vrot.slane %v1404, %v1512
        %v1514 = vlaneseq
        %v1515 = vshrl.u32 %v1514, 7
        %v1516 = vsub.s32 3, %v1515
        %v1517 = vrot.slane %v1405, %v1516
        %v1518 = vlaneseq
        %v1519 = vshrl.u32 %v1518, 7
        %v1520 = vsub.s32 3, %v1519
        %v1521 = vrot.slane %v1406, %v1520
        %v1522 = vmul.f32 %v1504, %v1509
        %v1523 = vmul.f32 %v1504, %v1513
        %v1524 = vmul.f32 %v1504, %v1517
        %v1525 = vmul.f32 %v1504, %v1521
        %v1526 = vadd.f32 %v1498, %v1522
        %v1527 = vadd.f32 %v1499, %v1523
        %v1528 = vadd.f32 %v1500, %v1524
        %v1529 = vadd.f32 %v1501, %v1525
        %v1530 = vsel %vm478, %v1526, 0.0
        %v1531 = vsel %vm478, %v1527, 0.0
        %v1532 = vadd.f32 %v1530, %v1531
        %v1533 = vsel %vm478, %v1528, 0.0
        %v1534 = vadd.f32 %v1532, %v1533
        %v1535 = vsel %vm478, %v1529, 0.0
        %v1536 = vadd.f32 %v1534, %v1535
        %1537 = vadd.xlane.f32.xlu0 %v1536
        %v1538 = vpop.xlane.xlu0 %1537
        %v1539 = vmul.f32 %v1526, %v1526
        %v1540 = vmul.f32 %v1527, %v1527
        %v1541 = vmul.f32 %v1528, %v1528
        %v1542 = vmul.f32 %v1529, %v1529
        %v1543 = vsel %vm478, %v1539, 0.0
        %v1544 = vsel %vm478, %v1540, 0.0
        %v1545 = vadd.f32 %v1543, %v1544
        %v1546 = vsel %vm478, %v1541, 0.0
        %v1547 = vadd.f32 %v1545, %v1546
        %v1548 = vsel %vm478, %v1542, 0.0
        %v1549 = vadd.f32 %v1547, %v1548
        %1550 = vadd.xlane.f32.xlu0 %v1549
        %v1551 = vpop.xlane.xlu0 %1550
        %v1552 = vmul.f32 %v1538, 0.001953125
        %v1553 = vmul.f32 %v1551, 0.001953125
        %v1554 = vmul.f32 %v1552, %v1552
        %v1555 = vsub.f32 %v1553, %v1554
        %v1556 = vsub.f32 %v1526, %v1552
        %v1557 = vsub.f32 %v1527, %v1552
        %v1558 = vsub.f32 %v1528, %v1552
        %v1559 = vsub.f32 %v1529, %v1552
        %v1560 = vadd.f32 %v1555, 1e-05
        %v1561 = vrsqrt.pop %v1560
        %v1562 = vmul.f32 %v1556, %v1561
        %v1563 = vmul.f32 %v1557, %v1561
        %v1564 = vmul.f32 %v1558, %v1561
        %v1565 = vmul.f32 %v1559, %v1561
        %v1566 = vmul.f32 %v1562, 0.01
        %v1567 = vmul.f32 %v1563, 0.01
        %v1568 = vmul.f32 %v1564, 0.01
        %v1569 = vmul.f32 %v1565, 0.01
        %v1570 = vmax.f32 %v1562, %v1566
        %v1571 = vmax.f32 %v1563, %v1567
        %v1572 = vmax.f32 %v1564, %v1568
        %v1573 = vmax.f32 %v1565, %v1569
        %s1574 = scalar_lea.vmem [#allocation8], 208
        %v1575 = vld [vmem:[%s1574] sm:$0xff]
        %v1576 = vld [vmem:[%s1574 + $0x8] sm:$0xff]
        %v1581 = vcombine.low %v1570, %v1571
        %v1582 = vcombine.low %v1572, %v1573
        %v1585 = vmul.f32 %v1575, %v1581
        %v1586 = vmul.f32 %v1576, %v1582
        %1587 = vrot.lane.b32.xlu0 %v1570, 73
        %v1588 = vpop.permute.xlu0 %1587
        %1589 = vrot.lane.b32.xlu0 %v1571, 73
        %v1590 = vpop.permute.xlu0 %1589
        %1591 = vrot.lane.b32.xlu0 %v1572, 73
        %v1592 = vpop.permute.xlu0 %1591
        %1593 = vrot.lane.b32.xlu0 %v1573, 73
        %v1594 = vpop.permute.xlu0 %1593
        %v1595 = vsel %vm546, %v1592, %v1594
        %v1596 = vsel %vm546, %v1590, %v1592
        %v1597 = vsel %vm546, %v1588, %v1590
        %v1598 = vsel %vm546, %v1594, %v1588
        %v1599 = vld [vmem:[#allocation8] sm:$0xff]
        %v1600 = vld [vmem:[#allocation8 + $0x8] sm:$0xff]
        %v1605 = vcombine.low %v1598, %v1597
        %v1606 = vcombine.low %v1596, %v1595
        %v1609 = vmul.f32 %v1599, %v1605
        %v1610 = vmul.f32 %v1600, %v1606
        %v1611 = vadd.f32 %v1585, %v1609
        %v1612 = vadd.f32 %v1586, %v1610
        %1613 = vrot.lane.b32.xlu0 %v1570, 72
        %v1614 = vpop.permute.xlu0 %1613
        %1615 = vrot.lane.b32.xlu0 %v1571, 72
        %v1616 = vpop.permute.xlu0 %1615
        %1617 = vrot.lane.b32.xlu0 %v1572, 72
        %v1618 = vpop.permute.xlu0 %1617
        %1619 = vrot.lane.b32.xlu0 %v1573, 72
        %v1620 = vpop.permute.xlu0 %1619
        %v1621 = vsel %vm573, %v1618, %v1620
        %v1622 = vsel %vm573, %v1616, %v1618
        %v1623 = vsel %vm573, %v1614, %v1616
        %v1624 = vsel %vm573, %v1620, %v1614
        %s1625 = scalar_lea.vmem [#allocation8], 16
        %v1626 = vld [vmem:[%s1625] sm:$0xff]
        %v1627 = vld [vmem:[%s1625 + $0x8] sm:$0xff]
        %v1632 = vcombine.low %v1624, %v1623
        %v1633 = vcombine.low %v1622, %v1621
        %v1636 = vmul.f32 %v1626, %v1632
        %v1637 = vmul.f32 %v1627, %v1633
        %v1638 = vadd.f32 %v1611, %v1636
        %v1639 = vadd.f32 %v1612, %v1637
        %1640 = vrot.lane.b32.xlu0 %v1570, 71
        %v1641 = vpop.permute.xlu0 %1640
        %1642 = vrot.lane.b32.xlu0 %v1571, 71
        %v1643 = vpop.permute.xlu0 %1642
        %1644 = vrot.lane.b32.xlu0 %v1572, 71
        %v1645 = vpop.permute.xlu0 %1644
        %1646 = vrot.lane.b32.xlu0 %v1573, 71
        %v1647 = vpop.permute.xlu0 %1646
        %v1648 = vsel %vm601, %v1645, %v1647
        %v1649 = vsel %vm601, %v1643, %v1645
        %v1650 = vsel %vm601, %v1641, %v1643
        %v1651 = vsel %vm601, %v1647, %v1641
        %s1652 = scalar_lea.vmem [#allocation8], 32
        %v1653 = vld [vmem:[%s1652] sm:$0xff]
        %v1654 = vld [vmem:[%s1652 + $0x8] sm:$0xff]
        %v1659 = vcombine.low %v1651, %v1650
        %v1660 = vcombine.low %v1649, %v1648
        %v1663 = vmul.f32 %v1653, %v1659
        %v1664 = vmul.f32 %v1654, %v1660
        %v1665 = vadd.f32 %v1638, %v1663
        %v1666 = vadd.f32 %v1639, %v1664
        %1667 = vrot.lane.b32.xlu0 %v1570, 65
        %v1668 = vpop.permute.xlu0 %1667
        %1669 = vrot.lane.b32.xlu0 %v1571, 65
        %v1670 = vpop.permute.xlu0 %1669
        %1671 = vrot.lane.b32.xlu0 %v1572, 65
        %v1672 = vpop.permute.xlu0 %1671
        %1673 = vrot.lane.b32.xlu0 %v1573, 65
        %v1674 = vpop.permute.xlu0 %1673
        %v1675 = vsel %vm629, %v1672, %v1674
        %v1676 = vsel %vm629, %v1670, %v1672
        %v1677 = vsel %vm629, %v1668, %v1670
        %v1678 = vsel %vm629, %v1674, %v1668
        %s1679 = scalar_lea.vmem [#allocation8], 48
        %v1680 = vld [vmem:[%s1679] sm:$0xff]
        %v1681 = vld [vmem:[%s1679 + $0x8] sm:$0xff]
        %v1686 = vcombine.low %v1678, %v1677
        %v1687 = vcombine.low %v1676, %v1675
        %v1690 = vmul.f32 %v1680, %v1686
        %v1691 = vmul.f32 %v1681, %v1687
        %v1692 = vadd.f32 %v1665, %v1690
        %v1693 = vadd.f32 %v1666, %v1691
        %1694 = vrot.lane.b32.xlu0 %v1570, 64
        %v1695 = vpop.permute.xlu0 %1694
        %1696 = vrot.lane.b32.xlu0 %v1571, 64
        %v1697 = vpop.permute.xlu0 %1696
        %1698 = vrot.lane.b32.xlu0 %v1572, 64
        %v1699 = vpop.permute.xlu0 %1698
        %1700 = vrot.lane.b32.xlu0 %v1573, 64
        %v1701 = vpop.permute.xlu0 %1700
        %v1702 = vsel %vm657, %v1699, %v1701
        %v1703 = vsel %vm657, %v1697, %v1699
        %v1704 = vsel %vm657, %v1695, %v1697
        %v1705 = vsel %vm657, %v1701, %v1695
        %s1706 = scalar_lea.vmem [#allocation8], 64
        %v1707 = vld [vmem:[%s1706] sm:$0xff]
        %v1708 = vld [vmem:[%s1706 + $0x8] sm:$0xff]
        %v1713 = vcombine.low %v1705, %v1704
        %v1714 = vcombine.low %v1703, %v1702
        %v1717 = vmul.f32 %v1707, %v1713
        %v1718 = vmul.f32 %v1708, %v1714
        %v1719 = vadd.f32 %v1692, %v1717
        %v1720 = vadd.f32 %v1693, %v1718
        %1721 = vrot.lane.b32.xlu0 %v1570, 63
        %v1722 = vpop.permute.xlu0 %1721
        %1723 = vrot.lane.b32.xlu0 %v1571, 63
        %v1724 = vpop.permute.xlu0 %1723
        %1725 = vrot.lane.b32.xlu0 %v1572, 63
        %v1726 = vpop.permute.xlu0 %1725
        %1727 = vrot.lane.b32.xlu0 %v1573, 63
        %v1728 = vpop.permute.xlu0 %1727
        %v1729 = vsel %vm685, %v1726, %v1728
        %v1730 = vsel %vm685, %v1724, %v1726
        %v1731 = vsel %vm685, %v1722, %v1724
        %v1732 = vsel %vm685, %v1728, %v1722
        %s1733 = scalar_lea.vmem [#allocation8], 80
        %v1734 = vld [vmem:[%s1733] sm:$0xff]
        %v1735 = vld [vmem:[%s1733 + $0x8] sm:$0xff]
        %v1740 = vcombine.low %v1732, %v1731
        %v1741 = vcombine.low %v1730, %v1729
        %v1744 = vmul.f32 %v1734, %v1740
        %v1745 = vmul.f32 %v1735, %v1741
        %v1746 = vadd.f32 %v1719, %v1744
        %v1747 = vadd.f32 %v1720, %v1745
        %1748 = vrot.lane.b32.xlu0 %v1570, 57
        %v1749 = vpop.permute.xlu0 %1748
        %1750 = vrot.lane.b32.xlu0 %v1571, 57
        %v1751 = vpop.permute.xlu0 %1750
        %1752 = vrot.lane.b32.xlu0 %v1572, 57
        %v1753 = vpop.permute.xlu0 %1752
        %1754 = vrot.lane.b32.xlu0 %v1573, 57
        %v1755 = vpop.permute.xlu0 %1754
        %v1756 = vsel %vm713, %v1753, %v1755
        %v1757 = vsel %vm713, %v1751, %v1753
        %v1758 = vsel %vm713, %v1749, %v1751
        %v1759 = vsel %vm713, %v1755, %v1749
        %s1760 = scalar_lea.vmem [#allocation8], 96
        %v1761 = vld [vmem:[%s1760] sm:$0xff]
        %v1762 = vld [vmem:[%s1760 + $0x8] sm:$0xff]
        %v1767 = vcombine.low %v1759, %v1758
        %v1768 = vcombine.low %v1757, %v1756
        %v1771 = vmul.f32 %v1761, %v1767
        %v1772 = vmul.f32 %v1762, %v1768
        %v1773 = vadd.f32 %v1746, %v1771
        %v1774 = vadd.f32 %v1747, %v1772
        %1775 = vrot.lane.b32.xlu0 %v1570, 56
        %v1776 = vpop.permute.xlu0 %1775
        %1777 = vrot.lane.b32.xlu0 %v1571, 56
        %v1778 = vpop.permute.xlu0 %1777
        %1779 = vrot.lane.b32.xlu0 %v1572, 56
        %v1780 = vpop.permute.xlu0 %1779
        %1781 = vrot.lane.b32.xlu0 %v1573, 56
        %v1782 = vpop.permute.xlu0 %1781
        %v1783 = vsel %vm741, %v1780, %v1782
        %v1784 = vsel %vm741, %v1778, %v1780
        %v1785 = vsel %vm741, %v1776, %v1778
        %v1786 = vsel %vm741, %v1782, %v1776
        %s1787 = scalar_lea.vmem [#allocation8], 112
        %v1788 = vld [vmem:[%s1787] sm:$0xff]
        %v1789 = vld [vmem:[%s1787 + $0x8] sm:$0xff]
        %v1794 = vcombine.low %v1786, %v1785
        %v1795 = vcombine.low %v1784, %v1783
        %v1798 = vmul.f32 %v1788, %v1794
        %v1799 = vmul.f32 %v1789, %v1795
        %v1800 = vadd.f32 %v1773, %v1798
        %v1801 = vadd.f32 %v1774, %v1799
        %1802 = vrot.lane.b32.xlu0 %v1570, 55
        %v1803 = vpop.permute.xlu0 %1802
        %1804 = vrot.lane.b32.xlu0 %v1571, 55
        %v1805 = vpop.permute.xlu0 %1804
        %1806 = vrot.lane.b32.xlu0 %v1572, 55
        %v1807 = vpop.permute.xlu0 %1806
        %1808 = vrot.lane.b32.xlu0 %v1573, 55
        %v1809 = vpop.permute.xlu0 %1808
        %v1810 = vsel %vm769, %v1807, %v1809
        %v1811 = vsel %vm769, %v1805, %v1807
        %v1812 = vsel %vm769, %v1803, %v1805
        %v1813 = vsel %vm769, %v1809, %v1803
        %s1814 = scalar_lea.vmem [#allocation8], 128
        %v1815 = vld [vmem:[%s1814] sm:$0xff]
        %v1816 = vld [vmem:[%s1814 + $0x8] sm:$0xff]
        %v1821 = vcombine.low %v1813, %v1812
        %v1822 = vcombine.low %v1811, %v1810
        %v1825 = vmul.f32 %v1815, %v1821
        %v1826 = vmul.f32 %v1816, %v1822
        %v1827 = vadd.f32 %v1800, %v1825
        %v1828 = vadd.f32 %v1801, %v1826
        %1829 = vrot.lane.b32.xlu0 %v1570, 9
        %v1830 = vpop.permute.xlu0 %1829
        %1831 = vrot.lane.b32.xlu0 %v1571, 9
        %v1832 = vpop.permute.xlu0 %1831
        %1833 = vrot.lane.b32.xlu0 %v1572, 9
        %v1834 = vpop.permute.xlu0 %1833
        %1835 = vrot.lane.b32.xlu0 %v1573, 9
        %v1836 = vpop.permute.xlu0 %1835
        %v1837 = vsel %vm797, %v1834, %v1836
        %v1838 = vsel %vm797, %v1832, %v1834
        %v1839 = vsel %vm797, %v1830, %v1832
        %v1840 = vsel %vm797, %v1836, %v1830
        %s1841 = scalar_lea.vmem [#allocation8], 144
        %v1842 = vld [vmem:[%s1841] sm:$0xff]
        %v1843 = vld [vmem:[%s1841 + $0x8] sm:$0xff]
        %v1848 = vcombine.low %v1840, %v1839
        %v1849 = vcombine.low %v1838, %v1837
        %v1852 = vmul.f32 %v1842, %v1848
        %v1853 = vmul.f32 %v1843, %v1849
        %v1854 = vadd.f32 %v1827, %v1852
        %v1855 = vadd.f32 %v1828, %v1853
        %1856 = vrot.lane.b32.xlu0 %v1570, 8
        %v1857 = vpop.permute.xlu0 %1856
        %1858 = vrot.lane.b32.xlu0 %v1571, 8
        %v1859 = vpop.permute.xlu0 %1858
        %1860 = vrot.lane.b32.xlu0 %v1572, 8
        %v1861 = vpop.permute.xlu0 %1860
        %1862 = vrot.lane.b32.xlu0 %v1573, 8
        %v1863 = vpop.permute.xlu0 %1862
        %v1864 = vsel %vm825, %v1861, %v1863
        %v1865 = vsel %vm825, %v1859, %v1861
        %v1866 = vsel %vm825, %v1857, %v1859
        %v1867 = vsel %vm825, %v1863, %v1857
        %s1868 = scalar_lea.vmem [#allocation8], 160
        %v1869 = vld [vmem:[%s1868] sm:$0xff]
        %v1870 = vld [vmem:[%s1868 + $0x8] sm:$0xff]
        %v1875 = vcombine.low %v1867, %v1866
        %v1876 = vcombine.low %v1865, %v1864
        %v1879 = vmul.f32 %v1869, %v1875
        %v1880 = vmul.f32 %v1870, %v1876
        %v1881 = vadd.f32 %v1854, %v1879
        %v1882 = vadd.f32 %v1855, %v1880
        %1883 = vrot.lane.b32.xlu0 %v1570, 7
        %v1884 = vpop.permute.xlu0 %1883
        %1885 = vrot.lane.b32.xlu0 %v1571, 7
        %v1886 = vpop.permute.xlu0 %1885
        %1887 = vrot.lane.b32.xlu0 %v1572, 7
        %v1888 = vpop.permute.xlu0 %1887
        %1889 = vrot.lane.b32.xlu0 %v1573, 7
        %v1890 = vpop.permute.xlu0 %1889
        %v1891 = vsel %vm853, %v1888, %v1890
        %v1892 = vsel %vm853, %v1886, %v1888
        %v1893 = vsel %vm853, %v1884, %v1886
        %v1894 = vsel %vm853, %v1890, %v1884
        %s1895 = scalar_lea.vmem [#allocation8], 176
        %v1896 = vld [vmem:[%s1895] sm:$0xff]
        %v1897 = vld [vmem:[%s1895 + $0x8] sm:$0xff]
        %v1902 = vcombine.low %v1894, %v1893
        %v1903 = vcombine.low %v1892, %v1891
        %v1906 = vmul.f32 %v1896, %v1902
        %v1907 = vmul.f32 %v1897, %v1903
        %v1908 = vadd.f32 %v1881, %v1906
        %v1909 = vadd.f32 %v1882, %v1907
        %1910 = vrot.lane.b32.xlu0 %v1570, 1
        %v1911 = vpop.permute.xlu0 %1910
        %1912 = vrot.lane.b32.xlu0 %v1571, 1
        %v1913 = vpop.permute.xlu0 %1912
        %1914 = vrot.lane.b32.xlu0 %v1572, 1
        %v1915 = vpop.permute.xlu0 %1914
        %1916 = vrot.lane.b32.xlu0 %v1573, 1
        %v1917 = vpop.permute.xlu0 %1916
        %v1918 = vsel %vm881, %v1915, %v1917
        %v1919 = vsel %vm881, %v1913, %v1915
        %v1920 = vsel %vm881, %v1911, %v1913
        %v1921 = vsel %vm881, %v1917, %v1911
        %s1922 = scalar_lea.vmem [#allocation8], 192
        %v1923 = vld [vmem:[%s1922] sm:$0xff]
        %v1924 = vld [vmem:[%s1922 + $0x8] sm:$0xff]
        %v1929 = vcombine.low %v1921, %v1920
        %v1930 = vcombine.low %v1919, %v1918
        %v1933 = vmul.f32 %v1923, %v1929
        %v1934 = vmul.f32 %v1924, %v1930
        %v1935 = vadd.f32 %v1908, %v1933
        %v1936 = vadd.f32 %v1909, %v1934
        %1937 = vrot.lane.b32.xlu0 %v1570, 127
        %v1938 = vpop.permute.xlu0 %1937
        %1939 = vrot.lane.b32.xlu0 %v1571, 127
        %v1940 = vpop.permute.xlu0 %1939
        %1941 = vrot.lane.b32.xlu0 %v1572, 127
        %v1942 = vpop.permute.xlu0 %1941
        %1943 = vrot.lane.b32.xlu0 %v1573, 127
        %v1944 = vpop.permute.xlu0 %1943
        %v1945 = vsel %vm909, %v1942, %v1944
        %v1946 = vsel %vm909, %v1940, %v1942
        %v1947 = vsel %vm909, %v1938, %v1940
        %v1948 = vsel %vm909, %v1944, %v1938
        %s1949 = scalar_lea.vmem [#allocation8], 224
        %v1950 = vld [vmem:[%s1949] sm:$0xff]
        %v1951 = vld [vmem:[%s1949 + $0x8] sm:$0xff]
        %v1956 = vcombine.low %v1947, %v1946
        %v1957 = vcombine.low %v1945, %v1948
        %v1960 = vmul.f32 %v1950, %v1956
        %v1961 = vmul.f32 %v1951, %v1957
        %v1962 = vadd.f32 %v1935, %v1960
        %v1963 = vadd.f32 %v1936, %v1961
        %1964 = vrot.lane.b32.xlu0 %v1570, 121
        %v1965 = vpop.permute.xlu0 %1964
        %1966 = vrot.lane.b32.xlu0 %v1571, 121
        %v1967 = vpop.permute.xlu0 %1966
        %1968 = vrot.lane.b32.xlu0 %v1572, 121
        %v1969 = vpop.permute.xlu0 %1968
        %1970 = vrot.lane.b32.xlu0 %v1573, 121
        %v1971 = vpop.permute.xlu0 %1970
        %v1972 = vsel %vm937, %v1969, %v1971
        %v1973 = vsel %vm937, %v1967, %v1969
        %v1974 = vsel %vm937, %v1965, %v1967
        %v1975 = vsel %vm937, %v1971, %v1965
        %s1976 = scalar_lea.vmem [#allocation8], 240
        %v1977 = vld [vmem:[%s1976] sm:$0xff]
        %v1978 = vld [vmem:[%s1976 + $0x8] sm:$0xff]
        %v1983 = vcombine.low %v1974, %v1973
        %v1984 = vcombine.low %v1972, %v1975
        %v1987 = vmul.f32 %v1977, %v1983
        %v1988 = vmul.f32 %v1978, %v1984
        %v1989 = vadd.f32 %v1962, %v1987
        %v1990 = vadd.f32 %v1963, %v1988
        %1991 = vrot.lane.b32.xlu0 %v1570, 120
        %v1992 = vpop.permute.xlu0 %1991
        %1993 = vrot.lane.b32.xlu0 %v1571, 120
        %v1994 = vpop.permute.xlu0 %1993
        %1995 = vrot.lane.b32.xlu0 %v1572, 120
        %v1996 = vpop.permute.xlu0 %1995
        %1997 = vrot.lane.b32.xlu0 %v1573, 120
        %v1998 = vpop.permute.xlu0 %1997
        %v1999 = vsel %vm965, %v1996, %v1998
        %v2000 = vsel %vm965, %v1994, %v1996
        %v2001 = vsel %vm965, %v1992, %v1994
        %v2002 = vsel %vm965, %v1998, %v1992
        %s2003 = scalar_lea.vmem [#allocation8], 256
        %v2004 = vld [vmem:[%s2003] sm:$0xff]
        %v2005 = vld [vmem:[%s2003 + $0x8] sm:$0xff]
        %v2010 = vcombine.low %v2001, %v2000
        %v2011 = vcombine.low %v1999, %v2002
        %v2014 = vmul.f32 %v2004, %v2010
        %v2015 = vmul.f32 %v2005, %v2011
        %v2016 = vadd.f32 %v1989, %v2014
        %v2017 = vadd.f32 %v1990, %v2015
        %2018 = vrot.lane.b32.xlu0 %v1570, 119
        %v2019 = vpop.permute.xlu0 %2018
        %2020 = vrot.lane.b32.xlu0 %v1571, 119
        %v2021 = vpop.permute.xlu0 %2020
        %2022 = vrot.lane.b32.xlu0 %v1572, 119
        %v2023 = vpop.permute.xlu0 %2022
        %2024 = vrot.lane.b32.xlu0 %v1573, 119
        %v2025 = vpop.permute.xlu0 %2024
        %v2026 = vsel %vm993, %v2023, %v2025
        %v2027 = vsel %vm993, %v2021, %v2023
        %v2028 = vsel %vm993, %v2019, %v2021
        %v2029 = vsel %vm993, %v2025, %v2019
        %s2030 = scalar_lea.vmem [#allocation8], 272
        %v2031 = vld [vmem:[%s2030] sm:$0xff]
        %v2032 = vld [vmem:[%s2030 + $0x8] sm:$0xff]
        %v2037 = vcombine.low %v2028, %v2027
        %v2038 = vcombine.low %v2026, %v2029
        %v2041 = vmul.f32 %v2031, %v2037
        %v2042 = vmul.f32 %v2032, %v2038
        %v2043 = vadd.f32 %v2016, %v2041
        %v2044 = vadd.f32 %v2017, %v2042
        %s2045 = scalar_lea.vmem [#allocation8], 288
        %v2046 = vld [vmem:[%s2045] sm:$0xff]
        %v2047 = vld [vmem:[%s2045 + $0x8] sm:$0xff]
        %v2048 = vcombine.low %v1597, %v1596
        %v2049 = vcombine.low %v1595, %v1598
        %v2052 = vmul.f32 %v2046, %v2048
        %v2053 = vmul.f32 %v2047, %v2049
        %v2054 = vadd.f32 %v2043, %v2052
        %v2055 = vadd.f32 %v2044, %v2053
        %s2056 = scalar_lea.vmem [#allocation8], 304
        %v2057 = vld [vmem:[%s2056] sm:$0xff]
        %v2058 = vld [vmem:[%s2056 + $0x8] sm:$0xff]
        %v2059 = vcombine.low %v1623, %v1622
        %v2060 = vcombine.low %v1621, %v1624
        %v2063 = vmul.f32 %v2057, %v2059
        %v2064 = vmul.f32 %v2058, %v2060
        %v2065 = vadd.f32 %v2054, %v2063
        %v2066 = vadd.f32 %v2055, %v2064
        %s2067 = scalar_lea.vmem [#allocation8], 320
        %v2068 = vld [vmem:[%s2067] sm:$0xff]
        %v2069 = vld [vmem:[%s2067 + $0x8] sm:$0xff]
        %v2070 = vcombine.low %v1650, %v1649
        %v2071 = vcombine.low %v1648, %v1651
        %v2074 = vmul.f32 %v2068, %v2070
        %v2075 = vmul.f32 %v2069, %v2071
        %v2076 = vadd.f32 %v2065, %v2074
        %v2077 = vadd.f32 %v2066, %v2075
        %s2078 = scalar_lea.vmem [#allocation8], 336
        %v2079 = vld [vmem:[%s2078] sm:$0xff]
        %v2080 = vld [vmem:[%s2078 + $0x8] sm:$0xff]
        %v2081 = vcombine.low %v1677, %v1676
        %v2082 = vcombine.low %v1675, %v1678
        %v2085 = vmul.f32 %v2079, %v2081
        %v2086 = vmul.f32 %v2080, %v2082
        %v2087 = vadd.f32 %v2076, %v2085
        %v2088 = vadd.f32 %v2077, %v2086
        %s2089 = scalar_lea.vmem [#allocation8], 352
        %v2090 = vld [vmem:[%s2089] sm:$0xff]
        %v2091 = vld [vmem:[%s2089 + $0x8] sm:$0xff]
        %v2092 = vcombine.low %v1704, %v1703
        %v2093 = vcombine.low %v1702, %v1705
        %v2096 = vmul.f32 %v2090, %v2092
        %v2097 = vmul.f32 %v2091, %v2093
        %v2098 = vadd.f32 %v2087, %v2096
        %v2099 = vadd.f32 %v2088, %v2097
        %s2100 = scalar_lea.vmem [#allocation8], 368
        %v2101 = vld [vmem:[%s2100] sm:$0xff]
        %v2102 = vld [vmem:[%s2100 + $0x8] sm:$0xff]
        %v2103 = vcombine.low %v1731, %v1730
        %v2104 = vcombine.low %v1729, %v1732
        %v2107 = vmul.f32 %v2101, %v2103
        %v2108 = vmul.f32 %v2102, %v2104
        %v2109 = vadd.f32 %v2098, %v2107
        %v2110 = vadd.f32 %v2099, %v2108
        %s2111 = scalar_lea.vmem [#allocation8], 384
        %v2112 = vld [vmem:[%s2111] sm:$0xff]
        %v2113 = vld [vmem:[%s2111 + $0x8] sm:$0xff]
        %v2114 = vcombine.low %v1758, %v1757
        %v2115 = vcombine.low %v1756, %v1759
        %v2118 = vmul.f32 %v2112, %v2114
        %v2119 = vmul.f32 %v2113, %v2115
        %v2120 = vadd.f32 %v2109, %v2118
        %v2121 = vadd.f32 %v2110, %v2119
        %s2122 = scalar_lea.vmem [#allocation8], 400
        %v2123 = vld [vmem:[%s2122] sm:$0xff]
        %v2124 = vld [vmem:[%s2122 + $0x8] sm:$0xff]
        %v2125 = vcombine.low %v1785, %v1784
        %v2126 = vcombine.low %v1783, %v1786
        %v2129 = vmul.f32 %v2123, %v2125
        %v2130 = vmul.f32 %v2124, %v2126
        %v2131 = vadd.f32 %v2120, %v2129
        %v2132 = vadd.f32 %v2121, %v2130
        %s2133 = scalar_lea.vmem [#allocation8], 416
        %v2134 = vld [vmem:[%s2133] sm:$0xff]
        %v2135 = vld [vmem:[%s2133 + $0x8] sm:$0xff]
        %v2136 = vcombine.low %v1812, %v1811
        %v2137 = vcombine.low %v1810, %v1813
        %v2140 = vmul.f32 %v2134, %v2136
        %v2141 = vmul.f32 %v2135, %v2137
        %v2142 = vadd.f32 %v2131, %v2140
        %v2143 = vadd.f32 %v2132, %v2141
        %v2146 = vcombine.high %v2142, %v2142
        %v2147 = vcombine.high %v2143, %v2143
        %v2150 = vsel %vm478, %v2142, 0.0
        %v2151 = vsel %vm478, %v2146, 0.0
        %v2152 = vadd.f32 %v2150, %v2151
        %v2153 = vsel %vm478, %v2143, 0.0
        %v2154 = vadd.f32 %v2152, %v2153
        %v2155 = vsel %vm478, %v2147, 0.0
        %v2156 = vadd.f32 %v2154, %v2155
        %2157 = vadd.xlane.f32.xlu0 %v2156
        %v2158 = vpop.xlane.xlu0 %2157
        %v2159 = vmul.f32 %v2142, %v2142
        %v2160 = vmul.f32 %v2143, %v2143
        %v2163 = vcombine.high %v2159, %v2159
        %v2164 = vcombine.high %v2160, %v2160
        %v2167 = vsel %vm478, %v2159, 0.0
        %v2168 = vsel %vm478, %v2163, 0.0
        %v2169 = vadd.f32 %v2167, %v2168
        %v2170 = vsel %vm478, %v2160, 0.0
        %v2171 = vadd.f32 %v2169, %v2170
        %v2172 = vsel %vm478, %v2164, 0.0
        %v2173 = vadd.f32 %v2171, %v2172
        %2174 = vadd.xlane.f32.xlu0 %v2173
        %v2175 = vpop.xlane.xlu0 %2174
        %v2176 = vmul.f32 %v2158, 0.001953125
        %v2177 = vmul.f32 %v2175, 0.001953125
        %v2178 = vmul.f32 %v2176, %v2176
        %v2179 = vsub.f32 %v2177, %v2178
        %v2182 = vunpack.c.l.s4 839922192
        %v2183 = vunpack.c.0.s8 %v2182
        %v2184 = vlaneseq
        %v2185 = vshrl.u32 %v2184, 7
        %v2186 = vsub.s32 %v2183, %v2185
        %v2187 = vrot.slane %v2176, %v2186
        %v2189 = vsub.f32 %v2142, %v2187
        %v2190 = vsub.f32 %v2143, %v2187
        %v2191 = vadd.f32 %v2179, 1e-05
        %v2192 = vrsqrt.pop %v2191
        %v2195 = vunpack.c.l.s4 839922192
        %v2196 = vunpack.c.0.s8 %v2195
        %v2197 = vlaneseq
        %v2198 = vshrl.u32 %v2197, 7
        %v2199 = vsub.s32 %v2196, %v2198
        %v2200 = vrot.slane %v2192, %v2199
        %v2202 = vmul.f32 %v2189, %v2200
        %v2203 = vmul.f32 %v2190, %v2200
        %2205 = vset.pattern.permute.xlu0 0
        %2206 = vperm.xlu0 %2205, %v340
        %v2207 = vpop.permute.xlu0 %2206
        %v2211 = vlaneseq
        %v2212 = vshrl.u32 %v2211, 7
        %v2213 = vsub.s32 0, %v2212
        %v2214 = vrot.slane %v2202, %v2213
        %v2215 = vlaneseq
        %v2216 = vshrl.u32 %v2215, 7
        %v2217 = vsub.s32 4, %v2216
        %v2218 = vrot.slane %v2202, %v2217
        %v2219 = vlaneseq
        %v2220 = vshrl.u32 %v2219, 7
        %v2221 = vsub.s32 0, %v2220
        %v2222 = vrot.slane %v2203, %v2221
        %v2223 = vlaneseq
        %v2224 = vshrl.u32 %v2223, 7
        %v2225 = vsub.s32 4, %v2224
        %v2226 = vrot.slane %v2203, %v2225
        %v2231 = vlaneseq
        %v2232 = vshrl.u32 %v2231, 7
        %v2233 = vsub.s32 0, %v2232
        %v2234 = vrot.slane %v2214, %v2233
        %v2235 = vlaneseq
        %v2236 = vshrl.u32 %v2235, 7
        %v2237 = vsub.s32 0, %v2236
        %v2238 = vrot.slane %v2218, %v2237
        %v2239 = vlaneseq
        %v2240 = vshrl.u32 %v2239, 7
        %v2241 = vsub.s32 0, %v2240
        %v2242 = vrot.slane %v2222, %v2241
        %v2243 = vlaneseq
        %v2244 = vshrl.u32 %v2243, 7
        %v2245 = vsub.s32 0, %v2244
        %v2246 = vrot.slane %v2226, %v2245
        %v2247 = vmul.f32 %v2207, %v2234
        %v2248 = vmul.f32 %v2207, %v2238
        %v2249 = vmul.f32 %v2207, %v2242
        %v2250 = vmul.f32 %v2207, %v2246
        %2251 = vset.pattern.permute.xlu0 1
        %2252 = vperm.xlu0 %2251, %v340
        %v2253 = vpop.permute.xlu0 %2252
        %v2255 = vlaneseq
        %v2256 = vshrl.u32 %v2255, 7
        %v2257 = vsub.s32 1, %v2256
        %v2258 = vrot.slane %v2202, %v2257
        %v2259 = vlaneseq
        %v2260 = vshrl.u32 %v2259, 7
        %v2261 = vsub.s32 5, %v2260
        %v2262 = vrot.slane %v2202, %v2261
        %v2263 = vlaneseq
        %v2264 = vshrl.u32 %v2263, 7
        %v2265 = vsub.s32 1, %v2264
        %v2266 = vrot.slane %v2203, %v2265
        %v2267 = vlaneseq
        %v2268 = vshrl.u32 %v2267, 7
        %v2269 = vsub.s32 5, %v2268
        %v2270 = vrot.slane %v2203, %v2269
        %v2275 = vlaneseq
        %v2276 = vshrl.u32 %v2275, 7
        %v2277 = vsub.s32 1, %v2276
        %v2278 = vrot.slane %v2258, %v2277
        %v2279 = vlaneseq
        %v2280 = vshrl.u32 %v2279, 7
        %v2281 = vsub.s32 1, %v2280
        %v2282 = vrot.slane %v2262, %v2281
        %v2283 = vlaneseq
        %v2284 = vshrl.u32 %v2283, 7
        %v2285 = vsub.s32 1, %v2284
        %v2286 = vrot.slane %v2266, %v2285
        %v2287 = vlaneseq
        %v2288 = vshrl.u32 %v2287, 7
        %v2289 = vsub.s32 1, %v2288
        %v2290 = vrot.slane %v2270, %v2289
        %v2291 = vmul.f32 %v2253, %v2278
        %v2292 = vmul.f32 %v2253, %v2282
        %v2293 = vmul.f32 %v2253, %v2286
        %v2294 = vmul.f32 %v2253, %v2290
        %v2295 = vadd.f32 %v2247, %v2291
        %v2296 = vadd.f32 %v2248, %v2292
        %v2297 = vadd.f32 %v2249, %v2293
        %v2298 = vadd.f32 %v2250, %v2294
        %2299 = vset.pattern.permute.xlu0 2
        %2300 = vperm.xlu0 %2299, %v340
        %v2301 = vpop.permute.xlu0 %2300
        %v2303 = vlaneseq
        %v2304 = vshrl.u32 %v2303, 7
        %v2305 = vsub.s32 2, %v2304
        %v2306 = vrot.slane %v2202, %v2305
        %v2307 = vlaneseq
        %v2308 = vshrl.u32 %v2307, 7
        %v2309 = vsub.s32 6, %v2308
        %v2310 = vrot.slane %v2202, %v2309
        %v2311 = vlaneseq
        %v2312 = vshrl.u32 %v2311, 7
        %v2313 = vsub.s32 2, %v2312
        %v2314 = vrot.slane %v2203, %v2313
        %v2315 = vlaneseq
        %v2316 = vshrl.u32 %v2315, 7
        %v2317 = vsub.s32 6, %v2316
        %v2318 = vrot.slane %v2203, %v2317
        %v2323 = vlaneseq
        %v2324 = vshrl.u32 %v2323, 7
        %v2325 = vsub.s32 2, %v2324
        %v2326 = vrot.slane %v2306, %v2325
        %v2327 = vlaneseq
        %v2328 = vshrl.u32 %v2327, 7
        %v2329 = vsub.s32 2, %v2328
        %v2330 = vrot.slane %v2310, %v2329
        %v2331 = vlaneseq
        %v2332 = vshrl.u32 %v2331, 7
        %v2333 = vsub.s32 2, %v2332
        %v2334 = vrot.slane %v2314, %v2333
        %v2335 = vlaneseq
        %v2336 = vshrl.u32 %v2335, 7
        %v2337 = vsub.s32 2, %v2336
        %v2338 = vrot.slane %v2318, %v2337
        %v2339 = vmul.f32 %v2301, %v2326
        %v2340 = vmul.f32 %v2301, %v2330
        %v2341 = vmul.f32 %v2301, %v2334
        %v2342 = vmul.f32 %v2301, %v2338
        %v2343 = vadd.f32 %v2295, %v2339
        %v2344 = vadd.f32 %v2296, %v2340
        %v2345 = vadd.f32 %v2297, %v2341
        %v2346 = vadd.f32 %v2298, %v2342
        %2347 = vset.pattern.permute.xlu0 3
        %2348 = vperm.xlu0 %2347, %v340
        %v2349 = vpop.permute.xlu0 %2348
        %v2351 = vlaneseq
        %v2352 = vshrl.u32 %v2351, 7
        %v2353 = vsub.s32 3, %v2352
        %v2354 = vrot.slane %v2202, %v2353
        %v2355 = vlaneseq
        %v2356 = vshrl.u32 %v2355, 7
        %v2357 = vsub.s32 7, %v2356
        %v2358 = vrot.slane %v2202, %v2357
        %v2359 = vlaneseq
        %v2360 = vshrl.u32 %v2359, 7
        %v2361 = vsub.s32 3, %v2360
        %v2362 = vrot.slane %v2203, %v2361
        %v2363 = vlaneseq
        %v2364 = vshrl.u32 %v2363, 7
        %v2365 = vsub.s32 7, %v2364
        %v2366 = vrot.slane %v2203, %v2365
        %v2371 = vlaneseq
        %v2372 = vshrl.u32 %v2371, 7
        %v2373 = vsub.s32 3, %v2372
        %v2374 = vrot.slane %v2354, %v2373
        %v2375 = vlaneseq
        %v2376 = vshrl.u32 %v2375, 7
        %v2377 = vsub.s32 3, %v2376
        %v2378 = vrot.slane %v2358, %v2377
        %v2379 = vlaneseq
        %v2380 = vshrl.u32 %v2379, 7
        %v2381 = vsub.s32 3, %v2380
        %v2382 = vrot.slane %v2362, %v2381
        %v2383 = vlaneseq
        %v2384 = vshrl.u32 %v2383, 7
        %v2385 = vsub.s32 3, %v2384
        %v2386 = vrot.slane %v2366, %v2385
        %v2387 = vmul.f32 %v2349, %v2374
        %v2388 = vmul.f32 %v2349, %v2378
        %v2389 = vmul.f32 %v2349, %v2382
        %v2390 = vmul.f32 %v2349, %v2386
        %v2391 = vadd.f32 %v2343, %v2387
        %v2392 = vadd.f32 %v2344, %v2388
        %v2393 = vadd.f32 %v2345, %v2389
        %v2394 = vadd.f32 %v2346, %v2390
        %v2395 = vsel %vm478, %v2391, 0.0
        %v2396 = vsel %vm478, %v2392, 0.0
        %v2397 = vadd.f32 %v2395, %v2396
        %v2398 = vsel %vm478, %v2393, 0.0
        %v2399 = vadd.f32 %v2397, %v2398
        %v2400 = vsel %vm478, %v2394, 0.0
        %v2401 = vadd.f32 %v2399, %v2400
        %2402 = vadd.xlane.f32.xlu0 %v2401
        %v2403 = vpop.xlane.xlu0 %2402
        %v2404 = vmul.f32 %v2391, %v2391
        %v2405 = vmul.f32 %v2392, %v2392
        %v2406 = vmul.f32 %v2393, %v2393
        %v2407 = vmul.f32 %v2394, %v2394
        %v2408 = vsel %vm478, %v2404, 0.0
        %v2409 = vsel %vm478, %v2405, 0.0
        %v2410 = vadd.f32 %v2408, %v2409
        %v2411 = vsel %vm478, %v2406, 0.0
        %v2412 = vadd.f32 %v2410, %v2411
        %v2413 = vsel %vm478, %v2407, 0.0
        %v2414 = vadd.f32 %v2412, %v2413
        %2415 = vadd.xlane.f32.xlu0 %v2414
        %v2416 = vpop.xlane.xlu0 %2415
        %v2417 = vmul.f32 %v2403, 0.001953125
        %v2418 = vmul.f32 %v2416, 0.001953125
        %v2419 = vmul.f32 %v2417, %v2417
        %v2420 = vsub.f32 %v2418, %v2419
        %v2421 = vsub.f32 %v2391, %v2417
        %v2422 = vsub.f32 %v2392, %v2417
        %v2423 = vsub.f32 %v2393, %v2417
        %v2424 = vsub.f32 %v2394, %v2417
        %v2425 = vadd.f32 %v2420, 1e-05
        %v2426 = vrsqrt.pop %v2425
        %v2427 = vmul.f32 %v2421, %v2426
        %v2428 = vmul.f32 %v2422, %v2426
        %v2429 = vmul.f32 %v2423, %v2426
        %v2430 = vmul.f32 %v2424, %v2426
        %v2431 = vmul.f32 %v2427, 0.01
        %v2432 = vmul.f32 %v2428, 0.01
        %v2433 = vmul.f32 %v2429, 0.01
        %v2434 = vmul.f32 %v2430, 0.01
        %v2435 = vmax.f32 %v2427, %v2431
        %v2436 = vmax.f32 %v2428, %v2432
        %v2437 = vmax.f32 %v2429, %v2433
        %v2438 = vmax.f32 %v2430, %v2434
        %v2439 = vld [vmem:[%s294] ss:$8 sm:$0xf]
        %s2440 = scalar_lea.vmem %s294, 1 [#allocation2]
        %v2441 = vld [vmem:[%s2440] ss:$8 sm:$0xf]
        %v2443 = vlaneseq
        %v2444 = vshrl.u32 %v2443, 7
        %v2445 = vsub.s32 0, %v2444
        %v2446 = vrot.slane %v2439, %v2445
        %v2447 = vlaneseq
        %v2448 = vshrl.u32 %v2447, 7
        %v2449 = vsub.s32 1, %v2448
        %v2450 = vrot.slane %v2439, %v2449
        %v2451 = vlaneseq
        %v2452 = vshrl.u32 %v2451, 7
        %v2453 = vsub.s32 2, %v2452
        %v2454 = vrot.slane %v2439, %v2453
        %v2455 = vlaneseq
        %v2456 = vshrl.u32 %v2455, 7
        %v2457 = vsub.s32 3, %v2456
        %v2458 = vrot.slane %v2439, %v2457
        %v2467 = vrot.slane %v2435, 7
        %v2468 = vrot.slane %v2436, 7
        %v2469 = vrot.slane %v2437, 7
        %v2470 = vrot.slane %v2438, 7
        %v2479 = vrot.slane %v1403, 6
        %v2480 = vrot.slane %v1404, 6
        %v2481 = vrot.slane %v1405, 6
        %v2482 = vrot.slane %v1406, 6
        %v2487 = vrot.slane %v2435, 6
        %v2488 = vrot.slane %v2436, 6
        %v2489 = vrot.slane %v2437, 6
        %v2490 = vrot.slane %v2438, 6
        %v2496 = vlaneseq
        %v2497 = vshrl.u32 %v2496, 7
        %v2498 = vsub.s32 0, %v2497
        %v2499 = vrot.slane %v2441, %v2498
        %v2500 = vlaneseq
        %v2501 = vshrl.u32 %v2500, 7
        %v2502 = vsub.s32 1, %v2501
        %v2503 = vrot.slane %v2441, %v2502
        %v2504 = vlaneseq
        %v2505 = vshrl.u32 %v2504, 7
        %v2506 = vsub.s32 2, %v2505
        %v2507 = vrot.slane %v2441, %v2506
        %v2508 = vlaneseq
        %v2509 = vshrl.u32 %v2508, 7
        %v2510 = vsub.s32 3, %v2509
        %v2511 = vrot.slane %v2441, %v2510
        %v2516 = vrot.slane %v2435, 5
        %v2517 = vrot.slane %v2436, 5
        %v2518 = vrot.slane %v2437, 5
        %v2519 = vrot.slane %v2438, 5
        %v2524 = vrot.slane %v1403, 3
        %v2525 = vrot.slane %v1404, 3
        %v2526 = vrot.slane %v1405, 3
        %v2527 = vrot.slane %v1406, 3
        %v2532 = vrot.slane %v2435, 4
        %v2533 = vrot.slane %v2436, 4
        %v2534 = vrot.slane %v2437, 4
        %v2535 = vrot.slane %v2438, 4
        %vm2540 = vcmask 1040384
        %v2541 = vsel %vm2540, %v2446, %v2467
        %v2542 = vsel %vm2540, %v2450, %v2468
        %v2543 = vsel %vm2540, %v2454, %v2469
        %v2544 = vsel %vm2540, %v2458, %v2470
        %vm2545 = vcmask 1041408
        %v2546 = vsel %vm2545, %v2541, %v2479
        %v2547 = vsel %vm2545, %v2542, %v2480
        %v2548 = vsel %vm2545, %v2543, %v2481
        %v2549 = vsel %vm2545, %v2544, %v2482
        %vm2550 = vcmask 1042432
        %v2551 = vsel %vm2550, %v2546, %v2487
        %v2552 = vsel %vm2550, %v2547, %v2488
        %v2553 = vsel %vm2550, %v2548, %v2489
        %v2554 = vsel %vm2550, %v2549, %v2490
        %v2555 = vsel %vm478, %v2551, %v2499
        %v2556 = vsel %vm478, %v2552, %v2503
        %v2557 = vsel %vm478, %v2553, %v2507
        %v2558 = vsel %vm478, %v2554, %v2511
        %vm2559 = vcmask 1044480
        %v2560 = vsel %vm2559, %v2555, %v2516
        %v2561 = vsel %vm2559, %v2556, %v2517
        %v2562 = vsel %vm2559, %v2557, %v2518
        %v2563 = vsel %vm2559, %v2558, %v2519
        %vm2564 = vcmask 1045504
        %v2565 = vsel %vm2564, %v2560, %v2524
        %v2566 = vsel %vm2564, %v2561, %v2525
        %v2567 = vsel %vm2564, %v2562, %v2526
        %v2568 = vsel %vm2564, %v2563, %v2527
        %vm2569 = vcmask 1046528
        %v2570 = vsel %vm2569, %v2565, %v2532
        %v2571 = vsel %vm2569, %v2566, %v2533
        %v2572 = vsel %vm2569, %v2567, %v2534
        %v2573 = vsel %vm2569, %v2568, %v2535
        %2574 = vst [vmem:[%s336] sm:$0xff] %v2570
        %2575 = vst [vmem:[%s336 + $0x8] sm:$0xff] %v2571
        %2576 = vst [vmem:[%s336 + $0x10] sm:$0xff] %v2572
        %2577 = vst [vmem:[%s336 + $0x18] sm:$0xff] %v2573
        %s2578 = sand.u32 %s186, 1
        %s2579 = scalar_lea.sflag [#allocation4], %s2578
        %s2580 = sand.u32 %s186, 1
        %s2581 = smul.addr %s2580, 32
        %s2582 = scalar_lea.vmem [#allocation10], %s2581
        // Predicated region
        $region65: #{tpu_custom_call.1} parent=47 // pred_check
          %p2583 = pneg %p196
        $region66: #{tpu_custom_call.1} parent=47 // pred_check_branch
          %2585 = sbr.rel (%p2583) target = $region68
        $region67: #{tpu_custom_call.1} parent=47 // pred_region
          %s2587 = ssub.s32 512, 512
          %2588 = vsyncadd %s2579, %s2587
          %s2589 = smul.addr %s26, 4
          %s2590 = smul.addr %s2589, 128
          %s2591 = scalar_lea.hbm %s7, %s2590
          %s2593 = sshll.u32 %s2582, 4
          %s2594 = int_to_ptr.vmem [resolvable:$true] %s2593
          %2596 = dma.vmem_to_hbm [thread:$0]  %s2594, 512, %s2591, %s2579
        $region68: #{tpu_custom_call.1} parent=47 // pred_fallthru
          _
      $region48: #{tpu_custom_call.1} parent=5 // pred_fallthru
        _
      %p2597 = scmp.le.s32.totalorder 2, %s21
      // Predicated region
      $region69: #{tpu_custom_call.1} parent=5 // pred_check
        %p2598 = pneg %p2597
      $region70: #{tpu_custom_call.1} parent=5 // pred_check_branch
        %2600 = sbr.rel (%p2598) target = $region72
      $region71: #{tpu_custom_call.1} parent=5 // pred_region
        %s2601 = ssub.s32 %s21, 2
        // Predicated region
        $region73: #{tpu_custom_call.1} parent=71 // pred_check
          %p2602 = pneg %p202
        $region74: #{tpu_custom_call.1} parent=71 // pred_check_branch
          %2604 = sbr.rel (%p2602) target = $region76
        $region75: #{tpu_custom_call.1} parent=71 // pred_region
          %s2605 = sand.u32 %s187, 1
          %s2606 = scalar_lea.sflag [#allocation4], %s2605
          %s2607 = sand.u32 %s187, 1
          %s2608 = smul.addr %s2607, 32
          %s2609 = scalar_lea.vmem [#allocation10], %s2608
          %2610 = dma.done %s2606, 512
        $region76: #{tpu_custom_call.1} parent=71 // pred_fallthru
          _
      $region72: #{tpu_custom_call.1} parent=5 // pred_fallthru
        _
    $region6: #{tpu_custom_call.1} parent=1 // loop_footer
      %s25 = sadd.s32 1, %s21
    $region7: #{tpu_custom_call.1} parent=1 // loop_footer_branch
      %20 = sbr.rel target = $region3
    $region8: #{tpu_custom_call.1} parent=1 // loop_exit
      _
    %2611 = vsyncpa [#allocation3], 1
    %s2612 = scalar_lea.sflag [#allocation3], 1
    %2613 = vsyncpa %s2612, 1
    %2614 = vsyncpa [#allocation6], 1
    %2615 = vsyncpa [#allocation9], 1
    %2616 = vsyncpa [#allocation4], 1
    %s2617 = scalar_lea.sflag [#allocation4], 1
    %2618 = vsyncpa %s2617, 1

</llo_original>
